<compile_context>
chip_gen: v6e
topology: v6e:2x2x1
jax: 0.10.0
libtpu: 0.0.40
codegen_flags: <defaults>
</compile_context>

<pallas_src>
import functools
import math

import jax
import jax.numpy as jnp
from jax.experimental import pallas as pl
from jax.experimental.pallas import tpu as pltpu


# ----------------------------------------------------------------------------
# Pallas kernel: batched scaled-dot-product attention.
# Block = (1, B, L, C): B independent attention problems of one image, each
# over L positions with C channels.  All B problems are computed in one step.
# ----------------------------------------------------------------------------
def _batched_attn_kernel(q_ref, k_ref, v_ref, o_ref, *, scale):
    f32 = jnp.float32
    # Fold 1/sqrt(C) into q (cheaper than scaling the (L, L) scores).
    q = q_ref[0].astype(f32) * scale            # (B, L, C)
    k = k_ref[0].astype(f32)                    # (B, L, C)
    v = v_ref[0].astype(f32)                    # (B, L, C)

    # scores: (B, L, L)
    s = jnp.einsum("blc,bmc->blm", q, k, preferred_element_type=f32)
    s = s - jnp.max(s, axis=-1, keepdims=True)  # numerically stable softmax
    e = jnp.exp(s)
    # approx reciprocal -> EUP slot (otherwise idle); ~1e-3 rel. error.
    p = e * pl.reciprocal(jnp.sum(e, axis=-1, keepdims=True), approx=True)

    o = jnp.einsum("blm,bmc->blc", p, v, preferred_element_type=f32)
    o_ref[0] = o.astype(o_ref.dtype)


def _batched_attention(q, k, v):
    """q, k, v: (N, B, L, C) -> (N, B, L, C); independent SDPA per (N, B)."""
    n, b, l, c = q.shape
    kernel = functools.partial(_batched_attn_kernel, scale=1.0 / math.sqrt(c))
    spec = pl.BlockSpec((1, b, l, c), lambda i: (i, 0, 0, 0))
    return pl.pallas_call(
        kernel,
        out_shape=jax.ShapeDtypeStruct((n, b, l, c), q.dtype),
        grid_spec=pltpu.PrefetchScalarGridSpec(
            num_scalar_prefetch=0,
            grid=(n,),                      # per-image step; >=2 parallel steps
            in_specs=[spec, spec, spec],
            out_specs=spec,
        ),
        compiler_params=pltpu.CompilerParams(
            dimension_semantics=("parallel",),
        ),
    )(q, k, v)


# ----------------------------------------------------------------------------
# efficient_non_local_attention forward (NCHW in, NCHW out).
# Layout kept as (n, problems, positions, channels) for both stages so the
# inter-stage exchange is a single small transpose.
# ----------------------------------------------------------------------------
def efficient_non_local_attention(query_feature, key_feature, value_feature,
                                  ph=4, pw=4):
    n, c, h, w = query_feature.shape
    qh, qw = h // ph, w // pw
    P, L = ph * pw, qh * qw

    # NCHW -> (n, P, L, c): long-range problem layout.
    # (Strided gather; cannot be expressed as a rectangular BlockSpec block,
    #  so it is done once per input in XLA and fused under jit.)
    def to_long(x):
        x = x.reshape(n, c, qh, ph, qw, pw)
        x = jnp.transpose(x, (0, 3, 5, 2, 4, 1))    # (n, ph, pw, qh, qw, c)
        return x.reshape(n, P, L, c)

    # (n, P, L, c) -> (n, L, P, c): re-batch for the short-range stage.
    def long_to_short(x):
        return jnp.transpose(x, (0, 2, 1, 3))

    ql = to_long(query_feature)
    kl = to_long(key_feature)
    vl = to_long(value_feature)

    # Stage 1: long-range attention (P problems per image, L positions each).
    ol = _batched_attention(ql, kl, vl)              # (n, P, L, c)

    # Stage 2: short-range attention (L problems per image, P positions each).
    qs = long_to_short(ol)
    ks = long_to_short(kl)
    vs = long_to_short(vl)
    os_ = _batched_attention(qs, ks, vs)             # (n, L, P, c)

    # (n, L, P, c) -> NCHW.
    out = os_.reshape(n, qh, qw, ph, pw, c)
    out = jnp.transpose(out, (0, 5, 1, 3, 2, 4)).reshape(n, c, h, w)
    return out


# ----------------------------------------------------------------------------
# Pure-JAX reference mirroring the PyTorch module exactly (for correctness).
# ----------------------------------------------------------------------------
def long_range_action(x, n, c, qh, ph, qw, pw):
    x = x.reshape(n, c, qh, ph, qw, pw)
    x = jnp.transpose(x, (0, 3, 5, 1, 2, 4))
    return x.reshape(n * ph * pw, c, qh, qw)


def short_range_action(x, n, c, qh, ph, qw, pw):
    x = x.reshape(n, ph, pw, c, qh, qw)
    x = jnp.transpose(x, (0, 4, 5, 3, 1, 2))
    return x.reshape(n * qh * qw, c, ph, pw)


def _ref_attention_blc(q, k, v):
    c = q.shape[-1]
    s = jnp.einsum("blc,bmc->blm", q, k) / math.sqrt(c)
    p = jax.nn.softmax(s, axis=-1)
    return jnp.einsum("blm,bmc->blc", p, v)


def _ref_nonlocal_attention(q, k, v):
    B, C, H, W = q.shape
    L = H * W
    to_blc = lambda x: jnp.transpose(x.reshape(B, C, L), (0, 2, 1))
    out = _ref_attention_blc(to_blc(q), to_blc(k), to_blc(v))
    return jnp.transpose(out, (0, 2, 1)).reshape(B, C, H, W)


def _ref_forward(qf, kf, vf, ph=4, pw=4):
    n, c, h, w = qf.shape
    qh, qw = h // ph, w // pw
    q = long_range_action(qf, n, c, qh, ph, qw, pw)
    k = long_range_action(kf, n, c, qh, ph, qw, pw)
    v = long_range_action(vf, n, c, qh, ph, qw, pw)
    q = _ref_nonlocal_attention(q, k, v)
    qs = short_range_action(q, n, c, qh, ph, qw, pw)
    ks = short_range_action(k, n, c, qh, ph, qw, pw)
    vs = short_range_action(v, n, c, qh, ph, qw, pw)
    out = _ref_nonlocal_attention(qs, ks, vs)
    out = out.reshape(n, qh, qw, c, ph, pw)
    return jnp.transpose(out, (0, 3, 1, 4, 2, 5)).reshape(n, c, h, w)


if __name__ == "__main__":
    key = jax.random.PRNGKey(0)
    k1, k2, k3 = jax.random.split(key, 3)

    n, c, h, w = 2, 4, 16, 16          # ph = pw = 4 -> qh = qw = 4
    qf = jax.random.normal(k1, (n, c, h, w), dtype=jnp.float32)
    kf = jax.random.normal(k2, (n, c, h, w), dtype=jnp.float32)
    vf = jax.random.normal(k3, (n, c, h, w), dtype=jnp.float32)

    fwd = jax.jit(lambda a, b, v_: efficient_non_local_attention(a, b, v_, ph=4, pw=4))
    out = jax.block_until_ready(fwd(qf, kf, vf))

    ref = jax.block_until_ready(_ref_forward(qf, kf, vf, ph=4, pw=4))
    assert out.shape == (n, c, h, w)
    # Tolerance loosened vs the exact reference because the kernel uses the
    # approximate EUP reciprocal (~1e-3 relative) in the softmax.
    err = float(jnp.max(jnp.abs(out - ref)))
    assert jnp.allclose(out, ref, atol=1e-2, rtol=1e-2), err

    print("KERNEL_OK")
</pallas_src>

<mosaic_0001>
module attributes {stable_mosaic.version = 11 : i64} {
  func.func @_batched_attn_kernel(%arg0: i32, %arg1: memref<1x16x16x4xf32, #tpu.memory_space<vmem>>, %arg2: memref<1x16x16x4xf32, #tpu.memory_space<vmem>>, %arg3: memref<1x16x16x4xf32, #tpu.memory_space<vmem>>, %arg4: memref<1x16x16x4xf32, #tpu.memory_space<vmem>>) attributes {dimension_semantics = [#tpu.dimension_semantics<parallel>], iteration_bounds = array<i64: 2>, scalar_prefetch = 0 : i64, scratch_operands = 0 : i64, tpu.core_type = #tpu.core_type<tc>, window_params = [{transform_indices = @transform_0, window_bounds = array<i64: 1, 16, 16, 4>}, {transform_indices = @transform_1, window_bounds = array<i64: 1, 16, 16, 4>}, {transform_indices = @transform_2, window_bounds = array<i64: 1, 16, 16, 4>}, {transform_indices = @transform_3, window_bounds = array<i64: 1, 16, 16, 4>}]} {
    %c0 = arith.constant 0 : index
    %c0_0 = arith.constant 0 : index
    %c0_1 = arith.constant 0 : index
    %c0_2 = arith.constant 0 : index
    %0 = vector.load %arg1[%c0, %c0_0, %c0_1, %c0_2] : memref<1x16x16x4xf32, #tpu.memory_space<vmem>>, vector<1x16x16x4xf32>
    %1 = vector.shape_cast %0 : vector<1x16x16x4xf32> to vector<16x16x4xf32>
    %cst = arith.constant 5.000000e-01 : f32
    %2 = vector.broadcast %cst : f32 to vector<16x16x4xf32>
    %3 = arith.mulf %1, %2 : vector<16x16x4xf32>
    %c0_3 = arith.constant 0 : index
    %c0_4 = arith.constant 0 : index
    %c0_5 = arith.constant 0 : index
    %c0_6 = arith.constant 0 : index
    %4 = vector.load %arg2[%c0_3, %c0_4, %c0_5, %c0_6] : memref<1x16x16x4xf32, #tpu.memory_space<vmem>>, vector<1x16x16x4xf32>
    %5 = vector.shape_cast %4 : vector<1x16x16x4xf32> to vector<16x16x4xf32>
    %c0_7 = arith.constant 0 : index
    %c0_8 = arith.constant 0 : index
    %c0_9 = arith.constant 0 : index
    %c0_10 = arith.constant 0 : index
    %6 = vector.load %arg3[%c0_7, %c0_8, %c0_9, %c0_10] : memref<1x16x16x4xf32, #tpu.memory_space<vmem>>, vector<1x16x16x4xf32>
    %7 = vector.shape_cast %6 : vector<1x16x16x4xf32> to vector<16x16x4xf32>
    "tpu.trace_start"() <{level = 10 : i32, message = "blc,bmc->blm"}> : () -> ()
    %cst_11 = arith.constant dense<0.000000e+00> : vector<16x16x16xf32>
    %8 = tpu.matmul %3, %5, %cst_11 {dimension_numbers = #tpu.dot_dimension_numbers<[2], [2], [1], [1], [0, 0, 0, 1, 1, 1], [0], [0]>} : vector<16x16x4xf32>, vector<16x16x4xf32>, vector<16x16x16xf32> -> vector<16x16x16xf32>
    "tpu.trace_stop"() : () -> ()
    %cst_12 = arith.constant dense<0xFF800000> : vector<16x16xf32>
    %9 = vector.multi_reduction <maximumf>, %8, %cst_12 [2] : vector<16x16x16xf32> to vector<16x16xf32>
    %10 = vector.shape_cast %9 : vector<16x16xf32> to vector<16x16x1xf32>
    %11 = vector.broadcast %10 : vector<16x16x1xf32> to vector<16x16x16xf32>
    %12 = arith.subf %8, %11 : vector<16x16x16xf32>
    %13 = math.exp %12 : vector<16x16x16xf32>
    %cst_13 = arith.constant dense<0.000000e+00> : vector<16x16xf32>
    %14 = vector.multi_reduction <add>, %13, %cst_13 [2] : vector<16x16x16xf32> to vector<16x16xf32>
    %15 = vector.shape_cast %14 : vector<16x16xf32> to vector<16x16x1xf32>
    %16 = tpu.reciprocal %15 {approx = true} : vector<16x16x1xf32> -> vector<16x16x1xf32>
    %17 = vector.broadcast %16 : vector<16x16x1xf32> to vector<16x16x16xf32>
    %18 = arith.mulf %13, %17 : vector<16x16x16xf32>
    "tpu.trace_start"() <{level = 10 : i32, message = "blm,bmc->blc"}> : () -> ()
    %cst_14 = arith.constant dense<0.000000e+00> : vector<16x16x4xf32>
    %19 = tpu.matmul %18, %7, %cst_14 {dimension_numbers = #tpu.dot_dimension_numbers<[2], [1], [1], [2], [0, 0, 0, 1, 1, 2], [0], [0]>} : vector<16x16x16xf32>, vector<16x16x4xf32>, vector<16x16x4xf32> -> vector<16x16x4xf32>
    "tpu.trace_stop"() : () -> ()
    %c0_15 = arith.constant 0 : index
    %c0_16 = arith.constant 0 : index
    %c0_17 = arith.constant 0 : index
    %c0_18 = arith.constant 0 : index
    %20 = vector.load %arg4[%c0_15, %c0_16, %c0_17, %c0_18] : memref<1x16x16x4xf32, #tpu.memory_space<vmem>>, vector<1x16x16x4xf32>
    %21 = vector.shape_cast %20 : vector<1x16x16x4xf32> to vector<16x16x4xf32>
    %22 = vector.shape_cast %19 : vector<16x16x4xf32> to vector<1x16x16x4xf32>
    tpu.vector_store %arg4[%c0_15, %c0_16, %c0_17, %c0_18], %22 {strides = array<i32>} : memref<1x16x16x4xf32, #tpu.memory_space<vmem>>, vector<1x16x16x4xf32>,
    return
  }
  func.func @transform_0(%arg0: i32) -> (i32, i32, i32, i32) {
    %c0_i32 = arith.constant 0 : i32
    %c0_i32_0 = arith.constant 0 : i32
    %c0_i32_1 = arith.constant 0 : i32
    %c0_i32_2 = arith.constant 0 : i32
    return %arg0, %c0_i32, %c0_i32_0, %c0_i32_1 : i32, i32, i32, i32
  }
  func.func @transform_1(%arg0: i32) -> (i32, i32, i32, i32) {
    %c0_i32 = arith.constant 0 : i32
    %c0_i32_0 = arith.constant 0 : i32
    %c0_i32_1 = arith.constant 0 : i32
    %c0_i32_2 = arith.constant 0 : i32
    return %arg0, %c0_i32, %c0_i32_0, %c0_i32_1 : i32, i32, i32, i32
  }
  func.func @transform_2(%arg0: i32) -> (i32, i32, i32, i32) {
    %c0_i32 = arith.constant 0 : i32
    %c0_i32_0 = arith.constant 0 : i32
    %c0_i32_1 = arith.constant 0 : i32
    %c0_i32_2 = arith.constant 0 : i32
    return %arg0, %c0_i32, %c0_i32_0, %c0_i32_1 : i32, i32, i32, i32
  }
  func.func @transform_3(%arg0: i32) -> (i32, i32, i32, i32) {
    %c0_i32 = arith.constant 0 : i32
    %c0_i32_0 = arith.constant 0 : i32
    %c0_i32_1 = arith.constant 0 : i32
    %c0_i32_2 = arith.constant 0 : i32
    return %arg0, %c0_i32, %c0_i32_0, %c0_i32_1 : i32, i32, i32, i32
  }
}

</mosaic_0001>

<llo_original>
// kernel: _lambda_.2
$region0: #{_lambda_.2}
  #allocation0 [shape = 'u32[]', space=smem, size = 0x4, offset = 0x4, fixed_abs, tag = 'smem constant byte address 0x4 - core index']
  #allocation1 [shape = 'u32[144,128]{1,0:T(1,128)}', space=vmem, size = 0x12000, scoped, tag = 'internal scratch']
  %s0 = inlined_call_operand.vmem [shape: f32[2,16,16,4], index: 0, kind: input, shape index: {}]
  %s1 = inlined_call_operand.vmem [shape: f32[2,16,16,4], index: 1, kind: input, shape index: {}]
  %s2 = inlined_call_operand.vmem [shape: f32[2,16,16,4], index: 2, kind: input, shape index: {}]
  %s3 = inlined_call_operand.vmem [shape: f32[2,16,16,4], index: 3, kind: output, shape index: {}]
  %s4 = sld [smem:[#allocation0]]
  $region45: #{_lambda_.2} parent=0
    _
  %s6 = ssub.s32 1, %s4
  %s7 = scalar_select 0, %s6, %s4
  loop: start=0, step=1, limit=4
  $region2: #{_lambda_.2} parent=0 // loop_pre_header
    _
  $region3: #{_lambda_.2} parent=0 // loop_header
    %s9 = sphi 0, %s13
    %p10 = scmp.ge.s32.totalorder %s9, 4
    %s19 = sphi 0, %s21
    %s22 = sphi 0, %s19
    %s23 = sphi 0, %s22
    %s39 = sphi 0, %s23
    %s45 = sphi 0, %s47
    %s48 = sphi 0, %s45
    %s49 = sphi 0, %s48
    %s65 = sphi 0, %s49
    %s71 = sphi 0, %s73
    %s74 = sphi 0, %s71
    %s75 = sphi 0, %s74
    %s91 = sphi 0, %s75
    %s97 = sphi 0, %s99
    %s100 = sphi 0, %s97
    %s101 = sphi 0, %s100
    %s117 = sphi 0, %s101
  $region4: #{_lambda_.2} parent=0 // loop_header_branch
    %12 = sbr.rel (%p10) target = $region8
  $region5: #{_lambda_.2} parent=0 // loop_body
    %s14 = ssub.s32 %s9, 1
    %s15 = ssub.s32 %s9, 2
    %s16 = sadd.s32 %s9, 1
    %s17 = ssub.s32 %s9, %s16
    %p18 = scmp.eq.s32.totalorder %s17, 0
    %s20 = sadd.s32 %s19, 1
    %s21 = scalar_select %p18, %s19, %s20
    %p24 = pneg %p18
    %p25 = scmp.eq.s32.totalorder %s9, 1
    %p26 = por %p24, %p25
    %p27 = scmp.ne.s32.totalorder %s19, %s22
    %p28 = scmp.eq.s32.totalorder %s9, 0
    %p29 = por %p27, %p28
    %p30 = scmp.ne.s32.totalorder %s19, %s22
    %p31 = scmp.eq.s32.totalorder %s14, 1
    %p32 = por %p30, %p31
    %p33 = scmp.ne.s32.totalorder %s22, %s23
    %p34 = scmp.eq.s32.totalorder %s14, 0
    %p35 = por %p33, %p34
    %p36 = scmp.ne.s32.totalorder %s22, %s23
    %p37 = scmp.eq.s32.totalorder %s15, 1
    %p38 = por %p36, %p37
    %p40 = scmp.ne.s32.totalorder %s23, %s39
    %p41 = scmp.eq.s32.totalorder %s15, 0
    %p42 = por %p40, %p41
    %s43 = ssub.s32 %s9, %s16
    %p44 = scmp.eq.s32.totalorder %s43, 0
    %s46 = sadd.s32 %s45, 1
    %s47 = scalar_select %p44, %s45, %s46
    %p50 = pneg %p44
    %p51 = scmp.eq.s32.totalorder %s9, 1
    %p52 = por %p50, %p51
    %p53 = scmp.ne.s32.totalorder %s45, %s48
    %p54 = scmp.eq.s32.totalorder %s9, 0
    %p55 = por %p53, %p54
    %p56 = scmp.ne.s32.totalorder %s45, %s48
    %p57 = scmp.eq.s32.totalorder %s14, 1
    %p58 = por %p56, %p57
    %p59 = scmp.ne.s32.totalorder %s48, %s49
    %p60 = scmp.eq.s32.totalorder %s14, 0
    %p61 = por %p59, %p60
    %p62 = scmp.ne.s32.totalorder %s48, %s49
    %p63 = scmp.eq.s32.totalorder %s15, 1
    %p64 = por %p62, %p63
    %p66 = scmp.ne.s32.totalorder %s49, %s65
    %p67 = scmp.eq.s32.totalorder %s15, 0
    %p68 = por %p66, %p67
    %s69 = ssub.s32 %s9, %s16
    %p70 = scmp.eq.s32.totalorder %s69, 0
    %s72 = sadd.s32 %s71, 1
    %s73 = scalar_select %p70, %s71, %s72
    %p76 = pneg %p70
    %p77 = scmp.eq.s32.totalorder %s9, 1
    %p78 = por %p76, %p77
    %p79 = scmp.ne.s32.totalorder %s71, %s74
    %p80 = scmp.eq.s32.totalorder %s9, 0
    %p81 = por %p79, %p80
    %p82 = scmp.ne.s32.totalorder %s71, %s74
    %p83 = scmp.eq.s32.totalorder %s14, 1
    %p84 = por %p82, %p83
    %p85 = scmp.ne.s32.totalorder %s74, %s75
    %p86 = scmp.eq.s32.totalorder %s14, 0
    %p87 = por %p85, %p86
    %p88 = scmp.ne.s32.totalorder %s74, %s75
    %p89 = scmp.eq.s32.totalorder %s15, 1
    %p90 = por %p88, %p89
    %p92 = scmp.ne.s32.totalorder %s75, %s91
    %p93 = scmp.eq.s32.totalorder %s15, 0
    %p94 = por %p92, %p93
    %s95 = ssub.s32 %s9, %s16
    %p96 = scmp.eq.s32.totalorder %s95, 0
    %s98 = sadd.s32 %s97, 1
    %s99 = scalar_select %p96, %s97, %s98
    %p102 = pneg %p96
    %p103 = scmp.eq.s32.totalorder %s9, 1
    %p104 = por %p102, %p103
    %p105 = scmp.ne.s32.totalorder %s97, %s100
    %p106 = scmp.eq.s32.totalorder %s9, 0
    %p107 = por %p105, %p106
    %p108 = scmp.ne.s32.totalorder %s97, %s100
    %p109 = scmp.eq.s32.totalorder %s14, 1
    %p110 = por %p108, %p109
    %p111 = scmp.ne.s32.totalorder %s100, %s101
    %p112 = scmp.eq.s32.totalorder %s14, 0
    %p113 = por %p111, %p112
    %p114 = scmp.ne.s32.totalorder %s100, %s101
    %p115 = scmp.eq.s32.totalorder %s15, 1
    %p116 = por %p114, %p115
    %p118 = scmp.ne.s32.totalorder %s101, %s117
    %p119 = scmp.eq.s32.totalorder %s15, 0
    %p120 = por %p118, %p119
    %p121 = scmp.le.s32.totalorder 1, %s9
    %p122 = scmp.lt.s32.totalorder %s9, 3
    %p123 = pnand %p121, %p122
    %p124 = pneg %p123
    // Predicated region
    $region9: #{_lambda_.2} parent=5 // pred_check
      _
    $region10: #{_lambda_.2} parent=5 // pred_check_branch
      %126 = sbr.rel (%p123) target = $region12
    $region11: #{_lambda_.2} parent=5 // pred_region
      %s127 = ssub.s32 %s9, 1
    $region12: #{_lambda_.2} parent=5 // pred_fallthru
      _
    %p128 = scmp.lt.s32.totalorder %s9, 2
    // Predicated region
    $region13: #{_lambda_.2} parent=5 // pred_check
      %p129 = pneg %p128
    $region14: #{_lambda_.2} parent=5 // pred_check_branch
      %131 = sbr.rel (%p129) target = $region16
    $region15: #{_lambda_.2} parent=5 // pred_region
      // Predicated region
      $region17: #{_lambda_.2} parent=15 // pred_check
        %p132 = pneg %p29
      $region18: #{_lambda_.2} parent=15 // pred_check_branch
        %134 = sbr.rel (%p132) target = $region20
      $region19: #{_lambda_.2} parent=15 // pred_region
        %p135 = scmp.lt.s32.totalorder %s9, 1
        %s136 = scalar_select %p135, %s9, 1
        %s137 = smul.addr %s136, 32
        %s138 = smul.addr %s137, 8
        %s139 = scalar_lea.vmem %s0, %s138
      $region20: #{_lambda_.2} parent=15 // pred_fallthru
        _
      // Predicated region
      $region21: #{_lambda_.2} parent=15 // pred_check
        %p140 = pneg %p55
      $region22: #{_lambda_.2} parent=15 // pred_check_branch
        %142 = sbr.rel (%p140) target = $region24
      $region23: #{_lambda_.2} parent=15 // pred_region
        %p143 = scmp.lt.s32.totalorder %s9, 1
        %s144 = scalar_select %p143, %s9, 1
        %s145 = smul.addr %s144, 32
        %s146 = smul.addr %s145, 8
        %s147 = scalar_lea.vmem %s1, %s146
      $region24: #{_lambda_.2} parent=15 // pred_fallthru
        _
      // Predicated region
      $region25: #{_lambda_.2} parent=15 // pred_check
        %p148 = pneg %p81
      $region26: #{_lambda_.2} parent=15 // pred_check_branch
        %150 = sbr.rel (%p148) target = $region28
      $region27: #{_lambda_.2} parent=15 // pred_region
        %p151 = scmp.lt.s32.totalorder %s9, 1
        %s152 = scalar_select %p151, %s9, 1
        %s153 = smul.addr %s152, 32
        %s154 = smul.addr %s153, 8
        %s155 = scalar_lea.vmem %s2, %s154
      $region28: #{_lambda_.2} parent=15 // pred_fallthru
        _
    $region16: #{_lambda_.2} parent=5 // pred_fallthru
      _
    %p156 = scmp.le.s32.totalorder 1, %s9
    %p157 = scmp.lt.s32.totalorder %s9, 3
    %p158 = pnand %p156, %p157
    %p159 = pneg %p158
    // Predicated region
    $region29: #{_lambda_.2} parent=5 // pred_check
      _
    $region30: #{_lambda_.2} parent=5 // pred_check_branch
      %161 = sbr.rel (%p158) target = $region32
    $region31: #{_lambda_.2} parent=5 // pred_region
      %s162 = ssub.s32 %s9, 1
      %p163 = scmp.lt.s32.totalorder %s14, 1
      %s164 = scalar_select %p163, %s14, 1
      %s165 = smul.addr %s164, 32
      %s166 = smul.addr %s165, 8
      %s167 = scalar_lea.vmem %s0, %s166
      %p168 = pneg %p35
      %p169 = pneg %p32
      %p170 = scmp.lt.s32.totalorder %s14, 1
      %s171 = scalar_select %p170, %s14, 1
      %s172 = smul.addr %s171, 32
      %s173 = smul.addr %s172, 8
      %s174 = scalar_lea.vmem %s1, %s173
      %p175 = pneg %p61
      %p176 = pneg %p58
      %p177 = scmp.lt.s32.totalorder %s14, 1
      %s178 = scalar_select %p177, %s14, 1
      %s179 = smul.addr %s178, 32
      %s180 = smul.addr %s179, 8
      %s181 = scalar_lea.vmem %s2, %s180
      %p182 = pneg %p87
      %p183 = pneg %p84
      %p184 = pneg %p113
      %p185 = pneg %p110
      %p186 = scmp.lt.s32.totalorder %s14, 1
      %s187 = scalar_select %p186, %s14, 1
      %s188 = smul.addr %s187, 32
      %s189 = smul.addr %s188, 8
      %s190 = scalar_lea.vmem %s3, %s189
      %p191 = scmp.lt.s32.totalorder %s14, 1
      %s192 = scalar_select %p191, %s14, 1
      %s193 = smul.addr %s192, 32
      %s194 = smul.addr %s193, 8
      %s195 = scalar_lea.vmem %s0, %s194
      %p196 = scmp.lt.s32.totalorder %s14, 1
      %s197 = scalar_select %p196, %s14, 1
      %s198 = smul.addr %s197, 32
      %s199 = smul.addr %s198, 8
      %s200 = scalar_lea.vmem %s1, %s199
      %p201 = scmp.lt.s32.totalorder %s14, 1
      %s202 = scalar_select %p201, %s14, 1
      %s203 = smul.addr %s202, 32
      %s204 = smul.addr %s203, 8
      %s205 = scalar_lea.vmem %s2, %s204
      %p206 = scmp.lt.s32.totalorder %s14, 1
      %s207 = scalar_select %p206, %s14, 1
      %s208 = smul.addr %s207, 32
      %s209 = smul.addr %s208, 8
      %s210 = scalar_lea.vmem %s3, %s209
      %v211 = vld [vmem:[%s195] sm:$0xff]
      %v212 = vld [vmem:[%s195 + $0x8] sm:$0xff]
      %v213 = vld [vmem:[%s195 + $0x10] sm:$0xff]
      %v214 = vld [vmem:[%s195 + $0x18] sm:$0xff]
      %v215 = vld [vmem:[%s195 + $0x20] sm:$0xff]
      %v216 = vld [vmem:[%s195 + $0x28] sm:$0xff]
      %v217 = vld [vmem:[%s195 + $0x30] sm:$0xff]
      %v218 = vld [vmem:[%s195 + $0x38] sm:$0xff]
      %v219 = vld [vmem:[%s195 + $0x40] sm:$0xff]
      %v220 = vld [vmem:[%s195 + $0x48] sm:$0xff]
      %v221 = vld [vmem:[%s195 + $0x50] sm:$0xff]
      %v222 = vld [vmem:[%s195 + $0x58] sm:$0xff]
      %v223 = vld [vmem:[%s195 + $0x60] sm:$0xff]
      %v224 = vld [vmem:[%s195 + $0x68] sm:$0xff]
      %v225 = vld [vmem:[%s195 + $0x70] sm:$0xff]
      %v226 = vld [vmem:[%s195 + $0x78] sm:$0xff]
      %v227 = vld [vmem:[%s195 + $0x80] sm:$0xff]
      %v228 = vld [vmem:[%s195 + $0x88] sm:$0xff]
      %v229 = vld [vmem:[%s195 + $0x90] sm:$0xff]
      %v230 = vld [vmem:[%s195 + $0x98] sm:$0xff]
      %v231 = vld [vmem:[%s195 + $0xa0] sm:$0xff]
      %v232 = vld [vmem:[%s195 + $0xa8] sm:$0xff]
      %v233 = vld [vmem:[%s195 + $0xb0] sm:$0xff]
      %v234 = vld [vmem:[%s195 + $0xb8] sm:$0xff]
      %v235 = vld [vmem:[%s195 + $0xc0] sm:$0xff]
      %v236 = vld [vmem:[%s195 + $0xc8] sm:$0xff]
      %v237 = vld [vmem:[%s195 + $0xd0] sm:$0xff]
      %v238 = vld [vmem:[%s195 + $0xd8] sm:$0xff]
      %v239 = vld [vmem:[%s195 + $0xe0] sm:$0xff]
      %v240 = vld [vmem:[%s195 + $0xe8] sm:$0xff]
      %v241 = vld [vmem:[%s195 + $0xf0] sm:$0xff]
      %v242 = vld [vmem:[%s195 + $0xf8] sm:$0xff]
      %v243 = vmul.f32 %v211, 0.5
      %v244 = vmul.f32 %v212, 0.5
      %v245 = vmul.f32 %v213, 0.5
      %v246 = vmul.f32 %v214, 0.5
      %v247 = vmul.f32 %v215, 0.5
      %v248 = vmul.f32 %v216, 0.5
      %v249 = vmul.f32 %v217, 0.5
      %v250 = vmul.f32 %v218, 0.5
      %v251 = vmul.f32 %v219, 0.5
      %v252 = vmul.f32 %v220, 0.5
      %v253 = vmul.f32 %v221, 0.5
      %v254 = vmul.f32 %v222, 0.5
      %v255 = vmul.f32 %v223, 0.5
      %v256 = vmul.f32 %v224, 0.5
      %v257 = vmul.f32 %v225, 0.5
      %v258 = vmul.f32 %v226, 0.5
      %v259 = vmul.f32 %v227, 0.5
      %v260 = vmul.f32 %v228, 0.5
      %v261 = vmul.f32 %v229, 0.5
      %v262 = vmul.f32 %v230, 0.5
      %v263 = vmul.f32 %v231, 0.5
      %v264 = vmul.f32 %v232, 0.5
      %v265 = vmul.f32 %v233, 0.5
      %v266 = vmul.f32 %v234, 0.5
      %v267 = vmul.f32 %v235, 0.5
      %v268 = vmul.f32 %v236, 0.5
      %v269 = vmul.f32 %v237, 0.5
      %v270 = vmul.f32 %v238, 0.5
      %v271 = vmul.f32 %v239, 0.5
      %v272 = vmul.f32 %v240, 0.5
      %v273 = vmul.f32 %v241, 0.5
      %v274 = vmul.f32 %v242, 0.5
      %v275 = vld [vmem:[%s200] sm:$0xff]
      %v276 = vld [vmem:[%s200 + $0x8] sm:$0xff]
      %v277 = vld [vmem:[%s200 + $0x10] sm:$0xff]
      %v278 = vld [vmem:[%s200 + $0x18] sm:$0xff]
      %v279 = vld [vmem:[%s200 + $0x20] sm:$0xff]
      %v280 = vld [vmem:[%s200 + $0x28] sm:$0xff]
      %v281 = vld [vmem:[%s200 + $0x30] sm:$0xff]
      %v282 = vld [vmem:[%s200 + $0x38] sm:$0xff]
      %v283 = vld [vmem:[%s200 + $0x40] sm:$0xff]
      %v284 = vld [vmem:[%s200 + $0x48] sm:$0xff]
      %v285 = vld [vmem:[%s200 + $0x50] sm:$0xff]
      %v286 = vld [vmem:[%s200 + $0x58] sm:$0xff]
      %v287 = vld [vmem:[%s200 + $0x60] sm:$0xff]
      %v288 = vld [vmem:[%s200 + $0x68] sm:$0xff]
      %v289 = vld [vmem:[%s200 + $0x70] sm:$0xff]
      %v290 = vld [vmem:[%s200 + $0x78] sm:$0xff]
      %v291 = vld [vmem:[%s200 + $0x80] sm:$0xff]
      %v292 = vld [vmem:[%s200 + $0x88] sm:$0xff]
      %v293 = vld [vmem:[%s200 + $0x90] sm:$0xff]
      %v294 = vld [vmem:[%s200 + $0x98] sm:$0xff]
      %v295 = vld [vmem:[%s200 + $0xa0] sm:$0xff]
      %v296 = vld [vmem:[%s200 + $0xa8] sm:$0xff]
      %v297 = vld [vmem:[%s200 + $0xb0] sm:$0xff]
      %v298 = vld [vmem:[%s200 + $0xb8] sm:$0xff]
      %v299 = vld [vmem:[%s200 + $0xc0] sm:$0xff]
      %v300 = vld [vmem:[%s200 + $0xc8] sm:$0xff]
      %v301 = vld [vmem:[%s200 + $0xd0] sm:$0xff]
      %v302 = vld [vmem:[%s200 + $0xd8] sm:$0xff]
      %v303 = vld [vmem:[%s200 + $0xe0] sm:$0xff]
      %v304 = vld [vmem:[%s200 + $0xe8] sm:$0xff]
      %v305 = vld [vmem:[%s200 + $0xf0] sm:$0xff]
      %v306 = vld [vmem:[%s200 + $0xf8] sm:$0xff]
      %v307 = vld [vmem:[%s205] sm:$0xff]
      %v308 = vld [vmem:[%s205 + $0x8] sm:$0xff]
      %v309 = vld [vmem:[%s205 + $0x10] sm:$0xff]
      %v310 = vld [vmem:[%s205 + $0x18] sm:$0xff]
      %v311 = vld [vmem:[%s205 + $0x20] sm:$0xff]
      %v312 = vld [vmem:[%s205 + $0x28] sm:$0xff]
      %v313 = vld [vmem:[%s205 + $0x30] sm:$0xff]
      %v314 = vld [vmem:[%s205 + $0x38] sm:$0xff]
      %v315 = vld [vmem:[%s205 + $0x40] sm:$0xff]
      %v316 = vld [vmem:[%s205 + $0x48] sm:$0xff]
      %v317 = vld [vmem:[%s205 + $0x50] sm:$0xff]
      %v318 = vld [vmem:[%s205 + $0x58] sm:$0xff]
      %v319 = vld [vmem:[%s205 + $0x60] sm:$0xff]
      %v320 = vld [vmem:[%s205 + $0x68] sm:$0xff]
      %v321 = vld [vmem:[%s205 + $0x70] sm:$0xff]
      %v322 = vld [vmem:[%s205 + $0x78] sm:$0xff]
      %v323 = vld [vmem:[%s205 + $0x80] sm:$0xff]
      %v324 = vld [vmem:[%s205 + $0x88] sm:$0xff]
      %v325 = vld [vmem:[%s205 + $0x90] sm:$0xff]
      %v326 = vld [vmem:[%s205 + $0x98] sm:$0xff]
      %v327 = vld [vmem:[%s205 + $0xa0] sm:$0xff]
      %v328 = vld [vmem:[%s205 + $0xa8] sm:$0xff]
      %v329 = vld [vmem:[%s205 + $0xb0] sm:$0xff]
      %v330 = vld [vmem:[%s205 + $0xb8] sm:$0xff]
      %v331 = vld [vmem:[%s205 + $0xc0] sm:$0xff]
      %v332 = vld [vmem:[%s205 + $0xc8] sm:$0xff]
      %v333 = vld [vmem:[%s205 + $0xd0] sm:$0xff]
      %v334 = vld [vmem:[%s205 + $0xd8] sm:$0xff]
      %v335 = vld [vmem:[%s205 + $0xe0] sm:$0xff]
      %v336 = vld [vmem:[%s205 + $0xe8] sm:$0xff]
      %v337 = vld [vmem:[%s205 + $0xf0] sm:$0xff]
      %v338 = vld [vmem:[%s205 + $0xf8] sm:$0xff]
      %vm339 = vcmask 31744
      %v341 = vsel %vm339, %v243, 0
      %v344 = vsel %vm339, %v244, 0
      %v347 = vsel %vm339, %v275, 0
      %v350 = vsel %vm339, %v276, 0
      %352 = vmatprep.subr.mxu0 0.0
      %353 = vmatpush1.xpose.msra.mxu0 0.0
      %354 = vmatprep.subr.mxu0 0.0
      %355 = vmatpush1.xpose.msra.mxu0 0.0
      %356 = vmatprep.subr.mxu0 0.0
      %357 = vmatpush1.xpose.msra.mxu0 0.0
      %358 = vmatprep.subr.mxu0 0.0
      %359 = vmatpush1.xpose.msra.mxu0 0.0
      %360 = vmatprep.subr.mxu0 0.0
      %361 = vmatpush1.xpose.msra.mxu0 0.0
      %362 = vmatprep.subr.mxu0 0.0
      %363 = vmatpush1.xpose.msra.mxu0 0.0
      %364 = vmatprep.subr.mxu0 0.0
      %365 = vmatpush1.xpose.msra.mxu0 0.0
      %366 = vmatprep.subr.mxu0 0.0
      %367 = vmatpush1.xpose.msra.mxu0 0.0
      %368 = vmatprep.subr.mxu0 0.0
      %369 = vmatpush1.xpose.msra.mxu0 0.0
      %370 = vmatprep.subr.mxu0 0.0
      %371 = vmatpush1.xpose.msra.mxu0 0.0
      %372 = vmatprep.subr.mxu0 0.0
      %373 = vmatpush1.xpose.msra.mxu0 0.0
      %374 = vmatprep.subr.mxu0 0.0
      %375 = vmatpush1.xpose.msra.mxu0 0.0
      %376 = vmatprep.subr.mxu0 0.0
      %377 = vmatpush1.xpose.msra.mxu0 0.0
      %378 = vmatprep.subr.mxu0 0.0
      %379 = vmatpush1.xpose.msra.mxu0 0.0
      %380 = vmatprep.subr.mxu0 0.0
      %381 = vmatpush1.xpose.msra.mxu0 %v350
      %382 = vmatprep.subr.mxu0 0.0
      %383 = vmatpush1.xpose.msra.mxu0 %v347
      %384 = vmatprep.subr.mxu0 0.0
      %385 = vmatpush2.xpose.msra.mxu0 0.0
      %386 = vmatprep.subr.mxu0 0.0
      %387 = vmatpush2.xpose.msra.mxu0 0.0
      %388 = vmatprep.subr.mxu0 0.0
      %389 = vmatpush2.xpose.msra.mxu0 0.0
      %390 = vmatprep.subr.mxu0 0.0
      %391 = vmatpush2.xpose.msra.mxu0 0.0
      %392 = vmatprep.subr.mxu0 0.0
      %393 = vmatpush2.xpose.msra.mxu0 0.0
      %394 = vmatprep.subr.mxu0 0.0
      %395 = vmatpush2.xpose.msra.mxu0 0.0
      %396 = vmatprep.subr.mxu0 0.0
      %397 = vmatpush2.xpose.msra.mxu0 0.0
      %398 = vmatprep.subr.mxu0 0.0
      %399 = vmatpush2.xpose.msra.mxu0 0.0
      %400 = vmatprep.subr.mxu0 0.0
      %401 = vmatpush2.xpose.msra.mxu0 0.0
      %402 = vmatprep.subr.mxu0 0.0
      %403 = vmatpush2.xpose.msra.mxu0 0.0
      %404 = vmatprep.subr.mxu0 0.0
      %405 = vmatpush2.xpose.msra.mxu0 0.0
      %406 = vmatprep.subr.mxu0 0.0
      %407 = vmatpush2.xpose.msra.mxu0 0.0
      %408 = vmatprep.subr.mxu0 0.0
      %409 = vmatpush2.xpose.msra.mxu0 0.0
      %410 = vmatprep.subr.mxu0 0.0
      %411 = vmatpush2.xpose.msra.mxu0 0.0
      %412 = vmatprep.subr.mxu0 0.0
      %413 = vmatpush2.xpose.msra.mxu0 0.0
      %414 = vmatprep.subr.mxu0 0.0
      %415 = vmatpush2.xpose.msra.mxu0 0.0
      %416 = vmatprep.mubr.f32.mxu0 0.0
      %417 = vmatmul.mubr.f32.gmra.mxu0 %v341
      %v418 = vpop.f32.mrf.mxu0
      %v419 = vadd.f32 0.0, %v418
      %v420 = vpop.f32.mrf.mxu0
      %421 = vmatprep.mubr.f32.mxu0 0.0
      %422 = vmatmul.mubr.f32.gmra.mxu0 %v344
      %v423 = vpop.f32.mrf.mxu0
      %v424 = vadd.f32 0.0, %v423
      %v425 = vpop.f32.mrf.mxu0
      %426 = vdwg.mxu0
      %v428 = vsel %vm339, %v245, 0
      %v431 = vsel %vm339, %v246, 0
      %v434 = vsel %vm339, %v277, 0
      %v437 = vsel %vm339, %v278, 0
      %439 = vmatprep.subr.mxu0 0.0
      %440 = vmatpush1.xpose.msra.mxu0 0.0
      %441 = vmatprep.subr.mxu0 0.0
      %442 = vmatpush1.xpose.msra.mxu0 0.0
      %443 = vmatprep.subr.mxu0 0.0
      %444 = vmatpush1.xpose.msra.mxu0 0.0
      %445 = vmatprep.subr.mxu0 0.0
      %446 = vmatpush1.xpose.msra.mxu0 0.0
      %447 = vmatprep.subr.mxu0 0.0
      %448 = vmatpush1.xpose.msra.mxu0 0.0
      %449 = vmatprep.subr.mxu0 0.0
      %450 = vmatpush1.xpose.msra.mxu0 0.0
      %451 = vmatprep.subr.mxu0 0.0
      %452 = vmatpush1.xpose.msra.mxu0 0.0
      %453 = vmatprep.subr.mxu0 0.0
      %454 = vmatpush1.xpose.msra.mxu0 0.0
      %455 = vmatprep.subr.mxu0 0.0
      %456 = vmatpush1.xpose.msra.mxu0 0.0
      %457 = vmatprep.subr.mxu0 0.0
      %458 = vmatpush1.xpose.msra.mxu0 0.0
      %459 = vmatprep.subr.mxu0 0.0
      %460 = vmatpush1.xpose.msra.mxu0 0.0
      %461 = vmatprep.subr.mxu0 0.0
      %462 = vmatpush1.xpose.msra.mxu0 0.0
      %463 = vmatprep.subr.mxu0 0.0
      %464 = vmatpush1.xpose.msra.mxu0 0.0
      %465 = vmatprep.subr.mxu0 0.0
      %466 = vmatpush1.xpose.msra.mxu0 0.0
      %467 = vmatprep.subr.mxu0 0.0
      %468 = vmatpush1.xpose.msra.mxu0 %v437
      %469 = vmatprep.subr.mxu0 0.0
      %470 = vmatpush1.xpose.msra.mxu0 %v434
      %471 = vmatprep.subr.mxu0 0.0
      %472 = vmatpush2.xpose.msra.mxu0 0.0
      %473 = vmatprep.subr.mxu0 0.0
      %474 = vmatpush2.xpose.msra.mxu0 0.0
      %475 = vmatprep.subr.mxu0 0.0
      %476 = vmatpush2.xpose.msra.mxu0 0.0
      %477 = vmatprep.subr.mxu0 0.0
      %478 = vmatpush2.xpose.msra.mxu0 0.0
      %479 = vmatprep.subr.mxu0 0.0
      %480 = vmatpush2.xpose.msra.mxu0 0.0
      %481 = vmatprep.subr.mxu0 0.0
      %482 = vmatpush2.xpose.msra.mxu0 0.0
      %483 = vmatprep.subr.mxu0 0.0
      %484 = vmatpush2.xpose.msra.mxu0 0.0
      %485 = vmatprep.subr.mxu0 0.0
      %486 = vmatpush2.xpose.msra.mxu0 0.0
      %487 = vmatprep.subr.mxu0 0.0
      %488 = vmatpush2.xpose.msra.mxu0 0.0
      %489 = vmatprep.subr.mxu0 0.0
      %490 = vmatpush2.xpose.msra.mxu0 0.0
      %491 = vmatprep.subr.mxu0 0.0
      %492 = vmatpush2.xpose.msra.mxu0 0.0
      %493 = vmatprep.subr.mxu0 0.0
      %494 = vmatpush2.xpose.msra.mxu0 0.0
      %495 = vmatprep.subr.mxu0 0.0
      %496 = vmatpush2.xpose.msra.mxu0 0.0
      %497 = vmatprep.subr.mxu0 0.0
      %498 = vmatpush2.xpose.msra.mxu0 0.0
      %499 = vmatprep.subr.mxu0 0.0
      %500 = vmatpush2.xpose.msra.mxu0 0.0
      %501 = vmatprep.subr.mxu0 0.0
      %502 = vmatpush2.xpose.msra.mxu0 0.0
      %503 = vmatprep.mubr.f32.mxu0 0.0
      %504 = vmatmul.mubr.f32.gmra.mxu0 %v428
      %v505 = vpop.f32.mrf.mxu0
      %v506 = vadd.f32 0.0, %v505
      %v507 = vpop.f32.mrf.mxu0
      %508 = vmatprep.mubr.f32.mxu0 0.0
      %509 = vmatmul.mubr.f32.gmra.mxu0 %v431
      %v510 = vpop.f32.mrf.mxu0
      %v511 = vadd.f32 0.0, %v510
      %v512 = vpop.f32.mrf.mxu0
      %513 = vdwg.mxu0
      %v515 = vsel %vm339, %v247, 0
      %v518 = vsel %vm339, %v248, 0
      %v521 = vsel %vm339, %v279, 0
      %v524 = vsel %vm339, %v280, 0
      %526 = vmatprep.subr.mxu0 0.0
      %527 = vmatpush1.xpose.msra.mxu0 0.0
      %528 = vmatprep.subr.mxu0 0.0
      %529 = vmatpush1.xpose.msra.mxu0 0.0
      %530 = vmatprep.subr.mxu0 0.0
      %531 = vmatpush1.xpose.msra.mxu0 0.0
      %532 = vmatprep.subr.mxu0 0.0
      %533 = vmatpush1.xpose.msra.mxu0 0.0
      %534 = vmatprep.subr.mxu0 0.0
      %535 = vmatpush1.xpose.msra.mxu0 0.0
      %536 = vmatprep.subr.mxu0 0.0
      %537 = vmatpush1.xpose.msra.mxu0 0.0
      %538 = vmatprep.subr.mxu0 0.0
      %539 = vmatpush1.xpose.msra.mxu0 0.0
      %540 = vmatprep.subr.mxu0 0.0
      %541 = vmatpush1.xpose.msra.mxu0 0.0
      %542 = vmatprep.subr.mxu0 0.0
      %543 = vmatpush1.xpose.msra.mxu0 0.0
      %544 = vmatprep.subr.mxu0 0.0
      %545 = vmatpush1.xpose.msra.mxu0 0.0
      %546 = vmatprep.subr.mxu0 0.0
      %547 = vmatpush1.xpose.msra.mxu0 0.0
      %548 = vmatprep.subr.mxu0 0.0
      %549 = vmatpush1.xpose.msra.mxu0 0.0
      %550 = vmatprep.subr.mxu0 0.0
      %551 = vmatpush1.xpose.msra.mxu0 0.0
      %552 = vmatprep.subr.mxu0 0.0
      %553 = vmatpush1.xpose.msra.mxu0 0.0
      %554 = vmatprep.subr.mxu0 0.0
      %555 = vmatpush1.xpose.msra.mxu0 %v524
      %556 = vmatprep.subr.mxu0 0.0
      %557 = vmatpush1.xpose.msra.mxu0 %v521
      %558 = vmatprep.subr.mxu0 0.0
      %559 = vmatpush2.xpose.msra.mxu0 0.0
      %560 = vmatprep.subr.mxu0 0.0
      %561 = vmatpush2.xpose.msra.mxu0 0.0
      %562 = vmatprep.subr.mxu0 0.0
      %563 = vmatpush2.xpose.msra.mxu0 0.0
      %564 = vmatprep.subr.mxu0 0.0
      %565 = vmatpush2.xpose.msra.mxu0 0.0
      %566 = vmatprep.subr.mxu0 0.0
      %567 = vmatpush2.xpose.msra.mxu0 0.0
      %568 = vmatprep.subr.mxu0 0.0
      %569 = vmatpush2.xpose.msra.mxu0 0.0
      %570 = vmatprep.subr.mxu0 0.0
      %571 = vmatpush2.xpose.msra.mxu0 0.0
      %572 = vmatprep.subr.mxu0 0.0
      %573 = vmatpush2.xpose.msra.mxu0 0.0
      %574 = vmatprep.subr.mxu0 0.0
      %575 = vmatpush2.xpose.msra.mxu0 0.0
      %576 = vmatprep.subr.mxu0 0.0
      %577 = vmatpush2.xpose.msra.mxu0 0.0
      %578 = vmatprep.subr.mxu0 0.0
      %579 = vmatpush2.xpose.msra.mxu0 0.0
      %580 = vmatprep.subr.mxu0 0.0
      %581 = vmatpush2.xpose.msra.mxu0 0.0
      %582 = vmatprep.subr.mxu0 0.0
      %583 = vmatpush2.xpose.msra.mxu0 0.0
      %584 = vmatprep.subr.mxu0 0.0
      %585 = vmatpush2.xpose.msra.mxu0 0.0
      %586 = vmatprep.subr.mxu0 0.0
      %587 = vmatpush2.xpose.msra.mxu0 0.0
      %588 = vmatprep.subr.mxu0 0.0
      %589 = vmatpush2.xpose.msra.mxu0 0.0
      %590 = vmatprep.mubr.f32.mxu0 0.0
      %591 = vmatmul.mubr.f32.gmra.mxu0 %v515
      %v592 = vpop.f32.mrf.mxu0
      %v593 = vadd.f32 0.0, %v592
      %v594 = vpop.f32.mrf.mxu0
      %595 = vmatprep.mubr.f32.mxu0 0.0
      %596 = vmatmul.mubr.f32.gmra.mxu0 %v518
      %v597 = vpop.f32.mrf.mxu0
      %v598 = vadd.f32 0.0, %v597
      %v599 = vpop.f32.mrf.mxu0
      %600 = vdwg.mxu0
      %v602 = vsel %vm339, %v249, 0
      %v605 = vsel %vm339, %v250, 0
      %v608 = vsel %vm339, %v281, 0
      %v611 = vsel %vm339, %v282, 0
      %613 = vmatprep.subr.mxu0 0.0
      %614 = vmatpush1.xpose.msra.mxu0 0.0
      %615 = vmatprep.subr.mxu0 0.0
      %616 = vmatpush1.xpose.msra.mxu0 0.0
      %617 = vmatprep.subr.mxu0 0.0
      %618 = vmatpush1.xpose.msra.mxu0 0.0
      %619 = vmatprep.subr.mxu0 0.0
      %620 = vmatpush1.xpose.msra.mxu0 0.0
      %621 = vmatprep.subr.mxu0 0.0
      %622 = vmatpush1.xpose.msra.mxu0 0.0
      %623 = vmatprep.subr.mxu0 0.0
      %624 = vmatpush1.xpose.msra.mxu0 0.0
      %625 = vmatprep.subr.mxu0 0.0
      %626 = vmatpush1.xpose.msra.mxu0 0.0
      %627 = vmatprep.subr.mxu0 0.0
      %628 = vmatpush1.xpose.msra.mxu0 0.0
      %629 = vmatprep.subr.mxu0 0.0
      %630 = vmatpush1.xpose.msra.mxu0 0.0
      %631 = vmatprep.subr.mxu0 0.0
      %632 = vmatpush1.xpose.msra.mxu0 0.0
      %633 = vmatprep.subr.mxu0 0.0
      %634 = vmatpush1.xpose.msra.mxu0 0.0
      %635 = vmatprep.subr.mxu0 0.0
      %636 = vmatpush1.xpose.msra.mxu0 0.0
      %637 = vmatprep.subr.mxu0 0.0
      %638 = vmatpush1.xpose.msra.mxu0 0.0
      %639 = vmatprep.subr.mxu0 0.0
      %640 = vmatpush1.xpose.msra.mxu0 0.0
      %641 = vmatprep.subr.mxu0 0.0
      %642 = vmatpush1.xpose.msra.mxu0 %v611
      %643 = vmatprep.subr.mxu0 0.0
      %644 = vmatpush1.xpose.msra.mxu0 %v608
      %645 = vmatprep.subr.mxu0 0.0
      %646 = vmatpush2.xpose.msra.mxu0 0.0
      %647 = vmatprep.subr.mxu0 0.0
      %648 = vmatpush2.xpose.msra.mxu0 0.0
      %649 = vmatprep.subr.mxu0 0.0
      %650 = vmatpush2.xpose.msra.mxu0 0.0
      %651 = vmatprep.subr.mxu0 0.0
      %652 = vmatpush2.xpose.msra.mxu0 0.0
      %653 = vmatprep.subr.mxu0 0.0
      %654 = vmatpush2.xpose.msra.mxu0 0.0
      %655 = vmatprep.subr.mxu0 0.0
      %656 = vmatpush2.xpose.msra.mxu0 0.0
      %657 = vmatprep.subr.mxu0 0.0
      %658 = vmatpush2.xpose.msra.mxu0 0.0
      %659 = vmatprep.subr.mxu0 0.0
      %660 = vmatpush2.xpose.msra.mxu0 0.0
      %661 = vmatprep.subr.mxu0 0.0
      %662 = vmatpush2.xpose.msra.mxu0 0.0
      %663 = vmatprep.subr.mxu0 0.0
      %664 = vmatpush2.xpose.msra.mxu0 0.0
      %665 = vmatprep.subr.mxu0 0.0
      %666 = vmatpush2.xpose.msra.mxu0 0.0
      %667 = vmatprep.subr.mxu0 0.0
      %668 = vmatpush2.xpose.msra.mxu0 0.0
      %669 = vmatprep.subr.mxu0 0.0
      %670 = vmatpush2.xpose.msra.mxu0 0.0
      %671 = vmatprep.subr.mxu0 0.0
      %672 = vmatpush2.xpose.msra.mxu0 0.0
      %673 = vmatprep.subr.mxu0 0.0
      %674 = vmatpush2.xpose.msra.mxu0 0.0
      %675 = vmatprep.subr.mxu0 0.0
      %676 = vmatpush2.xpose.msra.mxu0 0.0
      %677 = vmatprep.mubr.f32.mxu0 0.0
      %678 = vmatmul.mubr.f32.gmra.mxu0 %v602
      %v679 = vpop.f32.mrf.mxu0
      %v680 = vadd.f32 0.0, %v679
      %v681 = vpop.f32.mrf.mxu0
      %682 = vmatprep.mubr.f32.mxu0 0.0
      %683 = vmatmul.mubr.f32.gmra.mxu0 %v605
      %v684 = vpop.f32.mrf.mxu0
      %v685 = vadd.f32 0.0, %v684
      %v686 = vpop.f32.mrf.mxu0
      %687 = vdwg.mxu0
      %v689 = vsel %vm339, %v251, 0
      %v692 = vsel %vm339, %v252, 0
      %v695 = vsel %vm339, %v283, 0
      %v698 = vsel %vm339, %v284, 0
      %700 = vmatprep.subr.mxu0 0.0
      %701 = vmatpush1.xpose.msra.mxu0 0.0
      %702 = vmatprep.subr.mxu0 0.0
      %703 = vmatpush1.xpose.msra.mxu0 0.0
      %704 = vmatprep.subr.mxu0 0.0
      %705 = vmatpush1.xpose.msra.mxu0 0.0
      %706 = vmatprep.subr.mxu0 0.0
      %707 = vmatpush1.xpose.msra.mxu0 0.0
      %708 = vmatprep.subr.mxu0 0.0
      %709 = vmatpush1.xpose.msra.mxu0 0.0
      %710 = vmatprep.subr.mxu0 0.0
      %711 = vmatpush1.xpose.msra.mxu0 0.0
      %712 = vmatprep.subr.mxu0 0.0
      %713 = vmatpush1.xpose.msra.mxu0 0.0
      %714 = vmatprep.subr.mxu0 0.0
      %715 = vmatpush1.xpose.msra.mxu0 0.0
      %716 = vmatprep.subr.mxu0 0.0
      %717 = vmatpush1.xpose.msra.mxu0 0.0
      %718 = vmatprep.subr.mxu0 0.0
      %719 = vmatpush1.xpose.msra.mxu0 0.0
      %720 = vmatprep.subr.mxu0 0.0
      %721 = vmatpush1.xpose.msra.mxu0 0.0
      %722 = vmatprep.subr.mxu0 0.0
      %723 = vmatpush1.xpose.msra.mxu0 0.0
      %724 = vmatprep.subr.mxu0 0.0
      %725 = vmatpush1.xpose.msra.mxu0 0.0
      %726 = vmatprep.subr.mxu0 0.0
      %727 = vmatpush1.xpose.msra.mxu0 0.0
      %728 = vmatprep.subr.mxu0 0.0
      %729 = vmatpush1.xpose.msra.mxu0 %v698
      %730 = vmatprep.subr.mxu0 0.0
      %731 = vmatpush1.xpose.msra.mxu0 %v695
      %732 = vmatprep.subr.mxu0 0.0
      %733 = vmatpush2.xpose.msra.mxu0 0.0
      %734 = vmatprep.subr.mxu0 0.0
      %735 = vmatpush2.xpose.msra.mxu0 0.0
      %736 = vmatprep.subr.mxu0 0.0
      %737 = vmatpush2.xpose.msra.mxu0 0.0
      %738 = vmatprep.subr.mxu0 0.0
      %739 = vmatpush2.xpose.msra.mxu0 0.0
      %740 = vmatprep.subr.mxu0 0.0
      %741 = vmatpush2.xpose.msra.mxu0 0.0
      %742 = vmatprep.subr.mxu0 0.0
      %743 = vmatpush2.xpose.msra.mxu0 0.0
      %744 = vmatprep.subr.mxu0 0.0
      %745 = vmatpush2.xpose.msra.mxu0 0.0
      %746 = vmatprep.subr.mxu0 0.0
      %747 = vmatpush2.xpose.msra.mxu0 0.0
      %748 = vmatprep.subr.mxu0 0.0
      %749 = vmatpush2.xpose.msra.mxu0 0.0
      %750 = vmatprep.subr.mxu0 0.0
      %751 = vmatpush2.xpose.msra.mxu0 0.0
      %752 = vmatprep.subr.mxu0 0.0
      %753 = vmatpush2.xpose.msra.mxu0 0.0
      %754 = vmatprep.subr.mxu0 0.0
      %755 = vmatpush2.xpose.msra.mxu0 0.0
      %756 = vmatprep.subr.mxu0 0.0
      %757 = vmatpush2.xpose.msra.mxu0 0.0
      %758 = vmatprep.subr.mxu0 0.0
      %759 = vmatpush2.xpose.msra.mxu0 0.0
      %760 = vmatprep.subr.mxu0 0.0
      %761 = vmatpush2.xpose.msra.mxu0 0.0
      %762 = vmatprep.subr.mxu0 0.0
      %763 = vmatpush2.xpose.msra.mxu0 0.0
      %764 = vmatprep.mubr.f32.mxu0 0.0
      %765 = vmatmul.mubr.f32.gmra.mxu0 %v689
      %v766 = vpop.f32.mrf.mxu0
      %v767 = vadd.f32 0.0, %v766
      %v768 = vpop.f32.mrf.mxu0
      %769 = vmatprep.mubr.f32.mxu0 0.0
      %770 = vmatmul.mubr.f32.gmra.mxu0 %v692
      %v771 = vpop.f32.mrf.mxu0
      %v772 = vadd.f32 0.0, %v771
      %v773 = vpop.f32.mrf.mxu0
      %774 = vdwg.mxu0
      %v776 = vsel %vm339, %v253, 0
      %v779 = vsel %vm339, %v254, 0
      %v782 = vsel %vm339, %v285, 0
      %v785 = vsel %vm339, %v286, 0
      %787 = vmatprep.subr.mxu0 0.0
      %788 = vmatpush1.xpose.msra.mxu0 0.0
      %789 = vmatprep.subr.mxu0 0.0
      %790 = vmatpush1.xpose.msra.mxu0 0.0
      %791 = vmatprep.subr.mxu0 0.0
      %792 = vmatpush1.xpose.msra.mxu0 0.0
      %793 = vmatprep.subr.mxu0 0.0
      %794 = vmatpush1.xpose.msra.mxu0 0.0
      %795 = vmatprep.subr.mxu0 0.0
      %796 = vmatpush1.xpose.msra.mxu0 0.0
      %797 = vmatprep.subr.mxu0 0.0
      %798 = vmatpush1.xpose.msra.mxu0 0.0
      %799 = vmatprep.subr.mxu0 0.0
      %800 = vmatpush1.xpose.msra.mxu0 0.0
      %801 = vmatprep.subr.mxu0 0.0
      %802 = vmatpush1.xpose.msra.mxu0 0.0
      %803 = vmatprep.subr.mxu0 0.0
      %804 = vmatpush1.xpose.msra.mxu0 0.0
      %805 = vmatprep.subr.mxu0 0.0
      %806 = vmatpush1.xpose.msra.mxu0 0.0
      %807 = vmatprep.subr.mxu0 0.0
      %808 = vmatpush1.xpose.msra.mxu0 0.0
      %809 = vmatprep.subr.mxu0 0.0
      %810 = vmatpush1.xpose.msra.mxu0 0.0
      %811 = vmatprep.subr.mxu0 0.0
      %812 = vmatpush1.xpose.msra.mxu0 0.0
      %813 = vmatprep.subr.mxu0 0.0
      %814 = vmatpush1.xpose.msra.mxu0 0.0
      %815 = vmatprep.subr.mxu0 0.0
      %816 = vmatpush1.xpose.msra.mxu0 %v785
      %817 = vmatprep.subr.mxu0 0.0
      %818 = vmatpush1.xpose.msra.mxu0 %v782
      %819 = vmatprep.subr.mxu0 0.0
      %820 = vmatpush2.xpose.msra.mxu0 0.0
      %821 = vmatprep.subr.mxu0 0.0
      %822 = vmatpush2.xpose.msra.mxu0 0.0
      %823 = vmatprep.subr.mxu0 0.0
      %824 = vmatpush2.xpose.msra.mxu0 0.0
      %825 = vmatprep.subr.mxu0 0.0
      %826 = vmatpush2.xpose.msra.mxu0 0.0
      %827 = vmatprep.subr.mxu0 0.0
      %828 = vmatpush2.xpose.msra.mxu0 0.0
      %829 = vmatprep.subr.mxu0 0.0
      %830 = vmatpush2.xpose.msra.mxu0 0.0
      %831 = vmatprep.subr.mxu0 0.0
      %832 = vmatpush2.xpose.msra.mxu0 0.0
      %833 = vmatprep.subr.mxu0 0.0
      %834 = vmatpush2.xpose.msra.mxu0 0.0
      %835 = vmatprep.subr.mxu0 0.0
      %836 = vmatpush2.xpose.msra.mxu0 0.0
      %837 = vmatprep.subr.mxu0 0.0
      %838 = vmatpush2.xpose.msra.mxu0 0.0
      %839 = vmatprep.subr.mxu0 0.0
      %840 = vmatpush2.xpose.msra.mxu0 0.0
      %841 = vmatprep.subr.mxu0 0.0
      %842 = vmatpush2.xpose.msra.mxu0 0.0
      %843 = vmatprep.subr.mxu0 0.0
      %844 = vmatpush2.xpose.msra.mxu0 0.0
      %845 = vmatprep.subr.mxu0 0.0
      %846 = vmatpush2.xpose.msra.mxu0 0.0
      %847 = vmatprep.subr.mxu0 0.0
      %848 = vmatpush2.xpose.msra.mxu0 0.0
      %849 = vmatprep.subr.mxu0 0.0
      %850 = vmatpush2.xpose.msra.mxu0 0.0
      %851 = vmatprep.mubr.f32.mxu0 0.0
      %852 = vmatmul.mubr.f32.gmra.mxu0 %v776
      %v853 = vpop.f32.mrf.mxu0
      %v854 = vadd.f32 0.0, %v853
      %v855 = vpop.f32.mrf.mxu0
      %856 = vmatprep.mubr.f32.mxu0 0.0
      %857 = vmatmul.mubr.f32.gmra.mxu0 %v779
      %v858 = vpop.f32.mrf.mxu0
      %v859 = vadd.f32 0.0, %v858
      %v860 = vpop.f32.mrf.mxu0
      %861 = vdwg.mxu0
      %v863 = vsel %vm339, %v255, 0
      %v866 = vsel %vm339, %v256, 0
      %v869 = vsel %vm339, %v287, 0
      %v872 = vsel %vm339, %v288, 0
      %874 = vmatprep.subr.mxu0 0.0
      %875 = vmatpush1.xpose.msra.mxu0 0.0
      %876 = vmatprep.subr.mxu0 0.0
      %877 = vmatpush1.xpose.msra.mxu0 0.0
      %878 = vmatprep.subr.mxu0 0.0
      %879 = vmatpush1.xpose.msra.mxu0 0.0
      %880 = vmatprep.subr.mxu0 0.0
      %881 = vmatpush1.xpose.msra.mxu0 0.0
      %882 = vmatprep.subr.mxu0 0.0
      %883 = vmatpush1.xpose.msra.mxu0 0.0
      %884 = vmatprep.subr.mxu0 0.0
      %885 = vmatpush1.xpose.msra.mxu0 0.0
      %886 = vmatprep.subr.mxu0 0.0
      %887 = vmatpush1.xpose.msra.mxu0 0.0
      %888 = vmatprep.subr.mxu0 0.0
      %889 = vmatpush1.xpose.msra.mxu0 0.0
      %890 = vmatprep.subr.mxu0 0.0
      %891 = vmatpush1.xpose.msra.mxu0 0.0
      %892 = vmatprep.subr.mxu0 0.0
      %893 = vmatpush1.xpose.msra.mxu0 0.0
      %894 = vmatprep.subr.mxu0 0.0
      %895 = vmatpush1.xpose.msra.mxu0 0.0
      %896 = vmatprep.subr.mxu0 0.0
      %897 = vmatpush1.xpose.msra.mxu0 0.0
      %898 = vmatprep.subr.mxu0 0.0
      %899 = vmatpush1.xpose.msra.mxu0 0.0
      %900 = vmatprep.subr.mxu0 0.0
      %901 = vmatpush1.xpose.msra.mxu0 0.0
      %902 = vmatprep.subr.mxu0 0.0
      %903 = vmatpush1.xpose.msra.mxu0 %v872
      %904 = vmatprep.subr.mxu0 0.0
      %905 = vmatpush1.xpose.msra.mxu0 %v869
      %906 = vmatprep.subr.mxu0 0.0
      %907 = vmatpush2.xpose.msra.mxu0 0.0
      %908 = vmatprep.subr.mxu0 0.0
      %909 = vmatpush2.xpose.msra.mxu0 0.0
      %910 = vmatprep.subr.mxu0 0.0
      %911 = vmatpush2.xpose.msra.mxu0 0.0
      %912 = vmatprep.subr.mxu0 0.0
      %913 = vmatpush2.xpose.msra.mxu0 0.0
      %914 = vmatprep.subr.mxu0 0.0
      %915 = vmatpush2.xpose.msra.mxu0 0.0
      %916 = vmatprep.subr.mxu0 0.0
      %917 = vmatpush2.xpose.msra.mxu0 0.0
      %918 = vmatprep.subr.mxu0 0.0
      %919 = vmatpush2.xpose.msra.mxu0 0.0
      %920 = vmatprep.subr.mxu0 0.0
      %921 = vmatpush2.xpose.msra.mxu0 0.0
      %922 = vmatprep.subr.mxu0 0.0
      %923 = vmatpush2.xpose.msra.mxu0 0.0
      %924 = vmatprep.subr.mxu0 0.0
      %925 = vmatpush2.xpose.msra.mxu0 0.0
      %926 = vmatprep.subr.mxu0 0.0
      %927 = vmatpush2.xpose.msra.mxu0 0.0
      %928 = vmatprep.subr.mxu0 0.0
      %929 = vmatpush2.xpose.msra.mxu0 0.0
      %930 = vmatprep.subr.mxu0 0.0
      %931 = vmatpush2.xpose.msra.mxu0 0.0
      %932 = vmatprep.subr.mxu0 0.0
      %933 = vmatpush2.xpose.msra.mxu0 0.0
      %934 = vmatprep.subr.mxu0 0.0
      %935 = vmatpush2.xpose.msra.mxu0 0.0
      %936 = vmatprep.subr.mxu0 0.0
      %937 = vmatpush2.xpose.msra.mxu0 0.0
      %938 = vmatprep.mubr.f32.mxu0 0.0
      %939 = vmatmul.mubr.f32.gmra.mxu0 %v863
      %v940 = vpop.f32.mrf.mxu0
      %v941 = vadd.f32 0.0, %v940
      %v942 = vpop.f32.mrf.mxu0
      %943 = vmatprep.mubr.f32.mxu0 0.0
      %944 = vmatmul.mubr.f32.gmra.mxu0 %v866
      %v945 = vpop.f32.mrf.mxu0
      %v946 = vadd.f32 0.0, %v945
      %v947 = vpop.f32.mrf.mxu0
      %948 = vdwg.mxu0
      %v950 = vsel %vm339, %v257, 0
      %v953 = vsel %vm339, %v258, 0
      %v956 = vsel %vm339, %v289, 0
      %v959 = vsel %vm339, %v290, 0
      %961 = vmatprep.subr.mxu0 0.0
      %962 = vmatpush1.xpose.msra.mxu0 0.0
      %963 = vmatprep.subr.mxu0 0.0
      %964 = vmatpush1.xpose.msra.mxu0 0.0
      %965 = vmatprep.subr.mxu0 0.0
      %966 = vmatpush1.xpose.msra.mxu0 0.0
      %967 = vmatprep.subr.mxu0 0.0
      %968 = vmatpush1.xpose.msra.mxu0 0.0
      %969 = vmatprep.subr.mxu0 0.0
      %970 = vmatpush1.xpose.msra.mxu0 0.0
      %971 = vmatprep.subr.mxu0 0.0
      %972 = vmatpush1.xpose.msra.mxu0 0.0
      %973 = vmatprep.subr.mxu0 0.0
      %974 = vmatpush1.xpose.msra.mxu0 0.0
      %975 = vmatprep.subr.mxu0 0.0
      %976 = vmatpush1.xpose.msra.mxu0 0.0
      %977 = vmatprep.subr.mxu0 0.0
      %978 = vmatpush1.xpose.msra.mxu0 0.0
      %979 = vmatprep.subr.mxu0 0.0
      %980 = vmatpush1.xpose.msra.mxu0 0.0
      %981 = vmatprep.subr.mxu0 0.0
      %982 = vmatpush1.xpose.msra.mxu0 0.0
      %983 = vmatprep.subr.mxu0 0.0
      %984 = vmatpush1.xpose.msra.mxu0 0.0
      %985 = vmatprep.subr.mxu0 0.0
      %986 = vmatpush1.xpose.msra.mxu0 0.0
      %987 = vmatprep.subr.mxu0 0.0
      %988 = vmatpush1.xpose.msra.mxu0 0.0
      %989 = vmatprep.subr.mxu0 0.0
      %990 = vmatpush1.xpose.msra.mxu0 %v959
      %991 = vmatprep.subr.mxu0 0.0
      %992 = vmatpush1.xpose.msra.mxu0 %v956
      %993 = vmatprep.subr.mxu0 0.0
      %994 = vmatpush2.xpose.msra.mxu0 0.0
      %995 = vmatprep.subr.mxu0 0.0
      %996 = vmatpush2.xpose.msra.mxu0 0.0
      %997 = vmatprep.subr.mxu0 0.0
      %998 = vmatpush2.xpose.msra.mxu0 0.0
      %999 = vmatprep.subr.mxu0 0.0
      %1000 = vmatpush2.xpose.msra.mxu0 0.0
      %1001 = vmatprep.subr.mxu0 0.0
      %1002 = vmatpush2.xpose.msra.mxu0 0.0
      %1003 = vmatprep.subr.mxu0 0.0
      %1004 = vmatpush2.xpose.msra.mxu0 0.0
      %1005 = vmatprep.subr.mxu0 0.0
      %1006 = vmatpush2.xpose.msra.mxu0 0.0
      %1007 = vmatprep.subr.mxu0 0.0
      %1008 = vmatpush2.xpose.msra.mxu0 0.0
      %1009 = vmatprep.subr.mxu0 0.0
      %1010 = vmatpush2.xpose.msra.mxu0 0.0
      %1011 = vmatprep.subr.mxu0 0.0
      %1012 = vmatpush2.xpose.msra.mxu0 0.0
      %1013 = vmatprep.subr.mxu0 0.0
      %1014 = vmatpush2.xpose.msra.mxu0 0.0
      %1015 = vmatprep.subr.mxu0 0.0
      %1016 = vmatpush2.xpose.msra.mxu0 0.0
      %1017 = vmatprep.subr.mxu0 0.0
      %1018 = vmatpush2.xpose.msra.mxu0 0.0
      %1019 = vmatprep.subr.mxu0 0.0
      %1020 = vmatpush2.xpose.msra.mxu0 0.0
      %1021 = vmatprep.subr.mxu0 0.0
      %1022 = vmatpush2.xpose.msra.mxu0 0.0
      %1023 = vmatprep.subr.mxu0 0.0
      %1024 = vmatpush2.xpose.msra.mxu0 0.0
      %1025 = vmatprep.mubr.f32.mxu0 0.0
      %1026 = vmatmul.mubr.f32.gmra.mxu0 %v950
      %v1027 = vpop.f32.mrf.mxu0
      %v1028 = vadd.f32 0.0, %v1027
      %v1029 = vpop.f32.mrf.mxu0
      %1030 = vmatprep.mubr.f32.mxu0 0.0
      %1031 = vmatmul.mubr.f32.gmra.mxu0 %v953
      %v1032 = vpop.f32.mrf.mxu0
      %v1033 = vadd.f32 0.0, %v1032
      %v1034 = vpop.f32.mrf.mxu0
      %1035 = vdwg.mxu0
      %v1037 = vsel %vm339, %v259, 0
      %v1040 = vsel %vm339, %v260, 0
      %v1043 = vsel %vm339, %v291, 0
      %v1046 = vsel %vm339, %v292, 0
      %1048 = vmatprep.subr.mxu0 0.0
      %1049 = vmatpush1.xpose.msra.mxu0 0.0
      %1050 = vmatprep.subr.mxu0 0.0
      %1051 = vmatpush1.xpose.msra.mxu0 0.0
      %1052 = vmatprep.subr.mxu0 0.0
      %1053 = vmatpush1.xpose.msra.mxu0 0.0
      %1054 = vmatprep.subr.mxu0 0.0
      %1055 = vmatpush1.xpose.msra.mxu0 0.0
      %1056 = vmatprep.subr.mxu0 0.0
      %1057 = vmatpush1.xpose.msra.mxu0 0.0
      %1058 = vmatprep.subr.mxu0 0.0
      %1059 = vmatpush1.xpose.msra.mxu0 0.0
      %1060 = vmatprep.subr.mxu0 0.0
      %1061 = vmatpush1.xpose.msra.mxu0 0.0
      %1062 = vmatprep.subr.mxu0 0.0
      %1063 = vmatpush1.xpose.msra.mxu0 0.0
      %1064 = vmatprep.subr.mxu0 0.0
      %1065 = vmatpush1.xpose.msra.mxu0 0.0
      %1066 = vmatprep.subr.mxu0 0.0
      %1067 = vmatpush1.xpose.msra.mxu0 0.0
      %1068 = vmatprep.subr.mxu0 0.0
      %1069 = vmatpush1.xpose.msra.mxu0 0.0
      %1070 = vmatprep.subr.mxu0 0.0
      %1071 = vmatpush1.xpose.msra.mxu0 0.0
      %1072 = vmatprep.subr.mxu0 0.0
      %1073 = vmatpush1.xpose.msra.mxu0 0.0
      %1074 = vmatprep.subr.mxu0 0.0
      %1075 = vmatpush1.xpose.msra.mxu0 0.0
      %1076 = vmatprep.subr.mxu0 0.0
      %1077 = vmatpush1.xpose.msra.mxu0 %v1046
      %1078 = vmatprep.subr.mxu0 0.0
      %1079 = vmatpush1.xpose.msra.mxu0 %v1043
      %1080 = vmatprep.subr.mxu0 0.0
      %1081 = vmatpush2.xpose.msra.mxu0 0.0
      %1082 = vmatprep.subr.mxu0 0.0
      %1083 = vmatpush2.xpose.msra.mxu0 0.0
      %1084 = vmatprep.subr.mxu0 0.0
      %1085 = vmatpush2.xpose.msra.mxu0 0.0
      %1086 = vmatprep.subr.mxu0 0.0
      %1087 = vmatpush2.xpose.msra.mxu0 0.0
      %1088 = vmatprep.subr.mxu0 0.0
      %1089 = vmatpush2.xpose.msra.mxu0 0.0
      %1090 = vmatprep.subr.mxu0 0.0
      %1091 = vmatpush2.xpose.msra.mxu0 0.0
      %1092 = vmatprep.subr.mxu0 0.0
      %1093 = vmatpush2.xpose.msra.mxu0 0.0
      %1094 = vmatprep.subr.mxu0 0.0
      %1095 = vmatpush2.xpose.msra.mxu0 0.0
      %1096 = vmatprep.subr.mxu0 0.0
      %1097 = vmatpush2.xpose.msra.mxu0 0.0
      %1098 = vmatprep.subr.mxu0 0.0
      %1099 = vmatpush2.xpose.msra.mxu0 0.0
      %1100 = vmatprep.subr.mxu0 0.0
      %1101 = vmatpush2.xpose.msra.mxu0 0.0
      %1102 = vmatprep.subr.mxu0 0.0
      %1103 = vmatpush2.xpose.msra.mxu0 0.0
      %1104 = vmatprep.subr.mxu0 0.0
      %1105 = vmatpush2.xpose.msra.mxu0 0.0
      %1106 = vmatprep.subr.mxu0 0.0
      %1107 = vmatpush2.xpose.msra.mxu0 0.0
      %1108 = vmatprep.subr.mxu0 0.0
      %1109 = vmatpush2.xpose.msra.mxu0 0.0
      %1110 = vmatprep.subr.mxu0 0.0
      %1111 = vmatpush2.xpose.msra.mxu0 0.0
      %1112 = vmatprep.mubr.f32.mxu0 0.0
      %1113 = vmatmul.mubr.f32.gmra.mxu0 %v1037
      %v1114 = vpop.f32.mrf.mxu0
      %v1115 = vadd.f32 0.0, %v1114
      %v1116 = vpop.f32.mrf.mxu0
      %1117 = vmatprep.mubr.f32.mxu0 0.0
      %1118 = vmatmul.mubr.f32.gmra.mxu0 %v1040
      %v1119 = vpop.f32.mrf.mxu0
      %v1120 = vadd.f32 0.0, %v1119
      %v1121 = vpop.f32.mrf.mxu0
      %1122 = vdwg.mxu0
      %v1124 = vsel %vm339, %v261, 0
      %v1127 = vsel %vm339, %v262, 0
      %v1130 = vsel %vm339, %v293, 0
      %v1133 = vsel %vm339, %v294, 0
      %1135 = vmatprep.subr.mxu0 0.0
      %1136 = vmatpush1.xpose.msra.mxu0 0.0
      %1137 = vmatprep.subr.mxu0 0.0
      %1138 = vmatpush1.xpose.msra.mxu0 0.0
      %1139 = vmatprep.subr.mxu0 0.0
      %1140 = vmatpush1.xpose.msra.mxu0 0.0
      %1141 = vmatprep.subr.mxu0 0.0
      %1142 = vmatpush1.xpose.msra.mxu0 0.0
      %1143 = vmatprep.subr.mxu0 0.0
      %1144 = vmatpush1.xpose.msra.mxu0 0.0
      %1145 = vmatprep.subr.mxu0 0.0
      %1146 = vmatpush1.xpose.msra.mxu0 0.0
      %1147 = vmatprep.subr.mxu0 0.0
      %1148 = vmatpush1.xpose.msra.mxu0 0.0
      %1149 = vmatprep.subr.mxu0 0.0
      %1150 = vmatpush1.xpose.msra.mxu0 0.0
      %1151 = vmatprep.subr.mxu0 0.0
      %1152 = vmatpush1.xpose.msra.mxu0 0.0
      %1153 = vmatprep.subr.mxu0 0.0
      %1154 = vmatpush1.xpose.msra.mxu0 0.0
      %1155 = vmatprep.subr.mxu0 0.0
      %1156 = vmatpush1.xpose.msra.mxu0 0.0
      %1157 = vmatprep.subr.mxu0 0.0
      %1158 = vmatpush1.xpose.msra.mxu0 0.0
      %1159 = vmatprep.subr.mxu0 0.0
      %1160 = vmatpush1.xpose.msra.mxu0 0.0
      %1161 = vmatprep.subr.mxu0 0.0
      %1162 = vmatpush1.xpose.msra.mxu0 0.0
      %1163 = vmatprep.subr.mxu0 0.0
      %1164 = vmatpush1.xpose.msra.mxu0 %v1133
      %1165 = vmatprep.subr.mxu0 0.0
      %1166 = vmatpush1.xpose.msra.mxu0 %v1130
      %1167 = vmatprep.subr.mxu0 0.0
      %1168 = vmatpush2.xpose.msra.mxu0 0.0
      %1169 = vmatprep.subr.mxu0 0.0
      %1170 = vmatpush2.xpose.msra.mxu0 0.0
      %1171 = vmatprep.subr.mxu0 0.0
      %1172 = vmatpush2.xpose.msra.mxu0 0.0
      %1173 = vmatprep.subr.mxu0 0.0
      %1174 = vmatpush2.xpose.msra.mxu0 0.0
      %1175 = vmatprep.subr.mxu0 0.0
      %1176 = vmatpush2.xpose.msra.mxu0 0.0
      %1177 = vmatprep.subr.mxu0 0.0
      %1178 = vmatpush2.xpose.msra.mxu0 0.0
      %1179 = vmatprep.subr.mxu0 0.0
      %1180 = vmatpush2.xpose.msra.mxu0 0.0
      %1181 = vmatprep.subr.mxu0 0.0
      %1182 = vmatpush2.xpose.msra.mxu0 0.0
      %1183 = vmatprep.subr.mxu0 0.0
      %1184 = vmatpush2.xpose.msra.mxu0 0.0
      %1185 = vmatprep.subr.mxu0 0.0
      %1186 = vmatpush2.xpose.msra.mxu0 0.0
      %1187 = vmatprep.subr.mxu0 0.0
      %1188 = vmatpush2.xpose.msra.mxu0 0.0
      %1189 = vmatprep.subr.mxu0 0.0
      %1190 = vmatpush2.xpose.msra.mxu0 0.0
      %1191 = vmatprep.subr.mxu0 0.0
      %1192 = vmatpush2.xpose.msra.mxu0 0.0
      %1193 = vmatprep.subr.mxu0 0.0
      %1194 = vmatpush2.xpose.msra.mxu0 0.0
      %1195 = vmatprep.subr.mxu0 0.0
      %1196 = vmatpush2.xpose.msra.mxu0 0.0
      %1197 = vmatprep.subr.mxu0 0.0
      %1198 = vmatpush2.xpose.msra.mxu0 0.0
      %1199 = vmatprep.mubr.f32.mxu0 0.0
      %1200 = vmatmul.mubr.f32.gmra.mxu0 %v1124
      %v1201 = vpop.f32.mrf.mxu0
      %v1202 = vadd.f32 0.0, %v1201
      %v1203 = vpop.f32.mrf.mxu0
      %1204 = vmatprep.mubr.f32.mxu0 0.0
      %1205 = vmatmul.mubr.f32.gmra.mxu0 %v1127
      %v1206 = vpop.f32.mrf.mxu0
      %v1207 = vadd.f32 0.0, %v1206
      %v1208 = vpop.f32.mrf.mxu0
      %1209 = vdwg.mxu0
      %v1211 = vsel %vm339, %v263, 0
      %v1214 = vsel %vm339, %v264, 0
      %v1217 = vsel %vm339, %v295, 0
      %v1220 = vsel %vm339, %v296, 0
      %1222 = vmatprep.subr.mxu0 0.0
      %1223 = vmatpush1.xpose.msra.mxu0 0.0
      %1224 = vmatprep.subr.mxu0 0.0
      %1225 = vmatpush1.xpose.msra.mxu0 0.0
      %1226 = vmatprep.subr.mxu0 0.0
      %1227 = vmatpush1.xpose.msra.mxu0 0.0
      %1228 = vmatprep.subr.mxu0 0.0
      %1229 = vmatpush1.xpose.msra.mxu0 0.0
      %1230 = vmatprep.subr.mxu0 0.0
      %1231 = vmatpush1.xpose.msra.mxu0 0.0
      %1232 = vmatprep.subr.mxu0 0.0
      %1233 = vmatpush1.xpose.msra.mxu0 0.0
      %1234 = vmatprep.subr.mxu0 0.0
      %1235 = vmatpush1.xpose.msra.mxu0 0.0
      %1236 = vmatprep.subr.mxu0 0.0
      %1237 = vmatpush1.xpose.msra.mxu0 0.0
      %1238 = vmatprep.subr.mxu0 0.0
      %1239 = vmatpush1.xpose.msra.mxu0 0.0
      %1240 = vmatprep.subr.mxu0 0.0
      %1241 = vmatpush1.xpose.msra.mxu0 0.0
      %1242 = vmatprep.subr.mxu0 0.0
      %1243 = vmatpush1.xpose.msra.mxu0 0.0
      %1244 = vmatprep.subr.mxu0 0.0
      %1245 = vmatpush1.xpose.msra.mxu0 0.0
      %1246 = vmatprep.subr.mxu0 0.0
      %1247 = vmatpush1.xpose.msra.mxu0 0.0
      %1248 = vmatprep.subr.mxu0 0.0
      %1249 = vmatpush1.xpose.msra.mxu0 0.0
      %1250 = vmatprep.subr.mxu0 0.0
      %1251 = vmatpush1.xpose.msra.mxu0 %v1220
      %1252 = vmatprep.subr.mxu0 0.0
      %1253 = vmatpush1.xpose.msra.mxu0 %v1217
      %1254 = vmatprep.subr.mxu0 0.0
      %1255 = vmatpush2.xpose.msra.mxu0 0.0
      %1256 = vmatprep.subr.mxu0 0.0
      %1257 = vmatpush2.xpose.msra.mxu0 0.0
      %1258 = vmatprep.subr.mxu0 0.0
      %1259 = vmatpush2.xpose.msra.mxu0 0.0
      %1260 = vmatprep.subr.mxu0 0.0
      %1261 = vmatpush2.xpose.msra.mxu0 0.0
      %1262 = vmatprep.subr.mxu0 0.0
      %1263 = vmatpush2.xpose.msra.mxu0 0.0
      %1264 = vmatprep.subr.mxu0 0.0
      %1265 = vmatpush2.xpose.msra.mxu0 0.0
      %1266 = vmatprep.subr.mxu0 0.0
      %1267 = vmatpush2.xpose.msra.mxu0 0.0
      %1268 = vmatprep.subr.mxu0 0.0
      %1269 = vmatpush2.xpose.msra.mxu0 0.0
      %1270 = vmatprep.subr.mxu0 0.0
      %1271 = vmatpush2.xpose.msra.mxu0 0.0
      %1272 = vmatprep.subr.mxu0 0.0
      %1273 = vmatpush2.xpose.msra.mxu0 0.0
      %1274 = vmatprep.subr.mxu0 0.0
      %1275 = vmatpush2.xpose.msra.mxu0 0.0
      %1276 = vmatprep.subr.mxu0 0.0
      %1277 = vmatpush2.xpose.msra.mxu0 0.0
      %1278 = vmatprep.subr.mxu0 0.0
      %1279 = vmatpush2.xpose.msra.mxu0 0.0
      %1280 = vmatprep.subr.mxu0 0.0
      %1281 = vmatpush2.xpose.msra.mxu0 0.0
      %1282 = vmatprep.subr.mxu0 0.0
      %1283 = vmatpush2.xpose.msra.mxu0 0.0
      %1284 = vmatprep.subr.mxu0 0.0
      %1285 = vmatpush2.xpose.msra.mxu0 0.0
      %1286 = vmatprep.mubr.f32.mxu0 0.0
      %1287 = vmatmul.mubr.f32.gmra.mxu0 %v1211
      %v1288 = vpop.f32.mrf.mxu0
      %v1289 = vadd.f32 0.0, %v1288
      %v1290 = vpop.f32.mrf.mxu0
      %1291 = vmatprep.mubr.f32.mxu0 0.0
      %1292 = vmatmul.mubr.f32.gmra.mxu0 %v1214
      %v1293 = vpop.f32.mrf.mxu0
      %v1294 = vadd.f32 0.0, %v1293
      %v1295 = vpop.f32.mrf.mxu0
      %1296 = vdwg.mxu0
      %v1298 = vsel %vm339, %v265, 0
      %v1301 = vsel %vm339, %v266, 0
      %v1304 = vsel %vm339, %v297, 0
      %v1307 = vsel %vm339, %v298, 0
      %1309 = vmatprep.subr.mxu0 0.0
      %1310 = vmatpush1.xpose.msra.mxu0 0.0
      %1311 = vmatprep.subr.mxu0 0.0
      %1312 = vmatpush1.xpose.msra.mxu0 0.0
      %1313 = vmatprep.subr.mxu0 0.0
      %1314 = vmatpush1.xpose.msra.mxu0 0.0
      %1315 = vmatprep.subr.mxu0 0.0
      %1316 = vmatpush1.xpose.msra.mxu0 0.0
      %1317 = vmatprep.subr.mxu0 0.0
      %1318 = vmatpush1.xpose.msra.mxu0 0.0
      %1319 = vmatprep.subr.mxu0 0.0
      %1320 = vmatpush1.xpose.msra.mxu0 0.0
      %1321 = vmatprep.subr.mxu0 0.0
      %1322 = vmatpush1.xpose.msra.mxu0 0.0
      %1323 = vmatprep.subr.mxu0 0.0
      %1324 = vmatpush1.xpose.msra.mxu0 0.0
      %1325 = vmatprep.subr.mxu0 0.0
      %1326 = vmatpush1.xpose.msra.mxu0 0.0
      %1327 = vmatprep.subr.mxu0 0.0
      %1328 = vmatpush1.xpose.msra.mxu0 0.0
      %1329 = vmatprep.subr.mxu0 0.0
      %1330 = vmatpush1.xpose.msra.mxu0 0.0
      %1331 = vmatprep.subr.mxu0 0.0
      %1332 = vmatpush1.xpose.msra.mxu0 0.0
      %1333 = vmatprep.subr.mxu0 0.0
      %1334 = vmatpush1.xpose.msra.mxu0 0.0
      %1335 = vmatprep.subr.mxu0 0.0
      %1336 = vmatpush1.xpose.msra.mxu0 0.0
      %1337 = vmatprep.subr.mxu0 0.0
      %1338 = vmatpush1.xpose.msra.mxu0 %v1307
      %1339 = vmatprep.subr.mxu0 0.0
      %1340 = vmatpush1.xpose.msra.mxu0 %v1304
      %1341 = vmatprep.subr.mxu0 0.0
      %1342 = vmatpush2.xpose.msra.mxu0 0.0
      %1343 = vmatprep.subr.mxu0 0.0
      %1344 = vmatpush2.xpose.msra.mxu0 0.0
      %1345 = vmatprep.subr.mxu0 0.0
      %1346 = vmatpush2.xpose.msra.mxu0 0.0
      %1347 = vmatprep.subr.mxu0 0.0
      %1348 = vmatpush2.xpose.msra.mxu0 0.0
      %1349 = vmatprep.subr.mxu0 0.0
      %1350 = vmatpush2.xpose.msra.mxu0 0.0
      %1351 = vmatprep.subr.mxu0 0.0
      %1352 = vmatpush2.xpose.msra.mxu0 0.0
      %1353 = vmatprep.subr.mxu0 0.0
      %1354 = vmatpush2.xpose.msra.mxu0 0.0
      %1355 = vmatprep.subr.mxu0 0.0
      %1356 = vmatpush2.xpose.msra.mxu0 0.0
      %1357 = vmatprep.subr.mxu0 0.0
      %1358 = vmatpush2.xpose.msra.mxu0 0.0
      %1359 = vmatprep.subr.mxu0 0.0
      %1360 = vmatpush2.xpose.msra.mxu0 0.0
      %1361 = vmatprep.subr.mxu0 0.0
      %1362 = vmatpush2.xpose.msra.mxu0 0.0
      %1363 = vmatprep.subr.mxu0 0.0
      %1364 = vmatpush2.xpose.msra.mxu0 0.0
      %1365 = vmatprep.subr.mxu0 0.0
      %1366 = vmatpush2.xpose.msra.mxu0 0.0
      %1367 = vmatprep.subr.mxu0 0.0
      %1368 = vmatpush2.xpose.msra.mxu0 0.0
      %1369 = vmatprep.subr.mxu0 0.0
      %1370 = vmatpush2.xpose.msra.mxu0 0.0
      %1371 = vmatprep.subr.mxu0 0.0
      %1372 = vmatpush2.xpose.msra.mxu0 0.0
      %1373 = vmatprep.mubr.f32.mxu0 0.0
      %1374 = vmatmul.mubr.f32.gmra.mxu0 %v1298
      %v1375 = vpop.f32.mrf.mxu0
      %v1376 = vadd.f32 0.0, %v1375
      %v1377 = vpop.f32.mrf.mxu0
      %1378 = vmatprep.mubr.f32.mxu0 0.0
      %1379 = vmatmul.mubr.f32.gmra.mxu0 %v1301
      %v1380 = vpop.f32.mrf.mxu0
      %v1381 = vadd.f32 0.0, %v1380
      %v1382 = vpop.f32.mrf.mxu0
      %1383 = vdwg.mxu0
      %v1385 = vsel %vm339, %v267, 0
      %v1388 = vsel %vm339, %v268, 0
      %v1391 = vsel %vm339, %v299, 0
      %v1394 = vsel %vm339, %v300, 0
      %1396 = vmatprep.subr.mxu0 0.0
      %1397 = vmatpush1.xpose.msra.mxu0 0.0
      %1398 = vmatprep.subr.mxu0 0.0
      %1399 = vmatpush1.xpose.msra.mxu0 0.0
      %1400 = vmatprep.subr.mxu0 0.0
      %1401 = vmatpush1.xpose.msra.mxu0 0.0
      %1402 = vmatprep.subr.mxu0 0.0
      %1403 = vmatpush1.xpose.msra.mxu0 0.0
      %1404 = vmatprep.subr.mxu0 0.0
      %1405 = vmatpush1.xpose.msra.mxu0 0.0
      %1406 = vmatprep.subr.mxu0 0.0
      %1407 = vmatpush1.xpose.msra.mxu0 0.0
      %1408 = vmatprep.subr.mxu0 0.0
      %1409 = vmatpush1.xpose.msra.mxu0 0.0
      %1410 = vmatprep.subr.mxu0 0.0
      %1411 = vmatpush1.xpose.msra.mxu0 0.0
      %1412 = vmatprep.subr.mxu0 0.0
      %1413 = vmatpush1.xpose.msra.mxu0 0.0
      %1414 = vmatprep.subr.mxu0 0.0
      %1415 = vmatpush1.xpose.msra.mxu0 0.0
      %1416 = vmatprep.subr.mxu0 0.0
      %1417 = vmatpush1.xpose.msra.mxu0 0.0
      %1418 = vmatprep.subr.mxu0 0.0
      %1419 = vmatpush1.xpose.msra.mxu0 0.0
      %1420 = vmatprep.subr.mxu0 0.0
      %1421 = vmatpush1.xpose.msra.mxu0 0.0
      %1422 = vmatprep.subr.mxu0 0.0
      %1423 = vmatpush1.xpose.msra.mxu0 0.0
      %1424 = vmatprep.subr.mxu0 0.0
      %1425 = vmatpush1.xpose.msra.mxu0 %v1394
      %1426 = vmatprep.subr.mxu0 0.0
      %1427 = vmatpush1.xpose.msra.mxu0 %v1391
      %1428 = vmatprep.subr.mxu0 0.0
      %1429 = vmatpush2.xpose.msra.mxu0 0.0
      %1430 = vmatprep.subr.mxu0 0.0
      %1431 = vmatpush2.xpose.msra.mxu0 0.0
      %1432 = vmatprep.subr.mxu0 0.0
      %1433 = vmatpush2.xpose.msra.mxu0 0.0
      %1434 = vmatprep.subr.mxu0 0.0
      %1435 = vmatpush2.xpose.msra.mxu0 0.0
      %1436 = vmatprep.subr.mxu0 0.0
      %1437 = vmatpush2.xpose.msra.mxu0 0.0
      %1438 = vmatprep.subr.mxu0 0.0
      %1439 = vmatpush2.xpose.msra.mxu0 0.0
      %1440 = vmatprep.subr.mxu0 0.0
      %1441 = vmatpush2.xpose.msra.mxu0 0.0
      %1442 = vmatprep.subr.mxu0 0.0
      %1443 = vmatpush2.xpose.msra.mxu0 0.0
      %1444 = vmatprep.subr.mxu0 0.0
      %1445 = vmatpush2.xpose.msra.mxu0 0.0
      %1446 = vmatprep.subr.mxu0 0.0
      %1447 = vmatpush2.xpose.msra.mxu0 0.0
      %1448 = vmatprep.subr.mxu0 0.0
      %1449 = vmatpush2.xpose.msra.mxu0 0.0
      %1450 = vmatprep.subr.mxu0 0.0
      %1451 = vmatpush2.xpose.msra.mxu0 0.0
      %1452 = vmatprep.subr.mxu0 0.0
      %1453 = vmatpush2.xpose.msra.mxu0 0.0
      %1454 = vmatprep.subr.mxu0 0.0
      %1455 = vmatpush2.xpose.msra.mxu0 0.0
      %1456 = vmatprep.subr.mxu0 0.0
      %1457 = vmatpush2.xpose.msra.mxu0 0.0
      %1458 = vmatprep.subr.mxu0 0.0
      %1459 = vmatpush2.xpose.msra.mxu0 0.0
      %1460 = vmatprep.mubr.f32.mxu0 0.0
      %1461 = vmatmul.mubr.f32.gmra.mxu0 %v1385
      %v1462 = vpop.f32.mrf.mxu0
      %v1463 = vadd.f32 0.0, %v1462
      %v1464 = vpop.f32.mrf.mxu0
      %1465 = vmatprep.mubr.f32.mxu0 0.0
      %1466 = vmatmul.mubr.f32.gmra.mxu0 %v1388
      %v1467 = vpop.f32.mrf.mxu0
      %v1468 = vadd.f32 0.0, %v1467
      %v1469 = vpop.f32.mrf.mxu0
      %1470 = vdwg.mxu0
      %v1472 = vsel %vm339, %v269, 0
      %v1475 = vsel %vm339, %v270, 0
      %v1478 = vsel %vm339, %v301, 0
      %v1481 = vsel %vm339, %v302, 0
      %1483 = vmatprep.subr.mxu0 0.0
      %1484 = vmatpush1.xpose.msra.mxu0 0.0
      %1485 = vmatprep.subr.mxu0 0.0
      %1486 = vmatpush1.xpose.msra.mxu0 0.0
      %1487 = vmatprep.subr.mxu0 0.0
      %1488 = vmatpush1.xpose.msra.mxu0 0.0
      %1489 = vmatprep.subr.mxu0 0.0
      %1490 = vmatpush1.xpose.msra.mxu0 0.0
      %1491 = vmatprep.subr.mxu0 0.0
      %1492 = vmatpush1.xpose.msra.mxu0 0.0
      %1493 = vmatprep.subr.mxu0 0.0
      %1494 = vmatpush1.xpose.msra.mxu0 0.0
      %1495 = vmatprep.subr.mxu0 0.0
      %1496 = vmatpush1.xpose.msra.mxu0 0.0
      %1497 = vmatprep.subr.mxu0 0.0
      %1498 = vmatpush1.xpose.msra.mxu0 0.0
      %1499 = vmatprep.subr.mxu0 0.0
      %1500 = vmatpush1.xpose.msra.mxu0 0.0
      %1501 = vmatprep.subr.mxu0 0.0
      %1502 = vmatpush1.xpose.msra.mxu0 0.0
      %1503 = vmatprep.subr.mxu0 0.0
      %1504 = vmatpush1.xpose.msra.mxu0 0.0
      %1505 = vmatprep.subr.mxu0 0.0
      %1506 = vmatpush1.xpose.msra.mxu0 0.0
      %1507 = vmatprep.subr.mxu0 0.0
      %1508 = vmatpush1.xpose.msra.mxu0 0.0
      %1509 = vmatprep.subr.mxu0 0.0
      %1510 = vmatpush1.xpose.msra.mxu0 0.0
      %1511 = vmatprep.subr.mxu0 0.0
      %1512 = vmatpush1.xpose.msra.mxu0 %v1481
      %1513 = vmatprep.subr.mxu0 0.0
      %1514 = vmatpush1.xpose.msra.mxu0 %v1478
      %1515 = vmatprep.subr.mxu0 0.0
      %1516 = vmatpush2.xpose.msra.mxu0 0.0
      %1517 = vmatprep.subr.mxu0 0.0
      %1518 = vmatpush2.xpose.msra.mxu0 0.0
      %1519 = vmatprep.subr.mxu0 0.0
      %1520 = vmatpush2.xpose.msra.mxu0 0.0
      %1521 = vmatprep.subr.mxu0 0.0
      %1522 = vmatpush2.xpose.msra.mxu0 0.0
      %1523 = vmatprep.subr.mxu0 0.0
      %1524 = vmatpush2.xpose.msra.mxu0 0.0
      %1525 = vmatprep.subr.mxu0 0.0
      %1526 = vmatpush2.xpose.msra.mxu0 0.0
      %1527 = vmatprep.subr.mxu0 0.0
      %1528 = vmatpush2.xpose.msra.mxu0 0.0
      %1529 = vmatprep.subr.mxu0 0.0
      %1530 = vmatpush2.xpose.msra.mxu0 0.0
      %1531 = vmatprep.subr.mxu0 0.0
      %1532 = vmatpush2.xpose.msra.mxu0 0.0
      %1533 = vmatprep.subr.mxu0 0.0
      %1534 = vmatpush2.xpose.msra.mxu0 0.0
      %1535 = vmatprep.subr.mxu0 0.0
      %1536 = vmatpush2.xpose.msra.mxu0 0.0
      %1537 = vmatprep.subr.mxu0 0.0
      %1538 = vmatpush2.xpose.msra.mxu0 0.0
      %1539 = vmatprep.subr.mxu0 0.0
      %1540 = vmatpush2.xpose.msra.mxu0 0.0
      %1541 = vmatprep.subr.mxu0 0.0
      %1542 = vmatpush2.xpose.msra.mxu0 0.0
      %1543 = vmatprep.subr.mxu0 0.0
      %1544 = vmatpush2.xpose.msra.mxu0 0.0
      %1545 = vmatprep.subr.mxu0 0.0
      %1546 = vmatpush2.xpose.msra.mxu0 0.0
      %1547 = vmatprep.mubr.f32.mxu0 0.0
      %1548 = vmatmul.mubr.f32.gmra.mxu0 %v1472
      %v1549 = vpop.f32.mrf.mxu0
      %v1550 = vadd.f32 0.0, %v1549
      %v1551 = vpop.f32.mrf.mxu0
      %1552 = vmatprep.mubr.f32.mxu0 0.0
      %1553 = vmatmul.mubr.f32.gmra.mxu0 %v1475
      %v1554 = vpop.f32.mrf.mxu0
      %v1555 = vadd.f32 0.0, %v1554
      %v1556 = vpop.f32.mrf.mxu0
      %1557 = vdwg.mxu0
      %v1559 = vsel %vm339, %v271, 0
      %v1562 = vsel %vm339, %v272, 0
      %v1565 = vsel %vm339, %v303, 0
      %v1568 = vsel %vm339, %v304, 0
      %1570 = vmatprep.subr.mxu0 0.0
      %1571 = vmatpush1.xpose.msra.mxu0 0.0
      %1572 = vmatprep.subr.mxu0 0.0
      %1573 = vmatpush1.xpose.msra.mxu0 0.0
      %1574 = vmatprep.subr.mxu0 0.0
      %1575 = vmatpush1.xpose.msra.mxu0 0.0
      %1576 = vmatprep.subr.mxu0 0.0
      %1577 = vmatpush1.xpose.msra.mxu0 0.0
      %1578 = vmatprep.subr.mxu0 0.0
      %1579 = vmatpush1.xpose.msra.mxu0 0.0
      %1580 = vmatprep.subr.mxu0 0.0
      %1581 = vmatpush1.xpose.msra.mxu0 0.0
      %1582 = vmatprep.subr.mxu0 0.0
      %1583 = vmatpush1.xpose.msra.mxu0 0.0
      %1584 = vmatprep.subr.mxu0 0.0
      %1585 = vmatpush1.xpose.msra.mxu0 0.0
      %1586 = vmatprep.subr.mxu0 0.0
      %1587 = vmatpush1.xpose.msra.mxu0 0.0
      %1588 = vmatprep.subr.mxu0 0.0
      %1589 = vmatpush1.xpose.msra.mxu0 0.0
      %1590 = vmatprep.subr.mxu0 0.0
      %1591 = vmatpush1.xpose.msra.mxu0 0.0
      %1592 = vmatprep.subr.mxu0 0.0
      %1593 = vmatpush1.xpose.msra.mxu0 0.0
      %1594 = vmatprep.subr.mxu0 0.0
      %1595 = vmatpush1.xpose.msra.mxu0 0.0
      %1596 = vmatprep.subr.mxu0 0.0
      %1597 = vmatpush1.xpose.msra.mxu0 0.0
      %1598 = vmatprep.subr.mxu0 0.0
      %1599 = vmatpush1.xpose.msra.mxu0 %v1568
      %1600 = vmatprep.subr.mxu0 0.0
      %1601 = vmatpush1.xpose.msra.mxu0 %v1565
      %1602 = vmatprep.subr.mxu0 0.0
      %1603 = vmatpush2.xpose.msra.mxu0 0.0
      %1604 = vmatprep.subr.mxu0 0.0
      %1605 = vmatpush2.xpose.msra.mxu0 0.0
      %1606 = vmatprep.subr.mxu0 0.0
      %1607 = vmatpush2.xpose.msra.mxu0 0.0
      %1608 = vmatprep.subr.mxu0 0.0
      %1609 = vmatpush2.xpose.msra.mxu0 0.0
      %1610 = vmatprep.subr.mxu0 0.0
      %1611 = vmatpush2.xpose.msra.mxu0 0.0
      %1612 = vmatprep.subr.mxu0 0.0
      %1613 = vmatpush2.xpose.msra.mxu0 0.0
      %1614 = vmatprep.subr.mxu0 0.0
      %1615 = vmatpush2.xpose.msra.mxu0 0.0
      %1616 = vmatprep.subr.mxu0 0.0
      %1617 = vmatpush2.xpose.msra.mxu0 0.0
      %1618 = vmatprep.subr.mxu0 0.0
      %1619 = vmatpush2.xpose.msra.mxu0 0.0
      %1620 = vmatprep.subr.mxu0 0.0
      %1621 = vmatpush2.xpose.msra.mxu0 0.0
      %1622 = vmatprep.subr.mxu0 0.0
      %1623 = vmatpush2.xpose.msra.mxu0 0.0
      %1624 = vmatprep.subr.mxu0 0.0
      %1625 = vmatpush2.xpose.msra.mxu0 0.0
      %1626 = vmatprep.subr.mxu0 0.0
      %1627 = vmatpush2.xpose.msra.mxu0 0.0
      %1628 = vmatprep.subr.mxu0 0.0
      %1629 = vmatpush2.xpose.msra.mxu0 0.0
      %1630 = vmatprep.subr.mxu0 0.0
      %1631 = vmatpush2.xpose.msra.mxu0 0.0
      %1632 = vmatprep.subr.mxu0 0.0
      %1633 = vmatpush2.xpose.msra.mxu0 0.0
      %1634 = vmatprep.mubr.f32.mxu0 0.0
      %1635 = vmatmul.mubr.f32.gmra.mxu0 %v1559
      %v1636 = vpop.f32.mrf.mxu0
      %v1637 = vadd.f32 0.0, %v1636
      %v1638 = vpop.f32.mrf.mxu0
      %1639 = vmatprep.mubr.f32.mxu0 0.0
      %1640 = vmatmul.mubr.f32.gmra.mxu0 %v1562
      %v1641 = vpop.f32.mrf.mxu0
      %v1642 = vadd.f32 0.0, %v1641
      %v1643 = vpop.f32.mrf.mxu0
      %1644 = vdwg.mxu0
      %v1646 = vsel %vm339, %v273, 0
      %v1649 = vsel %vm339, %v274, 0
      %v1652 = vsel %vm339, %v305, 0
      %v1655 = vsel %vm339, %v306, 0
      %1657 = vmatprep.subr.mxu0 0.0
      %1658 = vmatpush1.xpose.msra.mxu0 0.0
      %1659 = vmatprep.subr.mxu0 0.0
      %1660 = vmatpush1.xpose.msra.mxu0 0.0
      %1661 = vmatprep.subr.mxu0 0.0
      %1662 = vmatpush1.xpose.msra.mxu0 0.0
      %1663 = vmatprep.subr.mxu0 0.0
      %1664 = vmatpush1.xpose.msra.mxu0 0.0
      %1665 = vmatprep.subr.mxu0 0.0
      %1666 = vmatpush1.xpose.msra.mxu0 0.0
      %1667 = vmatprep.subr.mxu0 0.0
      %1668 = vmatpush1.xpose.msra.mxu0 0.0
      %1669 = vmatprep.subr.mxu0 0.0
      %1670 = vmatpush1.xpose.msra.mxu0 0.0
      %1671 = vmatprep.subr.mxu0 0.0
      %1672 = vmatpush1.xpose.msra.mxu0 0.0
      %1673 = vmatprep.subr.mxu0 0.0
      %1674 = vmatpush1.xpose.msra.mxu0 0.0
      %1675 = vmatprep.subr.mxu0 0.0
      %1676 = vmatpush1.xpose.msra.mxu0 0.0
      %1677 = vmatprep.subr.mxu0 0.0
      %1678 = vmatpush1.xpose.msra.mxu0 0.0
      %1679 = vmatprep.subr.mxu0 0.0
      %1680 = vmatpush1.xpose.msra.mxu0 0.0
      %1681 = vmatprep.subr.mxu0 0.0
      %1682 = vmatpush1.xpose.msra.mxu0 0.0
      %1683 = vmatprep.subr.mxu0 0.0
      %1684 = vmatpush1.xpose.msra.mxu0 0.0
      %1685 = vmatprep.subr.mxu0 0.0
      %1686 = vmatpush1.xpose.msra.mxu0 %v1655
      %1687 = vmatprep.subr.mxu0 0.0
      %1688 = vmatpush1.xpose.msra.mxu0 %v1652
      %1689 = vmatprep.subr.mxu0 0.0
      %1690 = vmatpush2.xpose.msra.mxu0 0.0
      %1691 = vmatprep.subr.mxu0 0.0
      %1692 = vmatpush2.xpose.msra.mxu0 0.0
      %1693 = vmatprep.subr.mxu0 0.0
      %1694 = vmatpush2.xpose.msra.mxu0 0.0
      %1695 = vmatprep.subr.mxu0 0.0
      %1696 = vmatpush2.xpose.msra.mxu0 0.0
      %1697 = vmatprep.subr.mxu0 0.0
      %1698 = vmatpush2.xpose.msra.mxu0 0.0
      %1699 = vmatprep.subr.mxu0 0.0
      %1700 = vmatpush2.xpose.msra.mxu0 0.0
      %1701 = vmatprep.subr.mxu0 0.0
      %1702 = vmatpush2.xpose.msra.mxu0 0.0
      %1703 = vmatprep.subr.mxu0 0.0
      %1704 = vmatpush2.xpose.msra.mxu0 0.0
      %1705 = vmatprep.subr.mxu0 0.0
      %1706 = vmatpush2.xpose.msra.mxu0 0.0
      %1707 = vmatprep.subr.mxu0 0.0
      %1708 = vmatpush2.xpose.msra.mxu0 0.0
      %1709 = vmatprep.subr.mxu0 0.0
      %1710 = vmatpush2.xpose.msra.mxu0 0.0
      %1711 = vmatprep.subr.mxu0 0.0
      %1712 = vmatpush2.xpose.msra.mxu0 0.0
      %1713 = vmatprep.subr.mxu0 0.0
      %1714 = vmatpush2.xpose.msra.mxu0 0.0
      %1715 = vmatprep.subr.mxu0 0.0
      %1716 = vmatpush2.xpose.msra.mxu0 0.0
      %1717 = vmatprep.subr.mxu0 0.0
      %1718 = vmatpush2.xpose.msra.mxu0 0.0
      %1719 = vmatprep.subr.mxu0 0.0
      %1720 = vmatpush2.xpose.msra.mxu0 0.0
      %1721 = vmatprep.mubr.f32.mxu0 0.0
      %1722 = vmatmul.mubr.f32.gmra.mxu0 %v1646
      %v1723 = vpop.f32.mrf.mxu0
      %v1724 = vadd.f32 0.0, %v1723
      %v1725 = vpop.f32.mrf.mxu0
      %1726 = vmatprep.mubr.f32.mxu0 0.0
      %1727 = vmatmul.mubr.f32.gmra.mxu0 %v1649
      %v1728 = vpop.f32.mrf.mxu0
      %v1729 = vadd.f32 0.0, %v1728
      %v1730 = vpop.f32.mrf.mxu0
      %1731 = vdwg.mxu0
      %vm1732 = vcmask 130048
      %v1733 = vsel %vm1732, %v419, -inf
      %1734 = vmax.xlane.f32.xlu0 %v1733
      %v1735 = vpop.xlane.xlu0 %1734
      %v1736 = vsel %vm1732, %v424, -inf
      %1737 = vmax.xlane.f32.xlu0 %v1736
      %v1738 = vpop.xlane.xlu0 %1737
      %v1739 = vsel %vm1732, %v506, -inf
      %1740 = vmax.xlane.f32.xlu0 %v1739
      %v1741 = vpop.xlane.xlu0 %1740
      %v1742 = vsel %vm1732, %v511, -inf
      %1743 = vmax.xlane.f32.xlu0 %v1742
      %v1744 = vpop.xlane.xlu0 %1743
      %v1745 = vsel %vm1732, %v593, -inf
      %1746 = vmax.xlane.f32.xlu0 %v1745
      %v1747 = vpop.xlane.xlu0 %1746
      %v1748 = vsel %vm1732, %v598, -inf
      %1749 = vmax.xlane.f32.xlu0 %v1748
      %v1750 = vpop.xlane.xlu0 %1749
      %v1751 = vsel %vm1732, %v680, -inf
      %1752 = vmax.xlane.f32.xlu0 %v1751
      %v1753 = vpop.xlane.xlu0 %1752
      %v1754 = vsel %vm1732, %v685, -inf
      %1755 = vmax.xlane.f32.xlu0 %v1754
      %v1756 = vpop.xlane.xlu0 %1755
      %v1757 = vsel %vm1732, %v767, -inf
      %1758 = vmax.xlane.f32.xlu0 %v1757
      %v1759 = vpop.xlane.xlu0 %1758
      %v1760 = vsel %vm1732, %v772, -inf
      %1761 = vmax.xlane.f32.xlu0 %v1760
      %v1762 = vpop.xlane.xlu0 %1761
      %v1763 = vsel %vm1732, %v854, -inf
      %1764 = vmax.xlane.f32.xlu0 %v1763
      %v1765 = vpop.xlane.xlu0 %1764
      %v1766 = vsel %vm1732, %v859, -inf
      %1767 = vmax.xlane.f32.xlu0 %v1766
      %v1768 = vpop.xlane.xlu0 %1767
      %v1769 = vsel %vm1732, %v941, -inf
      %1770 = vmax.xlane.f32.xlu0 %v1769
      %v1771 = vpop.xlane.xlu0 %1770
      %v1772 = vsel %vm1732, %v946, -inf
      %1773 = vmax.xlane.f32.xlu0 %v1772
      %v1774 = vpop.xlane.xlu0 %1773
      %v1775 = vsel %vm1732, %v1028, -inf
      %1776 = vmax.xlane.f32.xlu0 %v1775
      %v1777 = vpop.xlane.xlu0 %1776
      %v1778 = vsel %vm1732, %v1033, -inf
      %1779 = vmax.xlane.f32.xlu0 %v1778
      %v1780 = vpop.xlane.xlu0 %1779
      %v1781 = vsel %vm1732, %v1115, -inf
      %1782 = vmax.xlane.f32.xlu0 %v1781
      %v1783 = vpop.xlane.xlu0 %1782
      %v1784 = vsel %vm1732, %v1120, -inf
      %1785 = vmax.xlane.f32.xlu0 %v1784
      %v1786 = vpop.xlane.xlu0 %1785
      %v1787 = vsel %vm1732, %v1202, -inf
      %1788 = vmax.xlane.f32.xlu0 %v1787
      %v1789 = vpop.xlane.xlu0 %1788
      %v1790 = vsel %vm1732, %v1207, -inf
      %1791 = vmax.xlane.f32.xlu0 %v1790
      %v1792 = vpop.xlane.xlu0 %1791
      %v1793 = vsel %vm1732, %v1289, -inf
      %1794 = vmax.xlane.f32.xlu0 %v1793
      %v1795 = vpop.xlane.xlu0 %1794
      %v1796 = vsel %vm1732, %v1294, -inf
      %1797 = vmax.xlane.f32.xlu0 %v1796
      %v1798 = vpop.xlane.xlu0 %1797
      %v1799 = vsel %vm1732, %v1376, -inf
      %1800 = vmax.xlane.f32.xlu0 %v1799
      %v1801 = vpop.xlane.xlu0 %1800
      %v1802 = vsel %vm1732, %v1381, -inf
      %1803 = vmax.xlane.f32.xlu0 %v1802
      %v1804 = vpop.xlane.xlu0 %1803
      %v1805 = vsel %vm1732, %v1463, -inf
      %1806 = vmax.xlane.f32.xlu0 %v1805
      %v1807 = vpop.xlane.xlu0 %1806
      %v1808 = vsel %vm1732, %v1468, -inf
      %1809 = vmax.xlane.f32.xlu0 %v1808
      %v1810 = vpop.xlane.xlu0 %1809
      %v1811 = vsel %vm1732, %v1550, -inf
      %1812 = vmax.xlane.f32.xlu0 %v1811
      %v1813 = vpop.xlane.xlu0 %1812
      %v1814 = vsel %vm1732, %v1555, -inf
      %1815 = vmax.xlane.f32.xlu0 %v1814
      %v1816 = vpop.xlane.xlu0 %1815
      %v1817 = vsel %vm1732, %v1637, -inf
      %1818 = vmax.xlane.f32.xlu0 %v1817
      %v1819 = vpop.xlane.xlu0 %1818
      %v1820 = vsel %vm1732, %v1642, -inf
      %1821 = vmax.xlane.f32.xlu0 %v1820
      %v1822 = vpop.xlane.xlu0 %1821
      %v1823 = vsel %vm1732, %v1724, -inf
      %1824 = vmax.xlane.f32.xlu0 %v1823
      %v1825 = vpop.xlane.xlu0 %1824
      %v1826 = vsel %vm1732, %v1729, -inf
      %1827 = vmax.xlane.f32.xlu0 %v1826
      %v1828 = vpop.xlane.xlu0 %1827
      %v1829 = vsub.f32 %v419, %v1735
      %v1830 = vsub.f32 %v424, %v1738
      %v1831 = vsub.f32 %v506, %v1741
      %v1832 = vsub.f32 %v511, %v1744
      %v1833 = vsub.f32 %v593, %v1747
      %v1834 = vsub.f32 %v598, %v1750
      %v1835 = vsub.f32 %v680, %v1753
      %v1836 = vsub.f32 %v685, %v1756
      %v1837 = vsub.f32 %v767, %v1759
      %v1838 = vsub.f32 %v772, %v1762
      %v1839 = vsub.f32 %v854, %v1765
      %v1840 = vsub.f32 %v859, %v1768
      %v1841 = vsub.f32 %v941, %v1771
      %v1842 = vsub.f32 %v946, %v1774
      %v1843 = vsub.f32 %v1028, %v1777
      %v1844 = vsub.f32 %v1033, %v1780
      %v1845 = vsub.f32 %v1115, %v1783
      %v1846 = vsub.f32 %v1120, %v1786
      %v1847 = vsub.f32 %v1202, %v1789
      %v1848 = vsub.f32 %v1207, %v1792
      %v1849 = vsub.f32 %v1289, %v1795
      %v1850 = vsub.f32 %v1294, %v1798
      %v1851 = vsub.f32 %v1376, %v1801
      %v1852 = vsub.f32 %v1381, %v1804
      %v1853 = vsub.f32 %v1463, %v1807
      %v1854 = vsub.f32 %v1468, %v1810
      %v1855 = vsub.f32 %v1550, %v1813
      %v1856 = vsub.f32 %v1555, %v1816
      %v1857 = vsub.f32 %v1637, %v1819
      %v1858 = vsub.f32 %v1642, %v1822
      %v1859 = vsub.f32 %v1724, %v1825
      %v1860 = vsub.f32 %v1729, %v1828
      %v1861 = vmul.f32 %v1829, 1.442695
      %v1862 = vpow.pop %v1861
      %v1863 = vmul.f32 %v1830, 1.442695
      %v1864 = vpow.pop %v1863
      %v1865 = vmul.f32 %v1831, 1.442695
      %v1866 = vpow.pop %v1865
      %v1867 = vmul.f32 %v1832, 1.442695
      %v1868 = vpow.pop %v1867
      %v1869 = vmul.f32 %v1833, 1.442695
      %v1870 = vpow.pop %v1869
      %v1871 = vmul.f32 %v1834, 1.442695
      %v1872 = vpow.pop %v1871
      %v1873 = vmul.f32 %v1835, 1.442695
      %v1874 = vpow.pop %v1873
      %v1875 = vmul.f32 %v1836, 1.442695
      %v1876 = vpow.pop %v1875
      %v1877 = vmul.f32 %v1837, 1.442695
      %v1878 = vpow.pop %v1877
      %v1879 = vmul.f32 %v1838, 1.442695
      %v1880 = vpow.pop %v1879
      %v1881 = vmul.f32 %v1839, 1.442695
      %v1882 = vpow.pop %v1881
      %v1883 = vmul.f32 %v1840, 1.442695
      %v1884 = vpow.pop %v1883
      %v1885 = vmul.f32 %v1841, 1.442695
      %v1886 = vpow.pop %v1885
      %v1887 = vmul.f32 %v1842, 1.442695
      %v1888 = vpow.pop %v1887
      %v1889 = vmul.f32 %v1843, 1.442695
      %v1890 = vpow.pop %v1889
      %v1891 = vmul.f32 %v1844, 1.442695
      %v1892 = vpow.pop %v1891
      %v1893 = vmul.f32 %v1845, 1.442695
      %v1894 = vpow.pop %v1893
      %v1895 = vmul.f32 %v1846, 1.442695
      %v1896 = vpow.pop %v1895
      %v1897 = vmul.f32 %v1847, 1.442695
      %v1898 = vpow.pop %v1897
      %v1899 = vmul.f32 %v1848, 1.442695
      %v1900 = vpow.pop %v1899
      %v1901 = vmul.f32 %v1849, 1.442695
      %v1902 = vpow.pop %v1901
      %v1903 = vmul.f32 %v1850, 1.442695
      %v1904 = vpow.pop %v1903
      %v1905 = vmul.f32 %v1851, 1.442695
      %v1906 = vpow.pop %v1905
      %v1907 = vmul.f32 %v1852, 1.442695
      %v1908 = vpow.pop %v1907
      %v1909 = vmul.f32 %v1853, 1.442695
      %v1910 = vpow.pop %v1909
      %v1911 = vmul.f32 %v1854, 1.442695
      %v1912 = vpow.pop %v1911
      %v1913 = vmul.f32 %v1855, 1.442695
      %v1914 = vpow.pop %v1913
      %v1915 = vmul.f32 %v1856, 1.442695
      %v1916 = vpow.pop %v1915
      %v1917 = vmul.f32 %v1857, 1.442695
      %v1918 = vpow.pop %v1917
      %v1919 = vmul.f32 %v1858, 1.442695
      %v1920 = vpow.pop %v1919
      %v1921 = vmul.f32 %v1859, 1.442695
      %v1922 = vpow.pop %v1921
      %v1923 = vmul.f32 %v1860, 1.442695
      %v1924 = vpow.pop %v1923
      %v1925 = vsel %vm1732, %v1862, 0.0
      %1926 = vadd.xlane.f32.xlu0 %v1925
      %v1927 = vpop.xlane.xlu0 %1926
      %v1928 = vsel %vm1732, %v1864, 0.0
      %1929 = vadd.xlane.f32.xlu0 %v1928
      %v1930 = vpop.xlane.xlu0 %1929
      %v1931 = vsel %vm1732, %v1866, 0.0
      %1932 = vadd.xlane.f32.xlu0 %v1931
      %v1933 = vpop.xlane.xlu0 %1932
      %v1934 = vsel %vm1732, %v1868, 0.0
      %1935 = vadd.xlane.f32.xlu0 %v1934
      %v1936 = vpop.xlane.xlu0 %1935
      %v1937 = vsel %vm1732, %v1870, 0.0
      %1938 = vadd.xlane.f32.xlu0 %v1937
      %v1939 = vpop.xlane.xlu0 %1938
      %v1940 = vsel %vm1732, %v1872, 0.0
      %1941 = vadd.xlane.f32.xlu0 %v1940
      %v1942 = vpop.xlane.xlu0 %1941
      %v1943 = vsel %vm1732, %v1874, 0.0
      %1944 = vadd.xlane.f32.xlu0 %v1943
      %v1945 = vpop.xlane.xlu0 %1944
      %v1946 = vsel %vm1732, %v1876, 0.0
      %1947 = vadd.xlane.f32.xlu0 %v1946
      %v1948 = vpop.xlane.xlu0 %1947
      %v1949 = vsel %vm1732, %v1878, 0.0
      %1950 = vadd.xlane.f32.xlu0 %v1949
      %v1951 = vpop.xlane.xlu0 %1950
      %v1952 = vsel %vm1732, %v1880, 0.0
      %1953 = vadd.xlane.f32.xlu0 %v1952
      %v1954 = vpop.xlane.xlu0 %1953
      %v1955 = vsel %vm1732, %v1882, 0.0
      %1956 = vadd.xlane.f32.xlu0 %v1955
      %v1957 = vpop.xlane.xlu0 %1956
      %v1958 = vsel %vm1732, %v1884, 0.0
      %1959 = vadd.xlane.f32.xlu0 %v1958
      %v1960 = vpop.xlane.xlu0 %1959
      %v1961 = vsel %vm1732, %v1886, 0.0
      %1962 = vadd.xlane.f32.xlu0 %v1961
      %v1963 = vpop.xlane.xlu0 %1962
      %v1964 = vsel %vm1732, %v1888, 0.0
      %1965 = vadd.xlane.f32.xlu0 %v1964
      %v1966 = vpop.xlane.xlu0 %1965
      %v1967 = vsel %vm1732, %v1890, 0.0
      %1968 = vadd.xlane.f32.xlu0 %v1967
      %v1969 = vpop.xlane.xlu0 %1968
      %v1970 = vsel %vm1732, %v1892, 0.0
      %1971 = vadd.xlane.f32.xlu0 %v1970
      %v1972 = vpop.xlane.xlu0 %1971
      %v1973 = vsel %vm1732, %v1894, 0.0
      %1974 = vadd.xlane.f32.xlu0 %v1973
      %v1975 = vpop.xlane.xlu0 %1974
      %v1976 = vsel %vm1732, %v1896, 0.0
      %1977 = vadd.xlane.f32.xlu0 %v1976
      %v1978 = vpop.xlane.xlu0 %1977
      %v1979 = vsel %vm1732, %v1898, 0.0
      %1980 = vadd.xlane.f32.xlu0 %v1979
      %v1981 = vpop.xlane.xlu0 %1980
      %v1982 = vsel %vm1732, %v1900, 0.0
      %1983 = vadd.xlane.f32.xlu0 %v1982
      %v1984 = vpop.xlane.xlu0 %1983
      %v1985 = vsel %vm1732, %v1902, 0.0
      %1986 = vadd.xlane.f32.xlu0 %v1985
      %v1987 = vpop.xlane.xlu0 %1986
      %v1988 = vsel %vm1732, %v1904, 0.0
      %1989 = vadd.xlane.f32.xlu0 %v1988
      %v1990 = vpop.xlane.xlu0 %1989
      %v1991 = vsel %vm1732, %v1906, 0.0
      %1992 = vadd.xlane.f32.xlu0 %v1991
      %v1993 = vpop.xlane.xlu0 %1992
      %v1994 = vsel %vm1732, %v1908, 0.0
      %1995 = vadd.xlane.f32.xlu0 %v1994
      %v1996 = vpop.xlane.xlu0 %1995
      %v1997 = vsel %vm1732, %v1910, 0.0
      %1998 = vadd.xlane.f32.xlu0 %v1997
      %v1999 = vpop.xlane.xlu0 %1998
      %v2000 = vsel %vm1732, %v1912, 0.0
      %2001 = vadd.xlane.f32.xlu0 %v2000
      %v2002 = vpop.xlane.xlu0 %2001
      %v2003 = vsel %vm1732, %v1914, 0.0
      %2004 = vadd.xlane.f32.xlu0 %v2003
      %v2005 = vpop.xlane.xlu0 %2004
      %v2006 = vsel %vm1732, %v1916, 0.0
      %2007 = vadd.xlane.f32.xlu0 %v2006
      %v2008 = vpop.xlane.xlu0 %2007
      %v2009 = vsel %vm1732, %v1918, 0.0
      %2010 = vadd.xlane.f32.xlu0 %v2009
      %v2011 = vpop.xlane.xlu0 %2010
      %v2012 = vsel %vm1732, %v1920, 0.0
      %2013 = vadd.xlane.f32.xlu0 %v2012
      %v2014 = vpop.xlane.xlu0 %2013
      %v2015 = vsel %vm1732, %v1922, 0.0
      %2016 = vadd.xlane.f32.xlu0 %v2015
      %v2017 = vpop.xlane.xlu0 %2016
      %v2018 = vsel %vm1732, %v1924, 0.0
      %2019 = vadd.xlane.f32.xlu0 %v2018
      %v2020 = vpop.xlane.xlu0 %2019
      %v2021 = vrcp.pop %v1927
      %v2022 = vrcp.pop %v1930
      %v2023 = vrcp.pop %v1933
      %v2024 = vrcp.pop %v1936
      %v2025 = vrcp.pop %v1939
      %v2026 = vrcp.pop %v1942
      %v2027 = vrcp.pop %v1945
      %v2028 = vrcp.pop %v1948
      %v2029 = vrcp.pop %v1951
      %v2030 = vrcp.pop %v1954
      %v2031 = vrcp.pop %v1957
      %v2032 = vrcp.pop %v1960
      %v2033 = vrcp.pop %v1963
      %v2034 = vrcp.pop %v1966
      %v2035 = vrcp.pop %v1969
      %v2036 = vrcp.pop %v1972
      %v2037 = vrcp.pop %v1975
      %v2038 = vrcp.pop %v1978
      %v2039 = vrcp.pop %v1981
      %v2040 = vrcp.pop %v1984
      %v2041 = vrcp.pop %v1987
      %v2042 = vrcp.pop %v1990
      %v2043 = vrcp.pop %v1993
      %v2044 = vrcp.pop %v1996
      %v2045 = vrcp.pop %v1999
      %v2046 = vrcp.pop %v2002
      %v2047 = vrcp.pop %v2005
      %v2048 = vrcp.pop %v2008
      %v2049 = vrcp.pop %v2011
      %v2050 = vrcp.pop %v2014
      %v2051 = vrcp.pop %v2017
      %v2052 = vrcp.pop %v2020
      %v2053 = vmul.f32 %v1862, %v2021
      %v2054 = vmul.f32 %v1864, %v2022
      %v2055 = vmul.f32 %v1866, %v2023
      %v2056 = vmul.f32 %v1868, %v2024
      %v2057 = vmul.f32 %v1870, %v2025
      %v2058 = vmul.f32 %v1872, %v2026
      %v2059 = vmul.f32 %v1874, %v2027
      %v2060 = vmul.f32 %v1876, %v2028
      %v2061 = vmul.f32 %v1878, %v2029
      %v2062 = vmul.f32 %v1880, %v2030
      %v2063 = vmul.f32 %v1882, %v2031
      %v2064 = vmul.f32 %v1884, %v2032
      %v2065 = vmul.f32 %v1886, %v2033
      %v2066 = vmul.f32 %v1888, %v2034
      %v2067 = vmul.f32 %v1890, %v2035
      %v2068 = vmul.f32 %v1892, %v2036
      %v2069 = vmul.f32 %v1894, %v2037
      %v2070 = vmul.f32 %v1896, %v2038
      %v2071 = vmul.f32 %v1898, %v2039
      %v2072 = vmul.f32 %v1900, %v2040
      %v2073 = vmul.f32 %v1902, %v2041
      %v2074 = vmul.f32 %v1904, %v2042
      %v2075 = vmul.f32 %v1906, %v2043
      %v2076 = vmul.f32 %v1908, %v2044
      %v2077 = vmul.f32 %v1910, %v2045
      %v2078 = vmul.f32 %v1912, %v2046
      %v2079 = vmul.f32 %v1914, %v2047
      %v2080 = vmul.f32 %v1916, %v2048
      %v2081 = vmul.f32 %v1918, %v2049
      %v2082 = vmul.f32 %v1920, %v2050
      %v2083 = vmul.f32 %v1922, %v2051
      %v2084 = vmul.f32 %v1924, %v2052
      %v2086 = vsel %vm1732, %v2053, 0
      %v2089 = vsel %vm1732, %v2054, 0
      %2091 = vmatprep.subr.mxu0 0.0
      %2092 = vmatpush1.msra.mxu0 0.0
      %2093 = vmatprep.subr.mxu0 0.0
      %2094 = vmatpush1.msra.mxu0 0.0
      %2095 = vmatprep.subr.mxu0 0.0
      %2096 = vmatpush1.msra.mxu0 0.0
      %2097 = vmatprep.subr.mxu0 0.0
      %2098 = vmatpush1.msra.mxu0 0.0
      %2099 = vmatprep.subr.mxu0 0.0
      %2100 = vmatpush1.msra.mxu0 0.0
      %2101 = vmatprep.subr.mxu0 0.0
      %2102 = vmatpush1.msra.mxu0 0.0
      %2103 = vmatprep.subr.mxu0 0.0
      %2104 = vmatpush1.msra.mxu0 0.0
      %2105 = vmatprep.subr.mxu0 0.0
      %2106 = vmatpush1.msra.mxu0 0.0
      %2107 = vmatprep.subr.mxu0 0.0
      %2108 = vmatpush1.msra.mxu0 0.0
      %2109 = vmatprep.subr.mxu0 0.0
      %2110 = vmatpush1.msra.mxu0 0.0
      %2111 = vmatprep.subr.mxu0 0.0
      %2112 = vmatpush1.msra.mxu0 0.0
      %2113 = vmatprep.subr.mxu0 0.0
      %2114 = vmatpush1.msra.mxu0 0.0
      %2115 = vmatprep.subr.mxu0 0.0
      %2116 = vmatpush1.msra.mxu0 0.0
      %2117 = vmatprep.subr.mxu0 0.0
      %2118 = vmatpush1.msra.mxu0 0.0
      %2119 = vmatprep.subr.mxu0 0.0
      %2120 = vmatpush1.msra.mxu0 %v308
      %2121 = vmatprep.subr.mxu0 0.0
      %2122 = vmatpush1.msra.mxu0 %v307
      %2123 = vmatprep.subr.mxu0 0.0
      %2124 = vmatpush2.msra.mxu0 0.0
      %2125 = vmatprep.subr.mxu0 0.0
      %2126 = vmatpush2.msra.mxu0 0.0
      %2127 = vmatprep.subr.mxu0 0.0
      %2128 = vmatpush2.msra.mxu0 0.0
      %2129 = vmatprep.subr.mxu0 0.0
      %2130 = vmatpush2.msra.mxu0 0.0
      %2131 = vmatprep.subr.mxu0 0.0
      %2132 = vmatpush2.msra.mxu0 0.0
      %2133 = vmatprep.subr.mxu0 0.0
      %2134 = vmatpush2.msra.mxu0 0.0
      %2135 = vmatprep.subr.mxu0 0.0
      %2136 = vmatpush2.msra.mxu0 0.0
      %2137 = vmatprep.subr.mxu0 0.0
      %2138 = vmatpush2.msra.mxu0 0.0
      %2139 = vmatprep.subr.mxu0 0.0
      %2140 = vmatpush2.msra.mxu0 0.0
      %2141 = vmatprep.subr.mxu0 0.0
      %2142 = vmatpush2.msra.mxu0 0.0
      %2143 = vmatprep.subr.mxu0 0.0
      %2144 = vmatpush2.msra.mxu0 0.0
      %2145 = vmatprep.subr.mxu0 0.0
      %2146 = vmatpush2.msra.mxu0 0.0
      %2147 = vmatprep.subr.mxu0 0.0
      %2148 = vmatpush2.msra.mxu0 0.0
      %2149 = vmatprep.subr.mxu0 0.0
      %2150 = vmatpush2.msra.mxu0 0.0
      %2151 = vmatprep.subr.mxu0 0.0
      %2152 = vmatpush2.msra.mxu0 0.0
      %2153 = vmatprep.subr.mxu0 0.0
      %2154 = vmatpush2.msra.mxu0 0.0
      %2155 = vmatprep.mubr.f32.mxu0 0.0
      %2156 = vmatmul.mubr.f32.gmra.mxu0 %v2086
      %v2157 = vpop.f32.mrf.mxu0
      %v2158 = vadd.f32 0.0, %v2157
      %v2159 = vpop.f32.mrf.mxu0
      %2160 = vmatprep.mubr.f32.mxu0 0.0
      %2161 = vmatmul.mubr.f32.gmra.mxu0 %v2089
      %v2162 = vpop.f32.mrf.mxu0
      %v2163 = vadd.f32 0.0, %v2162
      %v2164 = vpop.f32.mrf.mxu0
      %2165 = vdwg.mxu0
      %v2167 = vsel %vm1732, %v2055, 0
      %v2170 = vsel %vm1732, %v2056, 0
      %2172 = vmatprep.subr.mxu0 0.0
      %2173 = vmatpush1.msra.mxu0 0.0
      %2174 = vmatprep.subr.mxu0 0.0
      %2175 = vmatpush1.msra.mxu0 0.0
      %2176 = vmatprep.subr.mxu0 0.0
      %2177 = vmatpush1.msra.mxu0 0.0
      %2178 = vmatprep.subr.mxu0 0.0
      %2179 = vmatpush1.msra.mxu0 0.0
      %2180 = vmatprep.subr.mxu0 0.0
      %2181 = vmatpush1.msra.mxu0 0.0
      %2182 = vmatprep.subr.mxu0 0.0
      %2183 = vmatpush1.msra.mxu0 0.0
      %2184 = vmatprep.subr.mxu0 0.0
      %2185 = vmatpush1.msra.mxu0 0.0
      %2186 = vmatprep.subr.mxu0 0.0
      %2187 = vmatpush1.msra.mxu0 0.0
      %2188 = vmatprep.subr.mxu0 0.0
      %2189 = vmatpush1.msra.mxu0 0.0
      %2190 = vmatprep.subr.mxu0 0.0
      %2191 = vmatpush1.msra.mxu0 0.0
      %2192 = vmatprep.subr.mxu0 0.0
      %2193 = vmatpush1.msra.mxu0 0.0
      %2194 = vmatprep.subr.mxu0 0.0
      %2195 = vmatpush1.msra.mxu0 0.0
      %2196 = vmatprep.subr.mxu0 0.0
      %2197 = vmatpush1.msra.mxu0 0.0
      %2198 = vmatprep.subr.mxu0 0.0
      %2199 = vmatpush1.msra.mxu0 0.0
      %2200 = vmatprep.subr.mxu0 0.0
      %2201 = vmatpush1.msra.mxu0 %v310
      %2202 = vmatprep.subr.mxu0 0.0
      %2203 = vmatpush1.msra.mxu0 %v309
      %2204 = vmatprep.subr.mxu0 0.0
      %2205 = vmatpush2.msra.mxu0 0.0
      %2206 = vmatprep.subr.mxu0 0.0
      %2207 = vmatpush2.msra.mxu0 0.0
      %2208 = vmatprep.subr.mxu0 0.0
      %2209 = vmatpush2.msra.mxu0 0.0
      %2210 = vmatprep.subr.mxu0 0.0
      %2211 = vmatpush2.msra.mxu0 0.0
      %2212 = vmatprep.subr.mxu0 0.0
      %2213 = vmatpush2.msra.mxu0 0.0
      %2214 = vmatprep.subr.mxu0 0.0
      %2215 = vmatpush2.msra.mxu0 0.0
      %2216 = vmatprep.subr.mxu0 0.0
      %2217 = vmatpush2.msra.mxu0 0.0
      %2218 = vmatprep.subr.mxu0 0.0
      %2219 = vmatpush2.msra.mxu0 0.0
      %2220 = vmatprep.subr.mxu0 0.0
      %2221 = vmatpush2.msra.mxu0 0.0
      %2222 = vmatprep.subr.mxu0 0.0
      %2223 = vmatpush2.msra.mxu0 0.0
      %2224 = vmatprep.subr.mxu0 0.0
      %2225 = vmatpush2.msra.mxu0 0.0
      %2226 = vmatprep.subr.mxu0 0.0
      %2227 = vmatpush2.msra.mxu0 0.0
      %2228 = vmatprep.subr.mxu0 0.0
      %2229 = vmatpush2.msra.mxu0 0.0
      %2230 = vmatprep.subr.mxu0 0.0
      %2231 = vmatpush2.msra.mxu0 0.0
      %2232 = vmatprep.subr.mxu0 0.0
      %2233 = vmatpush2.msra.mxu0 0.0
      %2234 = vmatprep.subr.mxu0 0.0
      %2235 = vmatpush2.msra.mxu0 0.0
      %2236 = vmatprep.mubr.f32.mxu0 0.0
      %2237 = vmatmul.mubr.f32.gmra.mxu0 %v2167
      %v2238 = vpop.f32.mrf.mxu0
      %v2239 = vadd.f32 0.0, %v2238
      %v2240 = vpop.f32.mrf.mxu0
      %2241 = vmatprep.mubr.f32.mxu0 0.0
      %2242 = vmatmul.mubr.f32.gmra.mxu0 %v2170
      %v2243 = vpop.f32.mrf.mxu0
      %v2244 = vadd.f32 0.0, %v2243
      %v2245 = vpop.f32.mrf.mxu0
      %2246 = vdwg.mxu0
      %v2248 = vsel %vm1732, %v2057, 0
      %v2251 = vsel %vm1732, %v2058, 0
      %2253 = vmatprep.subr.mxu0 0.0
      %2254 = vmatpush1.msra.mxu0 0.0
      %2255 = vmatprep.subr.mxu0 0.0
      %2256 = vmatpush1.msra.mxu0 0.0
      %2257 = vmatprep.subr.mxu0 0.0
      %2258 = vmatpush1.msra.mxu0 0.0
      %2259 = vmatprep.subr.mxu0 0.0
      %2260 = vmatpush1.msra.mxu0 0.0
      %2261 = vmatprep.subr.mxu0 0.0
      %2262 = vmatpush1.msra.mxu0 0.0
      %2263 = vmatprep.subr.mxu0 0.0
      %2264 = vmatpush1.msra.mxu0 0.0
      %2265 = vmatprep.subr.mxu0 0.0
      %2266 = vmatpush1.msra.mxu0 0.0
      %2267 = vmatprep.subr.mxu0 0.0
      %2268 = vmatpush1.msra.mxu0 0.0
      %2269 = vmatprep.subr.mxu0 0.0
      %2270 = vmatpush1.msra.mxu0 0.0
      %2271 = vmatprep.subr.mxu0 0.0
      %2272 = vmatpush1.msra.mxu0 0.0
      %2273 = vmatprep.subr.mxu0 0.0
      %2274 = vmatpush1.msra.mxu0 0.0
      %2275 = vmatprep.subr.mxu0 0.0
      %2276 = vmatpush1.msra.mxu0 0.0
      %2277 = vmatprep.subr.mxu0 0.0
      %2278 = vmatpush1.msra.mxu0 0.0
      %2279 = vmatprep.subr.mxu0 0.0
      %2280 = vmatpush1.msra.mxu0 0.0
      %2281 = vmatprep.subr.mxu0 0.0
      %2282 = vmatpush1.msra.mxu0 %v312
      %2283 = vmatprep.subr.mxu0 0.0
      %2284 = vmatpush1.msra.mxu0 %v311
      %2285 = vmatprep.subr.mxu0 0.0
      %2286 = vmatpush2.msra.mxu0 0.0
      %2287 = vmatprep.subr.mxu0 0.0
      %2288 = vmatpush2.msra.mxu0 0.0
      %2289 = vmatprep.subr.mxu0 0.0
      %2290 = vmatpush2.msra.mxu0 0.0
      %2291 = vmatprep.subr.mxu0 0.0
      %2292 = vmatpush2.msra.mxu0 0.0
      %2293 = vmatprep.subr.mxu0 0.0
      %2294 = vmatpush2.msra.mxu0 0.0
      %2295 = vmatprep.subr.mxu0 0.0
      %2296 = vmatpush2.msra.mxu0 0.0
      %2297 = vmatprep.subr.mxu0 0.0
      %2298 = vmatpush2.msra.mxu0 0.0
      %2299 = vmatprep.subr.mxu0 0.0
      %2300 = vmatpush2.msra.mxu0 0.0
      %2301 = vmatprep.subr.mxu0 0.0
      %2302 = vmatpush2.msra.mxu0 0.0
      %2303 = vmatprep.subr.mxu0 0.0
      %2304 = vmatpush2.msra.mxu0 0.0
      %2305 = vmatprep.subr.mxu0 0.0
      %2306 = vmatpush2.msra.mxu0 0.0
      %2307 = vmatprep.subr.mxu0 0.0
      %2308 = vmatpush2.msra.mxu0 0.0
      %2309 = vmatprep.subr.mxu0 0.0
      %2310 = vmatpush2.msra.mxu0 0.0
      %2311 = vmatprep.subr.mxu0 0.0
      %2312 = vmatpush2.msra.mxu0 0.0
      %2313 = vmatprep.subr.mxu0 0.0
      %2314 = vmatpush2.msra.mxu0 0.0
      %2315 = vmatprep.subr.mxu0 0.0
      %2316 = vmatpush2.msra.mxu0 0.0
      %2317 = vmatprep.mubr.f32.mxu0 0.0
      %2318 = vmatmul.mubr.f32.gmra.mxu0 %v2248
      %v2319 = vpop.f32.mrf.mxu0
      %v2320 = vadd.f32 0.0, %v2319
      %v2321 = vpop.f32.mrf.mxu0
      %2322 = vmatprep.mubr.f32.mxu0 0.0
      %2323 = vmatmul.mubr.f32.gmra.mxu0 %v2251
      %v2324 = vpop.f32.mrf.mxu0
      %v2325 = vadd.f32 0.0, %v2324
      %v2326 = vpop.f32.mrf.mxu0
      %2327 = vdwg.mxu0
      %v2329 = vsel %vm1732, %v2059, 0
      %v2332 = vsel %vm1732, %v2060, 0
      %2334 = vmatprep.subr.mxu0 0.0
      %2335 = vmatpush1.msra.mxu0 0.0
      %2336 = vmatprep.subr.mxu0 0.0
      %2337 = vmatpush1.msra.mxu0 0.0
      %2338 = vmatprep.subr.mxu0 0.0
      %2339 = vmatpush1.msra.mxu0 0.0
      %2340 = vmatprep.subr.mxu0 0.0
      %2341 = vmatpush1.msra.mxu0 0.0
      %2342 = vmatprep.subr.mxu0 0.0
      %2343 = vmatpush1.msra.mxu0 0.0
      %2344 = vmatprep.subr.mxu0 0.0
      %2345 = vmatpush1.msra.mxu0 0.0
      %2346 = vmatprep.subr.mxu0 0.0
      %2347 = vmatpush1.msra.mxu0 0.0
      %2348 = vmatprep.subr.mxu0 0.0
      %2349 = vmatpush1.msra.mxu0 0.0
      %2350 = vmatprep.subr.mxu0 0.0
      %2351 = vmatpush1.msra.mxu0 0.0
      %2352 = vmatprep.subr.mxu0 0.0
      %2353 = vmatpush1.msra.mxu0 0.0
      %2354 = vmatprep.subr.mxu0 0.0
      %2355 = vmatpush1.msra.mxu0 0.0
      %2356 = vmatprep.subr.mxu0 0.0
      %2357 = vmatpush1.msra.mxu0 0.0
      %2358 = vmatprep.subr.mxu0 0.0
      %2359 = vmatpush1.msra.mxu0 0.0
      %2360 = vmatprep.subr.mxu0 0.0
      %2361 = vmatpush1.msra.mxu0 0.0
      %2362 = vmatprep.subr.mxu0 0.0
      %2363 = vmatpush1.msra.mxu0 %v314
      %2364 = vmatprep.subr.mxu0 0.0
      %2365 = vmatpush1.msra.mxu0 %v313
      %2366 = vmatprep.subr.mxu0 0.0
      %2367 = vmatpush2.msra.mxu0 0.0
      %2368 = vmatprep.subr.mxu0 0.0
      %2369 = vmatpush2.msra.mxu0 0.0
      %2370 = vmatprep.subr.mxu0 0.0
      %2371 = vmatpush2.msra.mxu0 0.0
      %2372 = vmatprep.subr.mxu0 0.0
      %2373 = vmatpush2.msra.mxu0 0.0
      %2374 = vmatprep.subr.mxu0 0.0
      %2375 = vmatpush2.msra.mxu0 0.0
      %2376 = vmatprep.subr.mxu0 0.0
      %2377 = vmatpush2.msra.mxu0 0.0
      %2378 = vmatprep.subr.mxu0 0.0
      %2379 = vmatpush2.msra.mxu0 0.0
      %2380 = vmatprep.subr.mxu0 0.0
      %2381 = vmatpush2.msra.mxu0 0.0
      %2382 = vmatprep.subr.mxu0 0.0
      %2383 = vmatpush2.msra.mxu0 0.0
      %2384 = vmatprep.subr.mxu0 0.0
      %2385 = vmatpush2.msra.mxu0 0.0
      %2386 = vmatprep.subr.mxu0 0.0
      %2387 = vmatpush2.msra.mxu0 0.0
      %2388 = vmatprep.subr.mxu0 0.0
      %2389 = vmatpush2.msra.mxu0 0.0
      %2390 = vmatprep.subr.mxu0 0.0
      %2391 = vmatpush2.msra.mxu0 0.0
      %2392 = vmatprep.subr.mxu0 0.0
      %2393 = vmatpush2.msra.mxu0 0.0
      %2394 = vmatprep.subr.mxu0 0.0
      %2395 = vmatpush2.msra.mxu0 0.0
      %2396 = vmatprep.subr.mxu0 0.0
      %2397 = vmatpush2.msra.mxu0 0.0
      %2398 = vmatprep.mubr.f32.mxu0 0.0
      %2399 = vmatmul.mubr.f32.gmra.mxu0 %v2329
      %v2400 = vpop.f32.mrf.mxu0
      %v2401 = vadd.f32 0.0, %v2400
      %v2402 = vpop.f32.mrf.mxu0
      %2403 = vmatprep.mubr.f32.mxu0 0.0
      %2404 = vmatmul.mubr.f32.gmra.mxu0 %v2332
      %v2405 = vpop.f32.mrf.mxu0
      %v2406 = vadd.f32 0.0, %v2405
      %v2407 = vpop.f32.mrf.mxu0
      %2408 = vdwg.mxu0
      %v2410 = vsel %vm1732, %v2061, 0
      %v2413 = vsel %vm1732, %v2062, 0
      %2415 = vmatprep.subr.mxu0 0.0
      %2416 = vmatpush1.msra.mxu0 0.0
      %2417 = vmatprep.subr.mxu0 0.0
      %2418 = vmatpush1.msra.mxu0 0.0
      %2419 = vmatprep.subr.mxu0 0.0
      %2420 = vmatpush1.msra.mxu0 0.0
      %2421 = vmatprep.subr.mxu0 0.0
      %2422 = vmatpush1.msra.mxu0 0.0
      %2423 = vmatprep.subr.mxu0 0.0
      %2424 = vmatpush1.msra.mxu0 0.0
      %2425 = vmatprep.subr.mxu0 0.0
      %2426 = vmatpush1.msra.mxu0 0.0
      %2427 = vmatprep.subr.mxu0 0.0
      %2428 = vmatpush1.msra.mxu0 0.0
      %2429 = vmatprep.subr.mxu0 0.0
      %2430 = vmatpush1.msra.mxu0 0.0
      %2431 = vmatprep.subr.mxu0 0.0
      %2432 = vmatpush1.msra.mxu0 0.0
      %2433 = vmatprep.subr.mxu0 0.0
      %2434 = vmatpush1.msra.mxu0 0.0
      %2435 = vmatprep.subr.mxu0 0.0
      %2436 = vmatpush1.msra.mxu0 0.0
      %2437 = vmatprep.subr.mxu0 0.0
      %2438 = vmatpush1.msra.mxu0 0.0
      %2439 = vmatprep.subr.mxu0 0.0
      %2440 = vmatpush1.msra.mxu0 0.0
      %2441 = vmatprep.subr.mxu0 0.0
      %2442 = vmatpush1.msra.mxu0 0.0
      %2443 = vmatprep.subr.mxu0 0.0
      %2444 = vmatpush1.msra.mxu0 %v316
      %2445 = vmatprep.subr.mxu0 0.0
      %2446 = vmatpush1.msra.mxu0 %v315
      %2447 = vmatprep.subr.mxu0 0.0
      %2448 = vmatpush2.msra.mxu0 0.0
      %2449 = vmatprep.subr.mxu0 0.0
      %2450 = vmatpush2.msra.mxu0 0.0
      %2451 = vmatprep.subr.mxu0 0.0
      %2452 = vmatpush2.msra.mxu0 0.0
      %2453 = vmatprep.subr.mxu0 0.0
      %2454 = vmatpush2.msra.mxu0 0.0
      %2455 = vmatprep.subr.mxu0 0.0
      %2456 = vmatpush2.msra.mxu0 0.0
      %2457 = vmatprep.subr.mxu0 0.0
      %2458 = vmatpush2.msra.mxu0 0.0
      %2459 = vmatprep.subr.mxu0 0.0
      %2460 = vmatpush2.msra.mxu0 0.0
      %2461 = vmatprep.subr.mxu0 0.0
      %2462 = vmatpush2.msra.mxu0 0.0
      %2463 = vmatprep.subr.mxu0 0.0
      %2464 = vmatpush2.msra.mxu0 0.0
      %2465 = vmatprep.subr.mxu0 0.0
      %2466 = vmatpush2.msra.mxu0 0.0
      %2467 = vmatprep.subr.mxu0 0.0
      %2468 = vmatpush2.msra.mxu0 0.0
      %2469 = vmatprep.subr.mxu0 0.0
      %2470 = vmatpush2.msra.mxu0 0.0
      %2471 = vmatprep.subr.mxu0 0.0
      %2472 = vmatpush2.msra.mxu0 0.0
      %2473 = vmatprep.subr.mxu0 0.0
      %2474 = vmatpush2.msra.mxu0 0.0
      %2475 = vmatprep.subr.mxu0 0.0
      %2476 = vmatpush2.msra.mxu0 0.0
      %2477 = vmatprep.subr.mxu0 0.0
      %2478 = vmatpush2.msra.mxu0 0.0
      %2479 = vmatprep.mubr.f32.mxu0 0.0
      %2480 = vmatmul.mubr.f32.gmra.mxu0 %v2410
      %v2481 = vpop.f32.mrf.mxu0
      %v2482 = vadd.f32 0.0, %v2481
      %v2483 = vpop.f32.mrf.mxu0
      %2484 = vmatprep.mubr.f32.mxu0 0.0
      %2485 = vmatmul.mubr.f32.gmra.mxu0 %v2413
      %v2486 = vpop.f32.mrf.mxu0
      %v2487 = vadd.f32 0.0, %v2486
      %v2488 = vpop.f32.mrf.mxu0
      %2489 = vdwg.mxu0
      %v2491 = vsel %vm1732, %v2063, 0
      %v2494 = vsel %vm1732, %v2064, 0
      %2496 = vmatprep.subr.mxu0 0.0
      %2497 = vmatpush1.msra.mxu0 0.0
      %2498 = vmatprep.subr.mxu0 0.0
      %2499 = vmatpush1.msra.mxu0 0.0
      %2500 = vmatprep.subr.mxu0 0.0
      %2501 = vmatpush1.msra.mxu0 0.0
      %2502 = vmatprep.subr.mxu0 0.0
      %2503 = vmatpush1.msra.mxu0 0.0
      %2504 = vmatprep.subr.mxu0 0.0
      %2505 = vmatpush1.msra.mxu0 0.0
      %2506 = vmatprep.subr.mxu0 0.0
      %2507 = vmatpush1.msra.mxu0 0.0
      %2508 = vmatprep.subr.mxu0 0.0
      %2509 = vmatpush1.msra.mxu0 0.0
      %2510 = vmatprep.subr.mxu0 0.0
      %2511 = vmatpush1.msra.mxu0 0.0
      %2512 = vmatprep.subr.mxu0 0.0
      %2513 = vmatpush1.msra.mxu0 0.0
      %2514 = vmatprep.subr.mxu0 0.0
      %2515 = vmatpush1.msra.mxu0 0.0
      %2516 = vmatprep.subr.mxu0 0.0
      %2517 = vmatpush1.msra.mxu0 0.0
      %2518 = vmatprep.subr.mxu0 0.0
      %2519 = vmatpush1.msra.mxu0 0.0
      %2520 = vmatprep.subr.mxu0 0.0
      %2521 = vmatpush1.msra.mxu0 0.0
      %2522 = vmatprep.subr.mxu0 0.0
      %2523 = vmatpush1.msra.mxu0 0.0
      %2524 = vmatprep.subr.mxu0 0.0
      %2525 = vmatpush1.msra.mxu0 %v318
      %2526 = vmatprep.subr.mxu0 0.0
      %2527 = vmatpush1.msra.mxu0 %v317
      %2528 = vmatprep.subr.mxu0 0.0
      %2529 = vmatpush2.msra.mxu0 0.0
      %2530 = vmatprep.subr.mxu0 0.0
      %2531 = vmatpush2.msra.mxu0 0.0
      %2532 = vmatprep.subr.mxu0 0.0
      %2533 = vmatpush2.msra.mxu0 0.0
      %2534 = vmatprep.subr.mxu0 0.0
      %2535 = vmatpush2.msra.mxu0 0.0
      %2536 = vmatprep.subr.mxu0 0.0
      %2537 = vmatpush2.msra.mxu0 0.0
      %2538 = vmatprep.subr.mxu0 0.0
      %2539 = vmatpush2.msra.mxu0 0.0
      %2540 = vmatprep.subr.mxu0 0.0
      %2541 = vmatpush2.msra.mxu0 0.0
      %2542 = vmatprep.subr.mxu0 0.0
      %2543 = vmatpush2.msra.mxu0 0.0
      %2544 = vmatprep.subr.mxu0 0.0
      %2545 = vmatpush2.msra.mxu0 0.0
      %2546 = vmatprep.subr.mxu0 0.0
      %2547 = vmatpush2.msra.mxu0 0.0
      %2548 = vmatprep.subr.mxu0 0.0
      %2549 = vmatpush2.msra.mxu0 0.0
      %2550 = vmatprep.subr.mxu0 0.0
      %2551 = vmatpush2.msra.mxu0 0.0
      %2552 = vmatprep.subr.mxu0 0.0
      %2553 = vmatpush2.msra.mxu0 0.0
      %2554 = vmatprep.subr.mxu0 0.0
      %2555 = vmatpush2.msra.mxu0 0.0
      %2556 = vmatprep.subr.mxu0 0.0
      %2557 = vmatpush2.msra.mxu0 0.0
      %2558 = vmatprep.subr.mxu0 0.0
      %2559 = vmatpush2.msra.mxu0 0.0
      %2560 = vmatprep.mubr.f32.mxu0 0.0
      %2561 = vmatmul.mubr.f32.gmra.mxu0 %v2491
      %v2562 = vpop.f32.mrf.mxu0
      %v2563 = vadd.f32 0.0, %v2562
      %v2564 = vpop.f32.mrf.mxu0
      %2565 = vmatprep.mubr.f32.mxu0 0.0
      %2566 = vmatmul.mubr.f32.gmra.mxu0 %v2494
      %v2567 = vpop.f32.mrf.mxu0
      %v2568 = vadd.f32 0.0, %v2567
      %v2569 = vpop.f32.mrf.mxu0
      %2570 = vdwg.mxu0
      %v2572 = vsel %vm1732, %v2065, 0
      %v2575 = vsel %vm1732, %v2066, 0
      %2577 = vmatprep.subr.mxu0 0.0
      %2578 = vmatpush1.msra.mxu0 0.0
      %2579 = vmatprep.subr.mxu0 0.0
      %2580 = vmatpush1.msra.mxu0 0.0
      %2581 = vmatprep.subr.mxu0 0.0
      %2582 = vmatpush1.msra.mxu0 0.0
      %2583 = vmatprep.subr.mxu0 0.0
      %2584 = vmatpush1.msra.mxu0 0.0
      %2585 = vmatprep.subr.mxu0 0.0
      %2586 = vmatpush1.msra.mxu0 0.0
      %2587 = vmatprep.subr.mxu0 0.0
      %2588 = vmatpush1.msra.mxu0 0.0
      %2589 = vmatprep.subr.mxu0 0.0
      %2590 = vmatpush1.msra.mxu0 0.0
      %2591 = vmatprep.subr.mxu0 0.0
      %2592 = vmatpush1.msra.mxu0 0.0
      %2593 = vmatprep.subr.mxu0 0.0
      %2594 = vmatpush1.msra.mxu0 0.0
      %2595 = vmatprep.subr.mxu0 0.0
      %2596 = vmatpush1.msra.mxu0 0.0
      %2597 = vmatprep.subr.mxu0 0.0
      %2598 = vmatpush1.msra.mxu0 0.0
      %2599 = vmatprep.subr.mxu0 0.0
      %2600 = vmatpush1.msra.mxu0 0.0
      %2601 = vmatprep.subr.mxu0 0.0
      %2602 = vmatpush1.msra.mxu0 0.0
      %2603 = vmatprep.subr.mxu0 0.0
      %2604 = vmatpush1.msra.mxu0 0.0
      %2605 = vmatprep.subr.mxu0 0.0
      %2606 = vmatpush1.msra.mxu0 %v320
      %2607 = vmatprep.subr.mxu0 0.0
      %2608 = vmatpush1.msra.mxu0 %v319
      %2609 = vmatprep.subr.mxu0 0.0
      %2610 = vmatpush2.msra.mxu0 0.0
      %2611 = vmatprep.subr.mxu0 0.0
      %2612 = vmatpush2.msra.mxu0 0.0
      %2613 = vmatprep.subr.mxu0 0.0
      %2614 = vmatpush2.msra.mxu0 0.0
      %2615 = vmatprep.subr.mxu0 0.0
      %2616 = vmatpush2.msra.mxu0 0.0
      %2617 = vmatprep.subr.mxu0 0.0
      %2618 = vmatpush2.msra.mxu0 0.0
      %2619 = vmatprep.subr.mxu0 0.0
      %2620 = vmatpush2.msra.mxu0 0.0
      %2621 = vmatprep.subr.mxu0 0.0
      %2622 = vmatpush2.msra.mxu0 0.0
      %2623 = vmatprep.subr.mxu0 0.0
      %2624 = vmatpush2.msra.mxu0 0.0
      %2625 = vmatprep.subr.mxu0 0.0
      %2626 = vmatpush2.msra.mxu0 0.0
      %2627 = vmatprep.subr.mxu0 0.0
      %2628 = vmatpush2.msra.mxu0 0.0
      %2629 = vmatprep.subr.mxu0 0.0
      %2630 = vmatpush2.msra.mxu0 0.0
      %2631 = vmatprep.subr.mxu0 0.0
      %2632 = vmatpush2.msra.mxu0 0.0
      %2633 = vmatprep.subr.mxu0 0.0
      %2634 = vmatpush2.msra.mxu0 0.0
      %2635 = vmatprep.subr.mxu0 0.0
      %2636 = vmatpush2.msra.mxu0 0.0
      %2637 = vmatprep.subr.mxu0 0.0
      %2638 = vmatpush2.msra.mxu0 0.0
      %2639 = vmatprep.subr.mxu0 0.0
      %2640 = vmatpush2.msra.mxu0 0.0
      %2641 = vmatprep.mubr.f32.mxu0 0.0
      %2642 = vmatmul.mubr.f32.gmra.mxu0 %v2572
      %v2643 = vpop.f32.mrf.mxu0
      %v2644 = vadd.f32 0.0, %v2643
      %v2645 = vpop.f32.mrf.mxu0
      %2646 = vmatprep.mubr.f32.mxu0 0.0
      %2647 = vmatmul.mubr.f32.gmra.mxu0 %v2575
      %v2648 = vpop.f32.mrf.mxu0
      %v2649 = vadd.f32 0.0, %v2648
      %v2650 = vpop.f32.mrf.mxu0
      %2651 = vdwg.mxu0
      %v2653 = vsel %vm1732, %v2067, 0
      %v2656 = vsel %vm1732, %v2068, 0
      %2658 = vmatprep.subr.mxu0 0.0
      %2659 = vmatpush1.msra.mxu0 0.0
      %2660 = vmatprep.subr.mxu0 0.0
      %2661 = vmatpush1.msra.mxu0 0.0
      %2662 = vmatprep.subr.mxu0 0.0
      %2663 = vmatpush1.msra.mxu0 0.0
      %2664 = vmatprep.subr.mxu0 0.0
      %2665 = vmatpush1.msra.mxu0 0.0
      %2666 = vmatprep.subr.mxu0 0.0
      %2667 = vmatpush1.msra.mxu0 0.0
      %2668 = vmatprep.subr.mxu0 0.0
      %2669 = vmatpush1.msra.mxu0 0.0
      %2670 = vmatprep.subr.mxu0 0.0
      %2671 = vmatpush1.msra.mxu0 0.0
      %2672 = vmatprep.subr.mxu0 0.0
      %2673 = vmatpush1.msra.mxu0 0.0
      %2674 = vmatprep.subr.mxu0 0.0
      %2675 = vmatpush1.msra.mxu0 0.0
      %2676 = vmatprep.subr.mxu0 0.0
      %2677 = vmatpush1.msra.mxu0 0.0
      %2678 = vmatprep.subr.mxu0 0.0
      %2679 = vmatpush1.msra.mxu0 0.0
      %2680 = vmatprep.subr.mxu0 0.0
      %2681 = vmatpush1.msra.mxu0 0.0
      %2682 = vmatprep.subr.mxu0 0.0
      %2683 = vmatpush1.msra.mxu0 0.0
      %2684 = vmatprep.subr.mxu0 0.0
      %2685 = vmatpush1.msra.mxu0 0.0
      %2686 = vmatprep.subr.mxu0 0.0
      %2687 = vmatpush1.msra.mxu0 %v322
      %2688 = vmatprep.subr.mxu0 0.0
      %2689 = vmatpush1.msra.mxu0 %v321
      %2690 = vmatprep.subr.mxu0 0.0
      %2691 = vmatpush2.msra.mxu0 0.0
      %2692 = vmatprep.subr.mxu0 0.0
      %2693 = vmatpush2.msra.mxu0 0.0
      %2694 = vmatprep.subr.mxu0 0.0
      %2695 = vmatpush2.msra.mxu0 0.0
      %2696 = vmatprep.subr.mxu0 0.0
      %2697 = vmatpush2.msra.mxu0 0.0
      %2698 = vmatprep.subr.mxu0 0.0
      %2699 = vmatpush2.msra.mxu0 0.0
      %2700 = vmatprep.subr.mxu0 0.0
      %2701 = vmatpush2.msra.mxu0 0.0
      %2702 = vmatprep.subr.mxu0 0.0
      %2703 = vmatpush2.msra.mxu0 0.0
      %2704 = vmatprep.subr.mxu0 0.0
      %2705 = vmatpush2.msra.mxu0 0.0
      %2706 = vmatprep.subr.mxu0 0.0
      %2707 = vmatpush2.msra.mxu0 0.0
      %2708 = vmatprep.subr.mxu0 0.0
      %2709 = vmatpush2.msra.mxu0 0.0
      %2710 = vmatprep.subr.mxu0 0.0
      %2711 = vmatpush2.msra.mxu0 0.0
      %2712 = vmatprep.subr.mxu0 0.0
      %2713 = vmatpush2.msra.mxu0 0.0
      %2714 = vmatprep.subr.mxu0 0.0
      %2715 = vmatpush2.msra.mxu0 0.0
      %2716 = vmatprep.subr.mxu0 0.0
      %2717 = vmatpush2.msra.mxu0 0.0
      %2718 = vmatprep.subr.mxu0 0.0
      %2719 = vmatpush2.msra.mxu0 0.0
      %2720 = vmatprep.subr.mxu0 0.0
      %2721 = vmatpush2.msra.mxu0 0.0
      %2722 = vmatprep.mubr.f32.mxu0 0.0
      %2723 = vmatmul.mubr.f32.gmra.mxu0 %v2653
      %v2724 = vpop.f32.mrf.mxu0
      %v2725 = vadd.f32 0.0, %v2724
      %v2726 = vpop.f32.mrf.mxu0
      %2727 = vmatprep.mubr.f32.mxu0 0.0
      %2728 = vmatmul.mubr.f32.gmra.mxu0 %v2656
      %v2729 = vpop.f32.mrf.mxu0
      %v2730 = vadd.f32 0.0, %v2729
      %v2731 = vpop.f32.mrf.mxu0
      %2732 = vdwg.mxu0
      %v2734 = vsel %vm1732, %v2069, 0
      %v2737 = vsel %vm1732, %v2070, 0
      %2739 = vmatprep.subr.mxu0 0.0
      %2740 = vmatpush1.msra.mxu0 0.0
      %2741 = vmatprep.subr.mxu0 0.0
      %2742 = vmatpush1.msra.mxu0 0.0
      %2743 = vmatprep.subr.mxu0 0.0
      %2744 = vmatpush1.msra.mxu0 0.0
      %2745 = vmatprep.subr.mxu0 0.0
      %2746 = vmatpush1.msra.mxu0 0.0
      %2747 = vmatprep.subr.mxu0 0.0
      %2748 = vmatpush1.msra.mxu0 0.0
      %2749 = vmatprep.subr.mxu0 0.0
      %2750 = vmatpush1.msra.mxu0 0.0
      %2751 = vmatprep.subr.mxu0 0.0
      %2752 = vmatpush1.msra.mxu0 0.0
      %2753 = vmatprep.subr.mxu0 0.0
      %2754 = vmatpush1.msra.mxu0 0.0
      %2755 = vmatprep.subr.mxu0 0.0
      %2756 = vmatpush1.msra.mxu0 0.0
      %2757 = vmatprep.subr.mxu0 0.0
      %2758 = vmatpush1.msra.mxu0 0.0
      %2759 = vmatprep.subr.mxu0 0.0
      %2760 = vmatpush1.msra.mxu0 0.0
      %2761 = vmatprep.subr.mxu0 0.0
      %2762 = vmatpush1.msra.mxu0 0.0
      %2763 = vmatprep.subr.mxu0 0.0
      %2764 = vmatpush1.msra.mxu0 0.0
      %2765 = vmatprep.subr.mxu0 0.0
      %2766 = vmatpush1.msra.mxu0 0.0
      %2767 = vmatprep.subr.mxu0 0.0
      %2768 = vmatpush1.msra.mxu0 %v324
      %2769 = vmatprep.subr.mxu0 0.0
      %2770 = vmatpush1.msra.mxu0 %v323
      %2771 = vmatprep.subr.mxu0 0.0
      %2772 = vmatpush2.msra.mxu0 0.0
      %2773 = vmatprep.subr.mxu0 0.0
      %2774 = vmatpush2.msra.mxu0 0.0
      %2775 = vmatprep.subr.mxu0 0.0
      %2776 = vmatpush2.msra.mxu0 0.0
      %2777 = vmatprep.subr.mxu0 0.0
      %2778 = vmatpush2.msra.mxu0 0.0
      %2779 = vmatprep.subr.mxu0 0.0
      %2780 = vmatpush2.msra.mxu0 0.0
      %2781 = vmatprep.subr.mxu0 0.0
      %2782 = vmatpush2.msra.mxu0 0.0
      %2783 = vmatprep.subr.mxu0 0.0
      %2784 = vmatpush2.msra.mxu0 0.0
      %2785 = vmatprep.subr.mxu0 0.0
      %2786 = vmatpush2.msra.mxu0 0.0
      %2787 = vmatprep.subr.mxu0 0.0
      %2788 = vmatpush2.msra.mxu0 0.0
      %2789 = vmatprep.subr.mxu0 0.0
      %2790 = vmatpush2.msra.mxu0 0.0
      %2791 = vmatprep.subr.mxu0 0.0
      %2792 = vmatpush2.msra.mxu0 0.0
      %2793 = vmatprep.subr.mxu0 0.0
      %2794 = vmatpush2.msra.mxu0 0.0
      %2795 = vmatprep.subr.mxu0 0.0
      %2796 = vmatpush2.msra.mxu0 0.0
      %2797 = vmatprep.subr.mxu0 0.0
      %2798 = vmatpush2.msra.mxu0 0.0
      %2799 = vmatprep.subr.mxu0 0.0
      %2800 = vmatpush2.msra.mxu0 0.0
      %2801 = vmatprep.subr.mxu0 0.0
      %2802 = vmatpush2.msra.mxu0 0.0
      %2803 = vmatprep.mubr.f32.mxu0 0.0
      %2804 = vmatmul.mubr.f32.gmra.mxu0 %v2734
      %v2805 = vpop.f32.mrf.mxu0
      %v2806 = vadd.f32 0.0, %v2805
      %v2807 = vpop.f32.mrf.mxu0
      %2808 = vmatprep.mubr.f32.mxu0 0.0
      %2809 = vmatmul.mubr.f32.gmra.mxu0 %v2737
      %v2810 = vpop.f32.mrf.mxu0
      %v2811 = vadd.f32 0.0, %v2810
      %v2812 = vpop.f32.mrf.mxu0
      %2813 = vdwg.mxu0
      %v2815 = vsel %vm1732, %v2071, 0
      %v2818 = vsel %vm1732, %v2072, 0
      %2820 = vmatprep.subr.mxu0 0.0
      %2821 = vmatpush1.msra.mxu0 0.0
      %2822 = vmatprep.subr.mxu0 0.0
      %2823 = vmatpush1.msra.mxu0 0.0
      %2824 = vmatprep.subr.mxu0 0.0
      %2825 = vmatpush1.msra.mxu0 0.0
      %2826 = vmatprep.subr.mxu0 0.0
      %2827 = vmatpush1.msra.mxu0 0.0
      %2828 = vmatprep.subr.mxu0 0.0
      %2829 = vmatpush1.msra.mxu0 0.0
      %2830 = vmatprep.subr.mxu0 0.0
      %2831 = vmatpush1.msra.mxu0 0.0
      %2832 = vmatprep.subr.mxu0 0.0
      %2833 = vmatpush1.msra.mxu0 0.0
      %2834 = vmatprep.subr.mxu0 0.0
      %2835 = vmatpush1.msra.mxu0 0.0
      %2836 = vmatprep.subr.mxu0 0.0
      %2837 = vmatpush1.msra.mxu0 0.0
      %2838 = vmatprep.subr.mxu0 0.0
      %2839 = vmatpush1.msra.mxu0 0.0
      %2840 = vmatprep.subr.mxu0 0.0
      %2841 = vmatpush1.msra.mxu0 0.0
      %2842 = vmatprep.subr.mxu0 0.0
      %2843 = vmatpush1.msra.mxu0 0.0
      %2844 = vmatprep.subr.mxu0 0.0
      %2845 = vmatpush1.msra.mxu0 0.0
      %2846 = vmatprep.subr.mxu0 0.0
      %2847 = vmatpush1.msra.mxu0 0.0
      %2848 = vmatprep.subr.mxu0 0.0
      %2849 = vmatpush1.msra.mxu0 %v326
      %2850 = vmatprep.subr.mxu0 0.0
      %2851 = vmatpush1.msra.mxu0 %v325
      %2852 = vmatprep.subr.mxu0 0.0
      %2853 = vmatpush2.msra.mxu0 0.0
      %2854 = vmatprep.subr.mxu0 0.0
      %2855 = vmatpush2.msra.mxu0 0.0
      %2856 = vmatprep.subr.mxu0 0.0
      %2857 = vmatpush2.msra.mxu0 0.0
      %2858 = vmatprep.subr.mxu0 0.0
      %2859 = vmatpush2.msra.mxu0 0.0
      %2860 = vmatprep.subr.mxu0 0.0
      %2861 = vmatpush2.msra.mxu0 0.0
      %2862 = vmatprep.subr.mxu0 0.0
      %2863 = vmatpush2.msra.mxu0 0.0
      %2864 = vmatprep.subr.mxu0 0.0
      %2865 = vmatpush2.msra.mxu0 0.0
      %2866 = vmatprep.subr.mxu0 0.0
      %2867 = vmatpush2.msra.mxu0 0.0
      %2868 = vmatprep.subr.mxu0 0.0
      %2869 = vmatpush2.msra.mxu0 0.0
      %2870 = vmatprep.subr.mxu0 0.0
      %2871 = vmatpush2.msra.mxu0 0.0
      %2872 = vmatprep.subr.mxu0 0.0
      %2873 = vmatpush2.msra.mxu0 0.0
      %2874 = vmatprep.subr.mxu0 0.0
      %2875 = vmatpush2.msra.mxu0 0.0
      %2876 = vmatprep.subr.mxu0 0.0
      %2877 = vmatpush2.msra.mxu0 0.0
      %2878 = vmatprep.subr.mxu0 0.0
      %2879 = vmatpush2.msra.mxu0 0.0
      %2880 = vmatprep.subr.mxu0 0.0
      %2881 = vmatpush2.msra.mxu0 0.0
      %2882 = vmatprep.subr.mxu0 0.0
      %2883 = vmatpush2.msra.mxu0 0.0
      %2884 = vmatprep.mubr.f32.mxu0 0.0
      %2885 = vmatmul.mubr.f32.gmra.mxu0 %v2815
      %v2886 = vpop.f32.mrf.mxu0
      %v2887 = vadd.f32 0.0, %v2886
      %v2888 = vpop.f32.mrf.mxu0
      %2889 = vmatprep.mubr.f32.mxu0 0.0
      %2890 = vmatmul.mubr.f32.gmra.mxu0 %v2818
      %v2891 = vpop.f32.mrf.mxu0
      %v2892 = vadd.f32 0.0, %v2891
      %v2893 = vpop.f32.mrf.mxu0
      %2894 = vdwg.mxu0
      %v2896 = vsel %vm1732, %v2073, 0
      %v2899 = vsel %vm1732, %v2074, 0
      %2901 = vmatprep.subr.mxu0 0.0
      %2902 = vmatpush1.msra.mxu0 0.0
      %2903 = vmatprep.subr.mxu0 0.0
      %2904 = vmatpush1.msra.mxu0 0.0
      %2905 = vmatprep.subr.mxu0 0.0
      %2906 = vmatpush1.msra.mxu0 0.0
      %2907 = vmatprep.subr.mxu0 0.0
      %2908 = vmatpush1.msra.mxu0 0.0
      %2909 = vmatprep.subr.mxu0 0.0
      %2910 = vmatpush1.msra.mxu0 0.0
      %2911 = vmatprep.subr.mxu0 0.0
      %2912 = vmatpush1.msra.mxu0 0.0
      %2913 = vmatprep.subr.mxu0 0.0
      %2914 = vmatpush1.msra.mxu0 0.0
      %2915 = vmatprep.subr.mxu0 0.0
      %2916 = vmatpush1.msra.mxu0 0.0
      %2917 = vmatprep.subr.mxu0 0.0
      %2918 = vmatpush1.msra.mxu0 0.0
      %2919 = vmatprep.subr.mxu0 0.0
      %2920 = vmatpush1.msra.mxu0 0.0
      %2921 = vmatprep.subr.mxu0 0.0
      %2922 = vmatpush1.msra.mxu0 0.0
      %2923 = vmatprep.subr.mxu0 0.0
      %2924 = vmatpush1.msra.mxu0 0.0
      %2925 = vmatprep.subr.mxu0 0.0
      %2926 = vmatpush1.msra.mxu0 0.0
      %2927 = vmatprep.subr.mxu0 0.0
      %2928 = vmatpush1.msra.mxu0 0.0
      %2929 = vmatprep.subr.mxu0 0.0
      %2930 = vmatpush1.msra.mxu0 %v328
      %2931 = vmatprep.subr.mxu0 0.0
      %2932 = vmatpush1.msra.mxu0 %v327
      %2933 = vmatprep.subr.mxu0 0.0
      %2934 = vmatpush2.msra.mxu0 0.0
      %2935 = vmatprep.subr.mxu0 0.0
      %2936 = vmatpush2.msra.mxu0 0.0
      %2937 = vmatprep.subr.mxu0 0.0
      %2938 = vmatpush2.msra.mxu0 0.0
      %2939 = vmatprep.subr.mxu0 0.0
      %2940 = vmatpush2.msra.mxu0 0.0
      %2941 = vmatprep.subr.mxu0 0.0
      %2942 = vmatpush2.msra.mxu0 0.0
      %2943 = vmatprep.subr.mxu0 0.0
      %2944 = vmatpush2.msra.mxu0 0.0
      %2945 = vmatprep.subr.mxu0 0.0
      %2946 = vmatpush2.msra.mxu0 0.0
      %2947 = vmatprep.subr.mxu0 0.0
      %2948 = vmatpush2.msra.mxu0 0.0
      %2949 = vmatprep.subr.mxu0 0.0
      %2950 = vmatpush2.msra.mxu0 0.0
      %2951 = vmatprep.subr.mxu0 0.0
      %2952 = vmatpush2.msra.mxu0 0.0
      %2953 = vmatprep.subr.mxu0 0.0
      %2954 = vmatpush2.msra.mxu0 0.0
      %2955 = vmatprep.subr.mxu0 0.0
      %2956 = vmatpush2.msra.mxu0 0.0
      %2957 = vmatprep.subr.mxu0 0.0
      %2958 = vmatpush2.msra.mxu0 0.0
      %2959 = vmatprep.subr.mxu0 0.0
      %2960 = vmatpush2.msra.mxu0 0.0
      %2961 = vmatprep.subr.mxu0 0.0
      %2962 = vmatpush2.msra.mxu0 0.0
      %2963 = vmatprep.subr.mxu0 0.0
      %2964 = vmatpush2.msra.mxu0 0.0
      %2965 = vmatprep.mubr.f32.mxu0 0.0
      %2966 = vmatmul.mubr.f32.gmra.mxu0 %v2896
      %v2967 = vpop.f32.mrf.mxu0
      %v2968 = vadd.f32 0.0, %v2967
      %v2969 = vpop.f32.mrf.mxu0
      %2970 = vmatprep.mubr.f32.mxu0 0.0
      %2971 = vmatmul.mubr.f32.gmra.mxu0 %v2899
      %v2972 = vpop.f32.mrf.mxu0
      %v2973 = vadd.f32 0.0, %v2972
      %v2974 = vpop.f32.mrf.mxu0
      %2975 = vdwg.mxu0
      %v2977 = vsel %vm1732, %v2075, 0
      %v2980 = vsel %vm1732, %v2076, 0
      %2982 = vmatprep.subr.mxu0 0.0
      %2983 = vmatpush1.msra.mxu0 0.0
      %2984 = vmatprep.subr.mxu0 0.0
      %2985 = vmatpush1.msra.mxu0 0.0
      %2986 = vmatprep.subr.mxu0 0.0
      %2987 = vmatpush1.msra.mxu0 0.0
      %2988 = vmatprep.subr.mxu0 0.0
      %2989 = vmatpush1.msra.mxu0 0.0
      %2990 = vmatprep.subr.mxu0 0.0
      %2991 = vmatpush1.msra.mxu0 0.0
      %2992 = vmatprep.subr.mxu0 0.0
      %2993 = vmatpush1.msra.mxu0 0.0
      %2994 = vmatprep.subr.mxu0 0.0
      %2995 = vmatpush1.msra.mxu0 0.0
      %2996 = vmatprep.subr.mxu0 0.0
      %2997 = vmatpush1.msra.mxu0 0.0
      %2998 = vmatprep.subr.mxu0 0.0
      %2999 = vmatpush1.msra.mxu0 0.0
      %3000 = vmatprep.subr.mxu0 0.0
      %3001 = vmatpush1.msra.mxu0 0.0
      %3002 = vmatprep.subr.mxu0 0.0
      %3003 = vmatpush1.msra.mxu0 0.0
      %3004 = vmatprep.subr.mxu0 0.0
      %3005 = vmatpush1.msra.mxu0 0.0
      %3006 = vmatprep.subr.mxu0 0.0
      %3007 = vmatpush1.msra.mxu0 0.0
      %3008 = vmatprep.subr.mxu0 0.0
      %3009 = vmatpush1.msra.mxu0 0.0
      %3010 = vmatprep.subr.mxu0 0.0
      %3011 = vmatpush1.msra.mxu0 %v330
      %3012 = vmatprep.subr.mxu0 0.0
      %3013 = vmatpush1.msra.mxu0 %v329
      %3014 = vmatprep.subr.mxu0 0.0
      %3015 = vmatpush2.msra.mxu0 0.0
      %3016 = vmatprep.subr.mxu0 0.0
      %3017 = vmatpush2.msra.mxu0 0.0
      %3018 = vmatprep.subr.mxu0 0.0
      %3019 = vmatpush2.msra.mxu0 0.0
      %3020 = vmatprep.subr.mxu0 0.0
      %3021 = vmatpush2.msra.mxu0 0.0
      %3022 = vmatprep.subr.mxu0 0.0
      %3023 = vmatpush2.msra.mxu0 0.0
      %3024 = vmatprep.subr.mxu0 0.0
      %3025 = vmatpush2.msra.mxu0 0.0
      %3026 = vmatprep.subr.mxu0 0.0
      %3027 = vmatpush2.msra.mxu0 0.0
      %3028 = vmatprep.subr.mxu0 0.0
      %3029 = vmatpush2.msra.mxu0 0.0
      %3030 = vmatprep.subr.mxu0 0.0
      %3031 = vmatpush2.msra.mxu0 0.0
      %3032 = vmatprep.subr.mxu0 0.0
      %3033 = vmatpush2.msra.mxu0 0.0
      %3034 = vmatprep.subr.mxu0 0.0
      %3035 = vmatpush2.msra.mxu0 0.0
      %3036 = vmatprep.subr.mxu0 0.0
      %3037 = vmatpush2.msra.mxu0 0.0
      %3038 = vmatprep.subr.mxu0 0.0
      %3039 = vmatpush2.msra.mxu0 0.0
      %3040 = vmatprep.subr.mxu0 0.0
      %3041 = vmatpush2.msra.mxu0 0.0
      %3042 = vmatprep.subr.mxu0 0.0
      %3043 = vmatpush2.msra.mxu0 0.0
      %3044 = vmatprep.subr.mxu0 0.0
      %3045 = vmatpush2.msra.mxu0 0.0
      %3046 = vmatprep.mubr.f32.mxu0 0.0
      %3047 = vmatmul.mubr.f32.gmra.mxu0 %v2977
      %v3048 = vpop.f32.mrf.mxu0
      %v3049 = vadd.f32 0.0, %v3048
      %v3050 = vpop.f32.mrf.mxu0
      %3051 = vmatprep.mubr.f32.mxu0 0.0
      %3052 = vmatmul.mubr.f32.gmra.mxu0 %v2980
      %v3053 = vpop.f32.mrf.mxu0
      %v3054 = vadd.f32 0.0, %v3053
      %v3055 = vpop.f32.mrf.mxu0
      %3056 = vdwg.mxu0
      %v3058 = vsel %vm1732, %v2077, 0
      %v3061 = vsel %vm1732, %v2078, 0
      %3063 = vmatprep.subr.mxu0 0.0
      %3064 = vmatpush1.msra.mxu0 0.0
      %3065 = vmatprep.subr.mxu0 0.0
      %3066 = vmatpush1.msra.mxu0 0.0
      %3067 = vmatprep.subr.mxu0 0.0
      %3068 = vmatpush1.msra.mxu0 0.0
      %3069 = vmatprep.subr.mxu0 0.0
      %3070 = vmatpush1.msra.mxu0 0.0
      %3071 = vmatprep.subr.mxu0 0.0
      %3072 = vmatpush1.msra.mxu0 0.0
      %3073 = vmatprep.subr.mxu0 0.0
      %3074 = vmatpush1.msra.mxu0 0.0
      %3075 = vmatprep.subr.mxu0 0.0
      %3076 = vmatpush1.msra.mxu0 0.0
      %3077 = vmatprep.subr.mxu0 0.0
      %3078 = vmatpush1.msra.mxu0 0.0
      %3079 = vmatprep.subr.mxu0 0.0
      %3080 = vmatpush1.msra.mxu0 0.0
      %3081 = vmatprep.subr.mxu0 0.0
      %3082 = vmatpush1.msra.mxu0 0.0
      %3083 = vmatprep.subr.mxu0 0.0
      %3084 = vmatpush1.msra.mxu0 0.0
      %3085 = vmatprep.subr.mxu0 0.0
      %3086 = vmatpush1.msra.mxu0 0.0
      %3087 = vmatprep.subr.mxu0 0.0
      %3088 = vmatpush1.msra.mxu0 0.0
      %3089 = vmatprep.subr.mxu0 0.0
      %3090 = vmatpush1.msra.mxu0 0.0
      %3091 = vmatprep.subr.mxu0 0.0
      %3092 = vmatpush1.msra.mxu0 %v332
      %3093 = vmatprep.subr.mxu0 0.0
      %3094 = vmatpush1.msra.mxu0 %v331
      %3095 = vmatprep.subr.mxu0 0.0
      %3096 = vmatpush2.msra.mxu0 0.0
      %3097 = vmatprep.subr.mxu0 0.0
      %3098 = vmatpush2.msra.mxu0 0.0
      %3099 = vmatprep.subr.mxu0 0.0
      %3100 = vmatpush2.msra.mxu0 0.0
      %3101 = vmatprep.subr.mxu0 0.0
      %3102 = vmatpush2.msra.mxu0 0.0
      %3103 = vmatprep.subr.mxu0 0.0
      %3104 = vmatpush2.msra.mxu0 0.0
      %3105 = vmatprep.subr.mxu0 0.0
      %3106 = vmatpush2.msra.mxu0 0.0
      %3107 = vmatprep.subr.mxu0 0.0
      %3108 = vmatpush2.msra.mxu0 0.0
      %3109 = vmatprep.subr.mxu0 0.0
      %3110 = vmatpush2.msra.mxu0 0.0
      %3111 = vmatprep.subr.mxu0 0.0
      %3112 = vmatpush2.msra.mxu0 0.0
      %3113 = vmatprep.subr.mxu0 0.0
      %3114 = vmatpush2.msra.mxu0 0.0
      %3115 = vmatprep.subr.mxu0 0.0
      %3116 = vmatpush2.msra.mxu0 0.0
      %3117 = vmatprep.subr.mxu0 0.0
      %3118 = vmatpush2.msra.mxu0 0.0
      %3119 = vmatprep.subr.mxu0 0.0
      %3120 = vmatpush2.msra.mxu0 0.0
      %3121 = vmatprep.subr.mxu0 0.0
      %3122 = vmatpush2.msra.mxu0 0.0
      %3123 = vmatprep.subr.mxu0 0.0
      %3124 = vmatpush2.msra.mxu0 0.0
      %3125 = vmatprep.subr.mxu0 0.0
      %3126 = vmatpush2.msra.mxu0 0.0
      %3127 = vmatprep.mubr.f32.mxu0 0.0
      %3128 = vmatmul.mubr.f32.gmra.mxu0 %v3058
      %v3129 = vpop.f32.mrf.mxu0
      %v3130 = vadd.f32 0.0, %v3129
      %v3131 = vpop.f32.mrf.mxu0
      %3132 = vmatprep.mubr.f32.mxu0 0.0
      %3133 = vmatmul.mubr.f32.gmra.mxu0 %v3061
      %v3134 = vpop.f32.mrf.mxu0
      %v3135 = vadd.f32 0.0, %v3134
      %v3136 = vpop.f32.mrf.mxu0
      %3137 = vdwg.mxu0
      %v3139 = vsel %vm1732, %v2079, 0
      %v3142 = vsel %vm1732, %v2080, 0
      %3144 = vmatprep.subr.mxu0 0.0
      %3145 = vmatpush1.msra.mxu0 0.0
      %3146 = vmatprep.subr.mxu0 0.0
      %3147 = vmatpush1.msra.mxu0 0.0
      %3148 = vmatprep.subr.mxu0 0.0
      %3149 = vmatpush1.msra.mxu0 0.0
      %3150 = vmatprep.subr.mxu0 0.0
      %3151 = vmatpush1.msra.mxu0 0.0
      %3152 = vmatprep.subr.mxu0 0.0
      %3153 = vmatpush1.msra.mxu0 0.0
      %3154 = vmatprep.subr.mxu0 0.0
      %3155 = vmatpush1.msra.mxu0 0.0
      %3156 = vmatprep.subr.mxu0 0.0
      %3157 = vmatpush1.msra.mxu0 0.0
      %3158 = vmatprep.subr.mxu0 0.0
      %3159 = vmatpush1.msra.mxu0 0.0
      %3160 = vmatprep.subr.mxu0 0.0
      %3161 = vmatpush1.msra.mxu0 0.0
      %3162 = vmatprep.subr.mxu0 0.0
      %3163 = vmatpush1.msra.mxu0 0.0
      %3164 = vmatprep.subr.mxu0 0.0
      %3165 = vmatpush1.msra.mxu0 0.0
      %3166 = vmatprep.subr.mxu0 0.0
      %3167 = vmatpush1.msra.mxu0 0.0
      %3168 = vmatprep.subr.mxu0 0.0
      %3169 = vmatpush1.msra.mxu0 0.0
      %3170 = vmatprep.subr.mxu0 0.0
      %3171 = vmatpush1.msra.mxu0 0.0
      %3172 = vmatprep.subr.mxu0 0.0
      %3173 = vmatpush1.msra.mxu0 %v334
      %3174 = vmatprep.subr.mxu0 0.0
      %3175 = vmatpush1.msra.mxu0 %v333
      %3176 = vmatprep.subr.mxu0 0.0
      %3177 = vmatpush2.msra.mxu0 0.0
      %3178 = vmatprep.subr.mxu0 0.0
      %3179 = vmatpush2.msra.mxu0 0.0
      %3180 = vmatprep.subr.mxu0 0.0
      %3181 = vmatpush2.msra.mxu0 0.0
      %3182 = vmatprep.subr.mxu0 0.0
      %3183 = vmatpush2.msra.mxu0 0.0
      %3184 = vmatprep.subr.mxu0 0.0
      %3185 = vmatpush2.msra.mxu0 0.0
      %3186 = vmatprep.subr.mxu0 0.0
      %3187 = vmatpush2.msra.mxu0 0.0
      %3188 = vmatprep.subr.mxu0 0.0
      %3189 = vmatpush2.msra.mxu0 0.0
      %3190 = vmatprep.subr.mxu0 0.0
      %3191 = vmatpush2.msra.mxu0 0.0
      %3192 = vmatprep.subr.mxu0 0.0
      %3193 = vmatpush2.msra.mxu0 0.0
      %3194 = vmatprep.subr.mxu0 0.0
      %3195 = vmatpush2.msra.mxu0 0.0
      %3196 = vmatprep.subr.mxu0 0.0
      %3197 = vmatpush2.msra.mxu0 0.0
      %3198 = vmatprep.subr.mxu0 0.0
      %3199 = vmatpush2.msra.mxu0 0.0
      %3200 = vmatprep.subr.mxu0 0.0
      %3201 = vmatpush2.msra.mxu0 0.0
      %3202 = vmatprep.subr.mxu0 0.0
      %3203 = vmatpush2.msra.mxu0 0.0
      %3204 = vmatprep.subr.mxu0 0.0
      %3205 = vmatpush2.msra.mxu0 0.0
      %3206 = vmatprep.subr.mxu0 0.0
      %3207 = vmatpush2.msra.mxu0 0.0
      %3208 = vmatprep.mubr.f32.mxu0 0.0
      %3209 = vmatmul.mubr.f32.gmra.mxu0 %v3139
      %v3210 = vpop.f32.mrf.mxu0
      %v3211 = vadd.f32 0.0, %v3210
      %v3212 = vpop.f32.mrf.mxu0
      %3213 = vmatprep.mubr.f32.mxu0 0.0
      %3214 = vmatmul.mubr.f32.gmra.mxu0 %v3142
      %v3215 = vpop.f32.mrf.mxu0
      %v3216 = vadd.f32 0.0, %v3215
      %v3217 = vpop.f32.mrf.mxu0
      %3218 = vdwg.mxu0
      %v3220 = vsel %vm1732, %v2081, 0
      %v3223 = vsel %vm1732, %v2082, 0
      %3225 = vmatprep.subr.mxu0 0.0
      %3226 = vmatpush1.msra.mxu0 0.0
      %3227 = vmatprep.subr.mxu0 0.0
      %3228 = vmatpush1.msra.mxu0 0.0
      %3229 = vmatprep.subr.mxu0 0.0
      %3230 = vmatpush1.msra.mxu0 0.0
      %3231 = vmatprep.subr.mxu0 0.0
      %3232 = vmatpush1.msra.mxu0 0.0
      %3233 = vmatprep.subr.mxu0 0.0
      %3234 = vmatpush1.msra.mxu0 0.0
      %3235 = vmatprep.subr.mxu0 0.0
      %3236 = vmatpush1.msra.mxu0 0.0
      %3237 = vmatprep.subr.mxu0 0.0
      %3238 = vmatpush1.msra.mxu0 0.0
      %3239 = vmatprep.subr.mxu0 0.0
      %3240 = vmatpush1.msra.mxu0 0.0
      %3241 = vmatprep.subr.mxu0 0.0
      %3242 = vmatpush1.msra.mxu0 0.0
      %3243 = vmatprep.subr.mxu0 0.0
      %3244 = vmatpush1.msra.mxu0 0.0
      %3245 = vmatprep.subr.mxu0 0.0
      %3246 = vmatpush1.msra.mxu0 0.0
      %3247 = vmatprep.subr.mxu0 0.0
      %3248 = vmatpush1.msra.mxu0 0.0
      %3249 = vmatprep.subr.mxu0 0.0
      %3250 = vmatpush1.msra.mxu0 0.0
      %3251 = vmatprep.subr.mxu0 0.0
      %3252 = vmatpush1.msra.mxu0 0.0
      %3253 = vmatprep.subr.mxu0 0.0
      %3254 = vmatpush1.msra.mxu0 %v336
      %3255 = vmatprep.subr.mxu0 0.0
      %3256 = vmatpush1.msra.mxu0 %v335
      %3257 = vmatprep.subr.mxu0 0.0
      %3258 = vmatpush2.msra.mxu0 0.0
      %3259 = vmatprep.subr.mxu0 0.0
      %3260 = vmatpush2.msra.mxu0 0.0
      %3261 = vmatprep.subr.mxu0 0.0
      %3262 = vmatpush2.msra.mxu0 0.0
      %3263 = vmatprep.subr.mxu0 0.0
      %3264 = vmatpush2.msra.mxu0 0.0
      %3265 = vmatprep.subr.mxu0 0.0
      %3266 = vmatpush2.msra.mxu0 0.0
      %3267 = vmatprep.subr.mxu0 0.0
      %3268 = vmatpush2.msra.mxu0 0.0
      %3269 = vmatprep.subr.mxu0 0.0
      %3270 = vmatpush2.msra.mxu0 0.0
      %3271 = vmatprep.subr.mxu0 0.0
      %3272 = vmatpush2.msra.mxu0 0.0
      %3273 = vmatprep.subr.mxu0 0.0
      %3274 = vmatpush2.msra.mxu0 0.0
      %3275 = vmatprep.subr.mxu0 0.0
      %3276 = vmatpush2.msra.mxu0 0.0
      %3277 = vmatprep.subr.mxu0 0.0
      %3278 = vmatpush2.msra.mxu0 0.0
      %3279 = vmatprep.subr.mxu0 0.0
      %3280 = vmatpush2.msra.mxu0 0.0
      %3281 = vmatprep.subr.mxu0 0.0
      %3282 = vmatpush2.msra.mxu0 0.0
      %3283 = vmatprep.subr.mxu0 0.0
      %3284 = vmatpush2.msra.mxu0 0.0
      %3285 = vmatprep.subr.mxu0 0.0
      %3286 = vmatpush2.msra.mxu0 0.0
      %3287 = vmatprep.subr.mxu0 0.0
      %3288 = vmatpush2.msra.mxu0 0.0
      %3289 = vmatprep.mubr.f32.mxu0 0.0
      %3290 = vmatmul.mubr.f32.gmra.mxu0 %v3220
      %v3291 = vpop.f32.mrf.mxu0
      %v3292 = vadd.f32 0.0, %v3291
      %v3293 = vpop.f32.mrf.mxu0
      %3294 = vmatprep.mubr.f32.mxu0 0.0
      %3295 = vmatmul.mubr.f32.gmra.mxu0 %v3223
      %v3296 = vpop.f32.mrf.mxu0
      %v3297 = vadd.f32 0.0, %v3296
      %v3298 = vpop.f32.mrf.mxu0
      %3299 = vdwg.mxu0
      %v3301 = vsel %vm1732, %v2083, 0
      %v3304 = vsel %vm1732, %v2084, 0
      %3306 = vmatprep.subr.mxu0 0.0
      %3307 = vmatpush1.msra.mxu0 0.0
      %3308 = vmatprep.subr.mxu0 0.0
      %3309 = vmatpush1.msra.mxu0 0.0
      %3310 = vmatprep.subr.mxu0 0.0
      %3311 = vmatpush1.msra.mxu0 0.0
      %3312 = vmatprep.subr.mxu0 0.0
      %3313 = vmatpush1.msra.mxu0 0.0
      %3314 = vmatprep.subr.mxu0 0.0
      %3315 = vmatpush1.msra.mxu0 0.0
      %3316 = vmatprep.subr.mxu0 0.0
      %3317 = vmatpush1.msra.mxu0 0.0
      %3318 = vmatprep.subr.mxu0 0.0
      %3319 = vmatpush1.msra.mxu0 0.0
      %3320 = vmatprep.subr.mxu0 0.0
      %3321 = vmatpush1.msra.mxu0 0.0
      %3322 = vmatprep.subr.mxu0 0.0
      %3323 = vmatpush1.msra.mxu0 0.0
      %3324 = vmatprep.subr.mxu0 0.0
      %3325 = vmatpush1.msra.mxu0 0.0
      %3326 = vmatprep.subr.mxu0 0.0
      %3327 = vmatpush1.msra.mxu0 0.0
      %3328 = vmatprep.subr.mxu0 0.0
      %3329 = vmatpush1.msra.mxu0 0.0
      %3330 = vmatprep.subr.mxu0 0.0
      %3331 = vmatpush1.msra.mxu0 0.0
      %3332 = vmatprep.subr.mxu0 0.0
      %3333 = vmatpush1.msra.mxu0 0.0
      %3334 = vmatprep.subr.mxu0 0.0
      %3335 = vmatpush1.msra.mxu0 %v338
      %3336 = vmatprep.subr.mxu0 0.0
      %3337 = vmatpush1.msra.mxu0 %v337
      %3338 = vmatprep.subr.mxu0 0.0
      %3339 = vmatpush2.msra.mxu0 0.0
      %3340 = vmatprep.subr.mxu0 0.0
      %3341 = vmatpush2.msra.mxu0 0.0
      %3342 = vmatprep.subr.mxu0 0.0
      %3343 = vmatpush2.msra.mxu0 0.0
      %3344 = vmatprep.subr.mxu0 0.0
      %3345 = vmatpush2.msra.mxu0 0.0
      %3346 = vmatprep.subr.mxu0 0.0
      %3347 = vmatpush2.msra.mxu0 0.0
      %3348 = vmatprep.subr.mxu0 0.0
      %3349 = vmatpush2.msra.mxu0 0.0
      %3350 = vmatprep.subr.mxu0 0.0
      %3351 = vmatpush2.msra.mxu0 0.0
      %3352 = vmatprep.subr.mxu0 0.0
      %3353 = vmatpush2.msra.mxu0 0.0
      %3354 = vmatprep.subr.mxu0 0.0
      %3355 = vmatpush2.msra.mxu0 0.0
      %3356 = vmatprep.subr.mxu0 0.0
      %3357 = vmatpush2.msra.mxu0 0.0
      %3358 = vmatprep.subr.mxu0 0.0
      %3359 = vmatpush2.msra.mxu0 0.0
      %3360 = vmatprep.subr.mxu0 0.0
      %3361 = vmatpush2.msra.mxu0 0.0
      %3362 = vmatprep.subr.mxu0 0.0
      %3363 = vmatpush2.msra.mxu0 0.0
      %3364 = vmatprep.subr.mxu0 0.0
      %3365 = vmatpush2.msra.mxu0 0.0
      %3366 = vmatprep.subr.mxu0 0.0
      %3367 = vmatpush2.msra.mxu0 0.0
      %3368 = vmatprep.subr.mxu0 0.0
      %3369 = vmatpush2.msra.mxu0 0.0
      %3370 = vmatprep.mubr.f32.mxu0 0.0
      %3371 = vmatmul.mubr.f32.gmra.mxu0 %v3301
      %v3372 = vpop.f32.mrf.mxu0
      %v3373 = vadd.f32 0.0, %v3372
      %v3374 = vpop.f32.mrf.mxu0
      %3375 = vmatprep.mubr.f32.mxu0 0.0
      %3376 = vmatmul.mubr.f32.gmra.mxu0 %v3304
      %v3377 = vpop.f32.mrf.mxu0
      %v3378 = vadd.f32 0.0, %v3377
      %v3379 = vpop.f32.mrf.mxu0
      %3380 = vdwg.mxu0
      %3381 = vst.msk [vmem:[%s210] sm:$0xff] %vm339, %v2158
      %3382 = vst.msk [vmem:[%s210 + $0x8] sm:$0xff] %vm339, %v2163
      %3383 = vst.msk [vmem:[%s210 + $0x10] sm:$0xff] %vm339, %v2239
      %3384 = vst.msk [vmem:[%s210 + $0x18] sm:$0xff] %vm339, %v2244
      %3385 = vst.msk [vmem:[%s210 + $0x20] sm:$0xff] %vm339, %v2320
      %3386 = vst.msk [vmem:[%s210 + $0x28] sm:$0xff] %vm339, %v2325
      %3387 = vst.msk [vmem:[%s210 + $0x30] sm:$0xff] %vm339, %v2401
      %3388 = vst.msk [vmem:[%s210 + $0x38] sm:$0xff] %vm339, %v2406
      %3389 = vst.msk [vmem:[%s210 + $0x40] sm:$0xff] %vm339, %v2482
      %3390 = vst.msk [vmem:[%s210 + $0x48] sm:$0xff] %vm339, %v2487
      %3391 = vst.msk [vmem:[%s210 + $0x50] sm:$0xff] %vm339, %v2563
      %3392 = vst.msk [vmem:[%s210 + $0x58] sm:$0xff] %vm339, %v2568
      %3393 = vst.msk [vmem:[%s210 + $0x60] sm:$0xff] %vm339, %v2644
      %3394 = vst.msk [vmem:[%s210 + $0x68] sm:$0xff] %vm339, %v2649
      %3395 = vst.msk [vmem:[%s210 + $0x70] sm:$0xff] %vm339, %v2725
      %3396 = vst.msk [vmem:[%s210 + $0x78] sm:$0xff] %vm339, %v2730
      %3397 = vst.msk [vmem:[%s210 + $0x80] sm:$0xff] %vm339, %v2806
      %3398 = vst.msk [vmem:[%s210 + $0x88] sm:$0xff] %vm339, %v2811
      %3399 = vst.msk [vmem:[%s210 + $0x90] sm:$0xff] %vm339, %v2887
      %3400 = vst.msk [vmem:[%s210 + $0x98] sm:$0xff] %vm339, %v2892
      %3401 = vst.msk [vmem:[%s210 + $0xa0] sm:$0xff] %vm339, %v2968
      %3402 = vst.msk [vmem:[%s210 + $0xa8] sm:$0xff] %vm339, %v2973
      %3403 = vst.msk [vmem:[%s210 + $0xb0] sm:$0xff] %vm339, %v3049
      %3404 = vst.msk [vmem:[%s210 + $0xb8] sm:$0xff] %vm339, %v3054
      %3405 = vst.msk [vmem:[%s210 + $0xc0] sm:$0xff] %vm339, %v3130
      %3406 = vst.msk [vmem:[%s210 + $0xc8] sm:$0xff] %vm339, %v3135
      %3407 = vst.msk [vmem:[%s210 + $0xd0] sm:$0xff] %vm339, %v3211
      %3408 = vst.msk [vmem:[%s210 + $0xd8] sm:$0xff] %vm339, %v3216
      %3409 = vst.msk [vmem:[%s210 + $0xe0] sm:$0xff] %vm339, %v3292
      %3410 = vst.msk [vmem:[%s210 + $0xe8] sm:$0xff] %vm339, %v3297
      %3411 = vst.msk [vmem:[%s210 + $0xf0] sm:$0xff] %vm339, %v3373
      %3412 = vst.msk [vmem:[%s210 + $0xf8] sm:$0xff] %vm339, %v3378
      %p3413 = scmp.lt.s32.totalorder %s14, 1
      %s3414 = scalar_select %p3413, %s14, 1
      %s3415 = smul.addr %s3414, 32
      %s3416 = smul.addr %s3415, 8
      %s3417 = scalar_lea.vmem %s3, %s3416
      // Predicated region
      $region33: #{_lambda_.2} parent=31 // pred_check
        %p3418 = pneg %p110
      $region34: #{_lambda_.2} parent=31 // pred_check_branch
        %3420 = sbr.rel (%p3418) target = $region36
      $region35: #{_lambda_.2} parent=31 // pred_region
        _
      $region36: #{_lambda_.2} parent=31 // pred_fallthru
        _
    $region32: #{_lambda_.2} parent=5 // pred_fallthru
      _
    %p3421 = scmp.le.s32.totalorder 2, %s9
    // Predicated region
    $region37: #{_lambda_.2} parent=5 // pred_check
      %p3422 = pneg %p3421
    $region38: #{_lambda_.2} parent=5 // pred_check_branch
      %3424 = sbr.rel (%p3422) target = $region40
    $region39: #{_lambda_.2} parent=5 // pred_region
      %s3425 = ssub.s32 %s9, 2
      // Predicated region
      $region41: #{_lambda_.2} parent=39 // pred_check
        %p3426 = pneg %p116
      $region42: #{_lambda_.2} parent=39 // pred_check_branch
        %3428 = sbr.rel (%p3426) target = $region44
      $region43: #{_lambda_.2} parent=39 // pred_region
        %p3429 = scmp.lt.s32.totalorder %s15, 1
        %s3430 = scalar_select %p3429, %s15, 1
        %s3431 = smul.addr %s3430, 32
        %s3432 = smul.addr %s3431, 8
        %s3433 = scalar_lea.vmem %s3, %s3432
      $region44: #{_lambda_.2} parent=39 // pred_fallthru
        _
    $region40: #{_lambda_.2} parent=5 // pred_fallthru
      _
  $region6: #{_lambda_.2} parent=0 // loop_footer
    %s13 = sadd.s32 1, %s9
  $region7: #{_lambda_.2} parent=0 // loop_footer_branch
    %8 = sbr.rel target = $region3
  $region8: #{_lambda_.2} parent=0 // loop_exit
    _

</llo_original>
